<compile_context>
chip_gen: v6e
topology: v6e:2x2x1
jax: 0.10.0
libtpu: 0.0.40
codegen_flags: <defaults>
</compile_context>

<pallas_src>
import math
import jax
import jax.numpy as jnp
from jax import lax
from jax.experimental import pallas as pl
from jax.experimental.pallas import tpu as pltpu

H_HEAD = 4
D_MODEL = 32
D_FF = 4 * D_MODEL
D_K = D_MODEL // H_HEAD
LN_EPS = 1e-5          # torch.nn.LayerNorm default
MASK_VAL = 1e9         # masked_fill(mask == 0, -1e9)
LANE = 128

# 128-lane-aligned offsets inside the packed (D_MODEL, 9*128) weight slab
_O_WQ1 = 0 * LANE
_O_WK1 = 1 * LANE
_O_WV1 = 2 * LANE
_O_WO1 = 3 * LANE
_O_WQ2 = 4 * LANE
_O_WK2 = 5 * LANE
_O_WV2 = 6 * LANE
_O_WO2 = 7 * LANE
_O_W1 = 8 * LANE                 # width D_FF = 128
_W_SLAB = 9 * LANE

# sublane-row indices inside the packed (16, 128) bias / gamma / beta slab
V_BQ1, V_BK1, V_BV1, V_BO1, V_G1, V_BE1 = 0, 1, 2, 3, 4, 5
V_BQ2, V_BK2, V_BV2, V_BO2, V_G2, V_BE2 = 6, 7, 8, 9, 10, 11
V_B1, V_B2, V_G3, V_BE3 = 12, 13, 14, 15
_V_ROWS = 16


# ---------------- shared math helpers ----------------------------------------------------

def _layer_norm(x, gamma, beta):
    mu = jnp.mean(x, axis=-1, keepdims=True)
    var = jnp.mean((x - mu) ** 2, axis=-1, keepdims=True)
    return (x - mu) * lax.rsqrt(var + LN_EPS) * gamma + beta


# ---------------- Pallas kernel -----------------------------------------------------------

def decoder_layer_kernel(y_ref, x_ref, smask_ref, cmask_ref,
                         wbig_ref, w2_ref, vec_ref, out_ref):
    y = y_ref[...]            # (B*Sy, D)   decoder input, batch folded into rows
    x = x_ref[...]            # (B*Sx, D)   encoder output, batch folded into rows
    sm = smask_ref[...]       # (B, Sy, Sy) additive look-ahead mask
    cm = cmask_ref[...]       # (B, Sy, Sx) additive pad mask
    w = wbig_ref[...]         # (D, 9*128)  packed, 128-lane-aligned weights
    w2 = w2_ref[...]          # (D_FF, D)   FFN second weight
    vec = vec_ref[...]        # (16, 128)   packed biases / LayerNorm params (one per row)

    D = D_MODEL
    scale = 1.0 / math.sqrt(D_K)

    def wt(off, width=D):
        return w[:, off:off + width]         # starts on a 128-lane boundary -> no relayout

    def vrow(r, width=D):
        return vec[r:r + 1, 0:width]         # starts at lane 0 -> no lane extraction

    # full-width lane masks for the heads (VPU multiply instead of lane slicing/concat)
    lane_idx = lax.broadcasted_iota(jnp.int32, (1, 1, D), 2)

    def attention(q2d, k2d, v2d, add_mask):
        """q2d: (B*Sq, D) already scaled; k2d/v2d: (B*Sk, D); add_mask: (B, Sq, Sk)."""
        B, Sq, Sk = add_mask.shape
        q3 = q2d.reshape(B, Sq, D)            # leading-dim reshape only (no relayout)
        k3 = k2d.reshape(B, Sk, D)
        v3 = v2d.reshape(B, Sk, D)
        o3 = jnp.zeros((B, Sq, D), jnp.float32)
        for h in range(H_HEAD):               # unrolled; heads stay in their own lanes
            m_h = ((lane_idx >= h * D_K) & (lane_idx < (h + 1) * D_K)).astype(jnp.float32)
            s = jnp.einsum('bqd,bkd->bqk', q3 * m_h, k3,
                           preferred_element_type=jnp.float32)      # (B,Sq,Sk)
            s = s + add_mask
            s = s - jnp.max(s, axis=-1, keepdims=True)
            p = jnp.exp(s)
            p = p * pl.reciprocal(jnp.sum(p, axis=-1, keepdims=True), approx=True)
            o3 = o3 + jnp.einsum('bqk,bkd->bqd', p, v3 * m_h,
                                 preferred_element_type=jnp.float32)  # head h lanes only
        return o3.reshape(B * Sq, D)

    # ---- block 1: masked self-attention + residual + LayerNorm
    q1 = (jnp.dot(y, wt(_O_WQ1), preferred_element_type=jnp.float32) + vrow(V_BQ1)) * scale
    k1 = jnp.dot(y, wt(_O_WK1), preferred_element_type=jnp.float32) + vrow(V_BK1)
    v1 = jnp.dot(y, wt(_O_WV1), preferred_element_type=jnp.float32) + vrow(V_BV1)
    a1 = attention(q1, k1, v1, sm)
    o1 = jnp.dot(a1, wt(_O_WO1), preferred_element_type=jnp.float32) + vrow(V_BO1)
    z1 = _layer_norm(y + o1, vrow(V_G1), vrow(V_BE1))

    # ---- block 2: cross-attention over encoder output + residual + LayerNorm
    q2 = (jnp.dot(z1, wt(_O_WQ2), preferred_element_type=jnp.float32) + vrow(V_BQ2)) * scale
    k2 = jnp.dot(x, wt(_O_WK2), preferred_element_type=jnp.float32) + vrow(V_BK2)
    v2 = jnp.dot(x, wt(_O_WV2), preferred_element_type=jnp.float32) + vrow(V_BV2)
    a2 = attention(q2, k2, v2, cm)
    o2 = jnp.dot(a2, wt(_O_WO2), preferred_element_type=jnp.float32) + vrow(V_BO2)
    z2 = _layer_norm(z1 + o2, vrow(V_G2), vrow(V_BE2))

    # ---- position-wise FFN + residual + LayerNorm
    h_ff = jnp.maximum(
        jnp.dot(z2, wt(_O_W1, D_FF), preferred_element_type=jnp.float32) + vrow(V_B1, D_FF),
        0.0)
    o3 = jnp.dot(h_ff, w2, preferred_element_type=jnp.float32) + vrow(V_B2)
    z3 = _layer_norm(z2 + o3, vrow(V_G3), vrow(V_BE3))

    out_ref[...] = z3                         # direct (B*Sy, D) store (tiny output)


# ---------------- parameter packing & mask preparation ------------------------------------

def pack_params(params):
    (wq1, bq1, wk1, bk1, wv1, bv1, wo1, bo1, g1, be1,
     wq2, bq2, wk2, bk2, wv2, bv2, wo2, bo2, g2, be2,
     w1, b1, w2, b2, g3, be3) = params

    def pad_lanes(a):
        pad = LANE - a.shape[1]
        if pad:
            a = jnp.concatenate([a, jnp.zeros((a.shape[0], pad), jnp.float32)], axis=1)
        return a

    wbig = jnp.concatenate(
        [pad_lanes(m) for m in (wq1, wk1, wv1, wo1, wq2, wk2, wv2, wo2, w1)], axis=1)
    assert wbig.shape == (D_MODEL, _W_SLAB)

    vec = jnp.concatenate(
        [pad_lanes(v) for v in (bq1, bk1, bv1, bo1, g1, be1,
                                bq2, bk2, bv2, bo2, g2, be2,
                                b1, b2, g3, be3)], axis=0)
    assert vec.shape == (_V_ROWS, LANE)
    return wbig, w2, vec


def decoder_layer(yz, xz, la_mask, pad_mask, params):
    B, Sy, D = yz.shape
    Sx = xz.shape[1]
    assert D == D_MODEL

    wbig, w2, vec = pack_params(params)
    # additive masks (0 = keep, -1e9 = masked), kept per-batch (no block-diag folding)
    smask = (la_mask.astype(jnp.float32) - 1.0) * MASK_VAL                 # (B, Sy, Sy)
    cmask = jnp.broadcast_to((pad_mask.astype(jnp.float32) - 1.0) * MASK_VAL,
                             (B, Sy, Sx))                                  # (B, Sy, Sx)
    y2d = yz.reshape(B * Sy, D)
    x2d = xz.reshape(B * Sx, D)

    vmem = pl.BlockSpec(memory_space=pltpu.MemorySpace.VMEM)   # full arrays, VMEM-resident
    out = pl.pallas_call(
        decoder_layer_kernel,
        out_shape=jax.ShapeDtypeStruct((B * Sy, D), jnp.float32),
        in_specs=[vmem] * 7,
        out_specs=vmem,
    )(y2d, x2d, smask, cmask, wbig, w2, vec)

    return out.reshape(B, Sy, D)


# ---------------- deterministic parameter init --------------------------------------------

def init_params(key):
    keys = jax.random.split(key, 10)
    ki = iter(keys)

    def lin(din, dout):
        w = jax.random.normal(next(ki), (din, dout), jnp.float32) * 0.02
        b = jnp.zeros((1, dout), jnp.float32)
        return w, b

    params = []
    for _ in range(2):  # two MultiHeadAttention blocks (self + cross)
        wq, bq = lin(D_MODEL, D_MODEL)
        wk, bk = lin(D_MODEL, D_MODEL)
        wv, bv = lin(D_MODEL, D_MODEL)
        wo, bo = lin(D_MODEL, D_MODEL)
        gamma = jnp.ones((1, D_MODEL), jnp.float32)
        beta = jnp.zeros((1, D_MODEL), jnp.float32)
        params += [wq, bq, wk, bk, wv, bv, wo, bo, gamma, beta]
    w1, b1 = lin(D_MODEL, D_FF)
    w2, b2 = lin(D_FF, D_MODEL)
    params += [w1, b1, w2, b2,
               jnp.ones((1, D_MODEL), jnp.float32), jnp.zeros((1, D_MODEL), jnp.float32)]
    return params


# ---------------- plain-JAX reference (faithful to the PyTorch module) ---------------------

def _mha_ref(q_in, kv_in, mask, wq, bq, wk, bk, wv, bv, wo, bo, gamma, beta):
    q = jnp.dot(q_in, wq, preferred_element_type=jnp.float32) + bq
    k = jnp.dot(kv_in, wk, preferred_element_type=jnp.float32) + bk
    v = jnp.dot(kv_in, wv, preferred_element_type=jnp.float32) + bv
    scale = 1.0 / math.sqrt(D_K)
    heads = []
    for h in range(H_HEAD):
        sl = slice(h * D_K, (h + 1) * D_K)
        s = jnp.dot(q[:, sl], k[:, sl].T, preferred_element_type=jnp.float32) * scale
        s = jnp.where(mask > 0, s, -MASK_VAL)
        s = s - jnp.max(s, axis=-1, keepdims=True)
        p = jnp.exp(s)
        p = p / jnp.sum(p, axis=-1, keepdims=True)
        heads.append(jnp.dot(p, v[:, sl], preferred_element_type=jnp.float32))
    o = jnp.dot(jnp.concatenate(heads, axis=-1), wo, preferred_element_type=jnp.float32) + bo
    return _layer_norm(q_in + o, gamma, beta)


def _ffn_ref(x, w1, b1, w2, b2, gamma, beta):
    h = jnp.maximum(jnp.dot(x, w1, preferred_element_type=jnp.float32) + b1, 0.0)
    o = jnp.dot(h, w2, preferred_element_type=jnp.float32) + b2
    return _layer_norm(x + o, gamma, beta)


def reference(yz, xz, la_mask, pad_mask, params):
    (wq1, bq1, wk1, bk1, wv1, bv1, wo1, bo1, g1, be1,
     wq2, bq2, wk2, bk2, wv2, bv2, wo2, bo2, g2, be2,
     w1, b1, w2, b2, g3, be3) = params

    def one(yzb, xzb, lab, padb):
        a1 = _mha_ref(yzb, yzb, lab, wq1, bq1, wk1, bk1, wv1, bv1, wo1, bo1, g1, be1)
        a2 = _mha_ref(a1, xzb, padb, wq2, bq2, wk2, bk2, wv2, bv2, wo2, bo2, g2, be2)
        return _ffn_ref(a2, w1, b1, w2, b2, g3, be3)

    return jax.vmap(one)(yz, xz, la_mask, pad_mask)


# ---------------- main ---------------------------------------------------------------------

if __name__ == "__main__":
    B, Sy, Sx = 2, 8, 8
    key = jax.random.PRNGKey(0)
    kp, ky, kx = jax.random.split(key, 3)

    params = init_params(kp)
    yz = jax.random.normal(ky, (B, Sy, D_MODEL), jnp.float32)
    xz = jax.random.normal(kx, (B, Sx, D_MODEL), jnp.float32)

    la_mask = jnp.broadcast_to(jnp.tril(jnp.ones((Sy, Sy), jnp.float32)), (B, Sy, Sy))
    pad_mask = jnp.ones((B, 1, Sx), jnp.float32).at[1, 0, Sx - 2:].set(0.0)

    out = decoder_layer(yz, xz, la_mask, pad_mask, params)
    out = jax.block_until_ready(out)

    ref = reference(yz, xz, la_mask, pad_mask, params)
    assert out.shape == (B, Sy, D_MODEL)
    err = float(jnp.max(jnp.abs(out - ref)))
    assert err < 2e-3, err   # tolerance covers the EUP approx-reciprocal in softmax
    print("KERNEL_OK")
</pallas_src>

<mosaic_0001>
module attributes {stable_mosaic.version = 11 : i64} {
  func.func @decoder_layer_kernel(%arg0: memref<16x32xf32, #tpu.memory_space<vmem>>, %arg1: memref<16x32xf32, #tpu.memory_space<vmem>>, %arg2: memref<2x8x8xf32, #tpu.memory_space<vmem>>, %arg3: memref<2x8x8xf32, #tpu.memory_space<vmem>>, %arg4: memref<32x1152xf32, #tpu.memory_space<vmem>>, %arg5: memref<128x32xf32, #tpu.memory_space<vmem>>, %arg6: memref<16x128xf32, #tpu.memory_space<vmem>>, %arg7: memref<16x32xf32, #tpu.memory_space<vmem>>) attributes {dimension_semantics = [], scalar_prefetch = 0 : i64, scratch_operands = 0 : i64, tpu.core_type = #tpu.core_type<tc>} {
    %c0 = arith.constant 0 : index
    %c0_0 = arith.constant 0 : index
    %0 = vector.load %arg0[%c0, %c0_0] : memref<16x32xf32, #tpu.memory_space<vmem>>, vector<16x32xf32>
    %c0_1 = arith.constant 0 : index
    %c0_2 = arith.constant 0 : index
    %1 = vector.load %arg1[%c0_1, %c0_2] : memref<16x32xf32, #tpu.memory_space<vmem>>, vector<16x32xf32>
    %c0_3 = arith.constant 0 : index
    %c0_4 = arith.constant 0 : index
    %c0_5 = arith.constant 0 : index
    %2 = vector.load %arg2[%c0_3, %c0_4, %c0_5] : memref<2x8x8xf32, #tpu.memory_space<vmem>>, vector<2x8x8xf32>
    %c0_6 = arith.constant 0 : index
    %c0_7 = arith.constant 0 : index
    %c0_8 = arith.constant 0 : index
    %3 = vector.load %arg3[%c0_6, %c0_7, %c0_8] : memref<2x8x8xf32, #tpu.memory_space<vmem>>, vector<2x8x8xf32>
    %c0_9 = arith.constant 0 : index
    %c0_10 = arith.constant 0 : index
    %4 = vector.load %arg4[%c0_9, %c0_10] : memref<32x1152xf32, #tpu.memory_space<vmem>>, vector<32x1152xf32>
    %c0_11 = arith.constant 0 : index
    %c0_12 = arith.constant 0 : index
    %5 = vector.load %arg5[%c0_11, %c0_12] : memref<128x32xf32, #tpu.memory_space<vmem>>, vector<128x32xf32>
    %c0_13 = arith.constant 0 : index
    %c0_14 = arith.constant 0 : index
    %6 = vector.load %arg6[%c0_13, %c0_14] : memref<16x128xf32, #tpu.memory_space<vmem>>, vector<16x128xf32>
    %7 = tpu.iota {dimensions = array<i32: 2>} : vector<1x1x32xi32>
    %8 = vector.extract_strided_slice %4 {offsets = [0, 0], sizes = [32, 32], strides = [1, 1]} : vector<32x1152xf32> to vector<32x32xf32>
    %cst = arith.constant dense<0.000000e+00> : vector<16x32xf32>
    %9 = tpu.matmul %0, %8, %cst {dimension_numbers = #tpu.dot_dimension_numbers<[1], [0], [0], [1], [0, 0, 1, 1], [], []>} : vector<16x32xf32>, vector<32x32xf32>, vector<16x32xf32> -> vector<16x32xf32>
    %10 = vector.extract_strided_slice %6 {offsets = [0, 0], sizes = [1, 32], strides = [1, 1]} : vector<16x128xf32> to vector<1x32xf32>
    %11 = vector.broadcast %10 : vector<1x32xf32> to vector<16x32xf32>
    %12 = arith.addf %9, %11 : vector<16x32xf32>
    %cst_15 = arith.constant 0.353553385 : f32
    %13 = vector.broadcast %cst_15 : f32 to vector<16x32xf32>
    %14 = arith.mulf %12, %13 : vector<16x32xf32>
    %15 = vector.extract_strided_slice %4 {offsets = [0, 128], sizes = [32, 32], strides = [1, 1]} : vector<32x1152xf32> to vector<32x32xf32>
    %cst_16 = arith.constant dense<0.000000e+00> : vector<16x32xf32>
    %16 = tpu.matmul %0, %15, %cst_16 {dimension_numbers = #tpu.dot_dimension_numbers<[1], [0], [0], [1], [0, 0, 1, 1], [], []>} : vector<16x32xf32>, vector<32x32xf32>, vector<16x32xf32> -> vector<16x32xf32>
    %17 = vector.extract_strided_slice %6 {offsets = [1, 0], sizes = [1, 32], strides = [1, 1]} : vector<16x128xf32> to vector<1x32xf32>
    %18 = vector.broadcast %17 : vector<1x32xf32> to vector<16x32xf32>
    %19 = arith.addf %16, %18 : vector<16x32xf32>
    %20 = vector.extract_strided_slice %4 {offsets = [0, 256], sizes = [32, 32], strides = [1, 1]} : vector<32x1152xf32> to vector<32x32xf32>
    %cst_17 = arith.constant dense<0.000000e+00> : vector<16x32xf32>
    %21 = tpu.matmul %0, %20, %cst_17 {dimension_numbers = #tpu.dot_dimension_numbers<[1], [0], [0], [1], [0, 0, 1, 1], [], []>} : vector<16x32xf32>, vector<32x32xf32>, vector<16x32xf32> -> vector<16x32xf32>
    %22 = vector.extract_strided_slice %6 {offsets = [2, 0], sizes = [1, 32], strides = [1, 1]} : vector<16x128xf32> to vector<1x32xf32>
    %23 = vector.broadcast %22 : vector<1x32xf32> to vector<16x32xf32>
    %24 = arith.addf %21, %23 : vector<16x32xf32>
    %25 = vector.shape_cast %14 : vector<16x32xf32> to vector<2x8x32xf32>
    %26 = vector.shape_cast %19 : vector<16x32xf32> to vector<2x8x32xf32>
    %27 = vector.shape_cast %24 : vector<16x32xf32> to vector<2x8x32xf32>
    %cst_18 = arith.constant 0.000000e+00 : f32
    %28 = vector.broadcast %cst_18 : f32 to vector<2x8x32xf32>
    %c0_i32 = arith.constant 0 : i32
    %29 = vector.broadcast %c0_i32 : i32 to vector<1x1x32xi32>
    %30 = arith.cmpi sge, %7, %29 : vector<1x1x32xi32>
    %c8_i32 = arith.constant 8 : i32
    %31 = vector.broadcast %c8_i32 : i32 to vector<1x1x32xi32>
    %32 = arith.cmpi slt, %7, %31 : vector<1x1x32xi32>
    %33 = arith.andi %30, %32 : vector<1x1x32xi1>
    %34 = arith.extui %33 : vector<1x1x32xi1> to vector<1x1x32xi32>
    %35 = arith.sitofp %34 : vector<1x1x32xi32> to vector<1x1x32xf32>
    %36 = vector.broadcast %35 : vector<1x1x32xf32> to vector<2x8x32xf32>
    %37 = arith.mulf %25, %36 : vector<2x8x32xf32>
    "tpu.trace_start"() <{level = 10 : i32, message = "bqd,bkd->bqk"}> : () -> ()
    %cst_19 = arith.constant dense<0.000000e+00> : vector<2x8x8xf32>
    %38 = tpu.matmul %37, %26, %cst_19 {dimension_numbers = #tpu.dot_dimension_numbers<[2], [2], [1], [1], [0, 0, 0, 1, 1, 1], [0], [0]>} : vector<2x8x32xf32>, vector<2x8x32xf32>, vector<2x8x8xf32> -> vector<2x8x8xf32>
    "tpu.trace_stop"() : () -> ()
    %39 = arith.addf %38, %2 : vector<2x8x8xf32>
    %cst_20 = arith.constant dense<0xFF800000> : vector<2x8xf32>
    %40 = vector.multi_reduction <maximumf>, %39, %cst_20 [2] : vector<2x8x8xf32> to vector<2x8xf32>
    %41 = vector.shape_cast %40 : vector<2x8xf32> to vector<2x8x1xf32>
    %42 = vector.broadcast %41 : vector<2x8x1xf32> to vector<2x8x8xf32>
    %43 = arith.subf %39, %42 : vector<2x8x8xf32>
    %44 = math.exp %43 : vector<2x8x8xf32>
    %cst_21 = arith.constant dense<0.000000e+00> : vector<2x8xf32>
    %45 = vector.multi_reduction <add>, %44, %cst_21 [2] : vector<2x8x8xf32> to vector<2x8xf32>
    %46 = vector.shape_cast %45 : vector<2x8xf32> to vector<2x8x1xf32>
    %47 = tpu.reciprocal %46 {approx = true} : vector<2x8x1xf32> -> vector<2x8x1xf32>
    %48 = vector.broadcast %47 : vector<2x8x1xf32> to vector<2x8x8xf32>
    %49 = arith.mulf %44, %48 : vector<2x8x8xf32>
    %50 = vector.broadcast %35 : vector<1x1x32xf32> to vector<2x8x32xf32>
    %51 = arith.mulf %27, %50 : vector<2x8x32xf32>
    "tpu.trace_start"() <{level = 10 : i32, message = "bqk,bkd->bqd"}> : () -> ()
    %cst_22 = arith.constant dense<0.000000e+00> : vector<2x8x32xf32>
    %52 = tpu.matmul %49, %51, %cst_22 {dimension_numbers = #tpu.dot_dimension_numbers<[2], [1], [1], [2], [0, 0, 0, 1, 1, 2], [0], [0]>} : vector<2x8x8xf32>, vector<2x8x32xf32>, vector<2x8x32xf32> -> vector<2x8x32xf32>
    "tpu.trace_stop"() : () -> ()
    %53 = arith.addf %28, %52 : vector<2x8x32xf32>
    %c8_i32_23 = arith.constant 8 : i32
    %54 = vector.broadcast %c8_i32_23 : i32 to vector<1x1x32xi32>
    %55 = arith.cmpi sge, %7, %54 : vector<1x1x32xi32>
    %c16_i32 = arith.constant 16 : i32
    %56 = vector.broadcast %c16_i32 : i32 to vector<1x1x32xi32>
    %57 = arith.cmpi slt, %7, %56 : vector<1x1x32xi32>
    %58 = arith.andi %55, %57 : vector<1x1x32xi1>
    %59 = arith.extui %58 : vector<1x1x32xi1> to vector<1x1x32xi32>
    %60 = arith.sitofp %59 : vector<1x1x32xi32> to vector<1x1x32xf32>
    %61 = vector.broadcast %60 : vector<1x1x32xf32> to vector<2x8x32xf32>
    %62 = arith.mulf %25, %61 : vector<2x8x32xf32>
    "tpu.trace_start"() <{level = 10 : i32, message = "bqd,bkd->bqk"}> : () -> ()
    %cst_24 = arith.constant dense<0.000000e+00> : vector<2x8x8xf32>
    %63 = tpu.matmul %62, %26, %cst_24 {dimension_numbers = #tpu.dot_dimension_numbers<[2], [2], [1], [1], [0, 0, 0, 1, 1, 1], [0], [0]>} : vector<2x8x32xf32>, vector<2x8x32xf32>, vector<2x8x8xf32> -> vector<2x8x8xf32>
    "tpu.trace_stop"() : () -> ()
    %64 = arith.addf %63, %2 : vector<2x8x8xf32>
    %cst_25 = arith.constant dense<0xFF800000> : vector<2x8xf32>
    %65 = vector.multi_reduction <maximumf>, %64, %cst_25 [2] : vector<2x8x8xf32> to vector<2x8xf32>
    %66 = vector.shape_cast %65 : vector<2x8xf32> to vector<2x8x1xf32>
    %67 = vector.broadcast %66 : vector<2x8x1xf32> to vector<2x8x8xf32>
    %68 = arith.subf %64, %67 : vector<2x8x8xf32>
    %69 = math.exp %68 : vector<2x8x8xf32>
    %cst_26 = arith.constant dense<0.000000e+00> : vector<2x8xf32>
    %70 = vector.multi_reduction <add>, %69, %cst_26 [2] : vector<2x8x8xf32> to vector<2x8xf32>
    %71 = vector.shape_cast %70 : vector<2x8xf32> to vector<2x8x1xf32>
    %72 = tpu.reciprocal %71 {approx = true} : vector<2x8x1xf32> -> vector<2x8x1xf32>
    %73 = vector.broadcast %72 : vector<2x8x1xf32> to vector<2x8x8xf32>
    %74 = arith.mulf %69, %73 : vector<2x8x8xf32>
    %75 = vector.broadcast %60 : vector<1x1x32xf32> to vector<2x8x32xf32>
    %76 = arith.mulf %27, %75 : vector<2x8x32xf32>
    "tpu.trace_start"() <{level = 10 : i32, message = "bqk,bkd->bqd"}> : () -> ()
    %cst_27 = arith.constant dense<0.000000e+00> : vector<2x8x32xf32>
    %77 = tpu.matmul %74, %76, %cst_27 {dimension_numbers = #tpu.dot_dimension_numbers<[2], [1], [1], [2], [0, 0, 0, 1, 1, 2], [0], [0]>} : vector<2x8x8xf32>, vector<2x8x32xf32>, vector<2x8x32xf32> -> vector<2x8x32xf32>
    "tpu.trace_stop"() : () -> ()
    %78 = arith.addf %53, %77 : vector<2x8x32xf32>
    %c16_i32_28 = arith.constant 16 : i32
    %79 = vector.broadcast %c16_i32_28 : i32 to vector<1x1x32xi32>
    %80 = arith.cmpi sge, %7, %79 : vector<1x1x32xi32>
    %c24_i32 = arith.constant 24 : i32
    %81 = vector.broadcast %c24_i32 : i32 to vector<1x1x32xi32>
    %82 = arith.cmpi slt, %7, %81 : vector<1x1x32xi32>
    %83 = arith.andi %80, %82 : vector<1x1x32xi1>
    %84 = arith.extui %83 : vector<1x1x32xi1> to vector<1x1x32xi32>
    %85 = arith.sitofp %84 : vector<1x1x32xi32> to vector<1x1x32xf32>
    %86 = vector.broadcast %85 : vector<1x1x32xf32> to vector<2x8x32xf32>
    %87 = arith.mulf %25, %86 : vector<2x8x32xf32>
    "tpu.trace_start"() <{level = 10 : i32, message = "bqd,bkd->bqk"}> : () -> ()
    %cst_29 = arith.constant dense<0.000000e+00> : vector<2x8x8xf32>
    %88 = tpu.matmul %87, %26, %cst_29 {dimension_numbers = #tpu.dot_dimension_numbers<[2], [2], [1], [1], [0, 0, 0, 1, 1, 1], [0], [0]>} : vector<2x8x32xf32>, vector<2x8x32xf32>, vector<2x8x8xf32> -> vector<2x8x8xf32>
    "tpu.trace_stop"() : () -> ()
    %89 = arith.addf %88, %2 : vector<2x8x8xf32>
    %cst_30 = arith.constant dense<0xFF800000> : vector<2x8xf32>
    %90 = vector.multi_reduction <maximumf>, %89, %cst_30 [2] : vector<2x8x8xf32> to vector<2x8xf32>
    %91 = vector.shape_cast %90 : vector<2x8xf32> to vector<2x8x1xf32>
    %92 = vector.broadcast %91 : vector<2x8x1xf32> to vector<2x8x8xf32>
    %93 = arith.subf %89, %92 : vector<2x8x8xf32>
    %94 = math.exp %93 : vector<2x8x8xf32>
    %cst_31 = arith.constant dense<0.000000e+00> : vector<2x8xf32>
    %95 = vector.multi_reduction <add>, %94, %cst_31 [2] : vector<2x8x8xf32> to vector<2x8xf32>
    %96 = vector.shape_cast %95 : vector<2x8xf32> to vector<2x8x1xf32>
    %97 = tpu.reciprocal %96 {approx = true} : vector<2x8x1xf32> -> vector<2x8x1xf32>
    %98 = vector.broadcast %97 : vector<2x8x1xf32> to vector<2x8x8xf32>
    %99 = arith.mulf %94, %98 : vector<2x8x8xf32>
    %100 = vector.broadcast %85 : vector<1x1x32xf32> to vector<2x8x32xf32>
    %101 = arith.mulf %27, %100 : vector<2x8x32xf32>
    "tpu.trace_start"() <{level = 10 : i32, message = "bqk,bkd->bqd"}> : () -> ()
    %cst_32 = arith.constant dense<0.000000e+00> : vector<2x8x32xf32>
    %102 = tpu.matmul %99, %101, %cst_32 {dimension_numbers = #tpu.dot_dimension_numbers<[2], [1], [1], [2], [0, 0, 0, 1, 1, 2], [0], [0]>} : vector<2x8x8xf32>, vector<2x8x32xf32>, vector<2x8x32xf32> -> vector<2x8x32xf32>
    "tpu.trace_stop"() : () -> ()
    %103 = arith.addf %78, %102 : vector<2x8x32xf32>
    %c24_i32_33 = arith.constant 24 : i32
    %104 = vector.broadcast %c24_i32_33 : i32 to vector<1x1x32xi32>
    %105 = arith.cmpi sge, %7, %104 : vector<1x1x32xi32>
    %c32_i32 = arith.constant 32 : i32
    %106 = vector.broadcast %c32_i32 : i32 to vector<1x1x32xi32>
    %107 = arith.cmpi slt, %7, %106 : vector<1x1x32xi32>
    %108 = arith.andi %105, %107 : vector<1x1x32xi1>
    %109 = arith.extui %108 : vector<1x1x32xi1> to vector<1x1x32xi32>
    %110 = arith.sitofp %109 : vector<1x1x32xi32> to vector<1x1x32xf32>
    %111 = vector.broadcast %110 : vector<1x1x32xf32> to vector<2x8x32xf32>
    %112 = arith.mulf %25, %111 : vector<2x8x32xf32>
    "tpu.trace_start"() <{level = 10 : i32, message = "bqd,bkd->bqk"}> : () -> ()
    %cst_34 = arith.constant dense<0.000000e+00> : vector<2x8x8xf32>
    %113 = tpu.matmul %112, %26, %cst_34 {dimension_numbers = #tpu.dot_dimension_numbers<[2], [2], [1], [1], [0, 0, 0, 1, 1, 1], [0], [0]>} : vector<2x8x32xf32>, vector<2x8x32xf32>, vector<2x8x8xf32> -> vector<2x8x8xf32>
    "tpu.trace_stop"() : () -> ()
    %114 = arith.addf %113, %2 : vector<2x8x8xf32>
    %cst_35 = arith.constant dense<0xFF800000> : vector<2x8xf32>
    %115 = vector.multi_reduction <maximumf>, %114, %cst_35 [2] : vector<2x8x8xf32> to vector<2x8xf32>
    %116 = vector.shape_cast %115 : vector<2x8xf32> to vector<2x8x1xf32>
    %117 = vector.broadcast %116 : vector<2x8x1xf32> to vector<2x8x8xf32>
    %118 = arith.subf %114, %117 : vector<2x8x8xf32>
    %119 = math.exp %118 : vector<2x8x8xf32>
    %cst_36 = arith.constant dense<0.000000e+00> : vector<2x8xf32>
    %120 = vector.multi_reduction <add>, %119, %cst_36 [2] : vector<2x8x8xf32> to vector<2x8xf32>
    %121 = vector.shape_cast %120 : vector<2x8xf32> to vector<2x8x1xf32>
    %122 = tpu.reciprocal %121 {approx = true} : vector<2x8x1xf32> -> vector<2x8x1xf32>
    %123 = vector.broadcast %122 : vector<2x8x1xf32> to vector<2x8x8xf32>
    %124 = arith.mulf %119, %123 : vector<2x8x8xf32>
    %125 = vector.broadcast %110 : vector<1x1x32xf32> to vector<2x8x32xf32>
    %126 = arith.mulf %27, %125 : vector<2x8x32xf32>
    "tpu.trace_start"() <{level = 10 : i32, message = "bqk,bkd->bqd"}> : () -> ()
    %cst_37 = arith.constant dense<0.000000e+00> : vector<2x8x32xf32>
    %127 = tpu.matmul %124, %126, %cst_37 {dimension_numbers = #tpu.dot_dimension_numbers<[2], [1], [1], [2], [0, 0, 0, 1, 1, 2], [0], [0]>} : vector<2x8x8xf32>, vector<2x8x32xf32>, vector<2x8x32xf32> -> vector<2x8x32xf32>
    "tpu.trace_stop"() : () -> ()
    %128 = arith.addf %103, %127 : vector<2x8x32xf32>
    %129 = vector.shape_cast %128 : vector<2x8x32xf32> to vector<16x32xf32>
    %130 = vector.extract_strided_slice %4 {offsets = [0, 384], sizes = [32, 32], strides = [1, 1]} : vector<32x1152xf32> to vector<32x32xf32>
    %cst_38 = arith.constant dense<0.000000e+00> : vector<16x32xf32>
    %131 = tpu.matmul %129, %130, %cst_38 {dimension_numbers = #tpu.dot_dimension_numbers<[1], [0], [0], [1], [0, 0, 1, 1], [], []>} : vector<16x32xf32>, vector<32x32xf32>, vector<16x32xf32> -> vector<16x32xf32>
    %132 = vector.extract_strided_slice %6 {offsets = [3, 0], sizes = [1, 32], strides = [1, 1]} : vector<16x128xf32> to vector<1x32xf32>
    %133 = vector.broadcast %132 : vector<1x32xf32> to vector<16x32xf32>
    %134 = arith.addf %131, %133 : vector<16x32xf32>
    %135 = arith.addf %0, %134 : vector<16x32xf32>
    %136 = vector.extract_strided_slice %6 {offsets = [4, 0], sizes = [1, 32], strides = [1, 1]} : vector<16x128xf32> to vector<1x32xf32>
    %137 = vector.extract_strided_slice %6 {offsets = [5, 0], sizes = [1, 32], strides = [1, 1]} : vector<16x128xf32> to vector<1x32xf32>
    %cst_39 = arith.constant dense<0.000000e+00> : vector<16xf32>
    %138 = vector.multi_reduction <add>, %135, %cst_39 [1] : vector<16x32xf32> to vector<16xf32>
    %139 = vector.shape_cast %138 : vector<16xf32> to vector<16x1xf32>
    %cst_40 = arith.constant 3.200000e+01 : f32
    %140 = vector.broadcast %cst_40 : f32 to vector<16x1xf32>
    %141 = arith.divf %139, %140 : vector<16x1xf32>
    %142 = vector.broadcast %141 : vector<16x1xf32> to vector<16x32xf32>
    %143 = arith.subf %135, %142 : vector<16x32xf32>
    %144 = arith.mulf %143, %143 : vector<16x32xf32>
    %cst_41 = arith.constant dense<0.000000e+00> : vector<16xf32>
    %145 = vector.multi_reduction <add>, %144, %cst_41 [1] : vector<16x32xf32> to vector<16xf32>
    %146 = vector.shape_cast %145 : vector<16xf32> to vector<16x1xf32>
    %cst_42 = arith.constant 3.200000e+01 : f32
    %147 = vector.broadcast %cst_42 : f32 to vector<16x1xf32>
    %148 = arith.divf %146, %147 : vector<16x1xf32>
    %149 = vector.broadcast %141 : vector<16x1xf32> to vector<16x32xf32>
    %150 = arith.subf %135, %149 : vector<16x32xf32>
    %cst_43 = arith.constant 9.99999974E-6 : f32
    %151 = vector.broadcast %cst_43 : f32 to vector<16x1xf32>
    %152 = arith.addf %148, %151 : vector<16x1xf32>
    %153 = math.rsqrt %152 : vector<16x1xf32>
    %154 = vector.broadcast %153 : vector<16x1xf32> to vector<16x32xf32>
    %155 = arith.mulf %150, %154 : vector<16x32xf32>
    %156 = vector.broadcast %136 : vector<1x32xf32> to vector<16x32xf32>
    %157 = arith.mulf %155, %156 : vector<16x32xf32>
    %158 = vector.broadcast %137 : vector<1x32xf32> to vector<16x32xf32>
    %159 = arith.addf %157, %158 : vector<16x32xf32>
    %160 = vector.extract_strided_slice %4 {offsets = [0, 512], sizes = [32, 32], strides = [1, 1]} : vector<32x1152xf32> to vector<32x32xf32>
    %cst_44 = arith.constant dense<0.000000e+00> : vector<16x32xf32>
    %161 = tpu.matmul %159, %160, %cst_44 {dimension_numbers = #tpu.dot_dimension_numbers<[1], [0], [0], [1], [0, 0, 1, 1], [], []>} : vector<16x32xf32>, vector<32x32xf32>, vector<16x32xf32> -> vector<16x32xf32>
    %162 = vector.extract_strided_slice %6 {offsets = [6, 0], sizes = [1, 32], strides = [1, 1]} : vector<16x128xf32> to vector<1x32xf32>
    %163 = vector.broadcast %162 : vector<1x32xf32> to vector<16x32xf32>
    %164 = arith.addf %161, %163 : vector<16x32xf32>
    %cst_45 = arith.constant 0.353553385 : f32
    %165 = vector.broadcast %cst_45 : f32 to vector<16x32xf32>
    %166 = arith.mulf %164, %165 : vector<16x32xf32>
    %167 = vector.extract_strided_slice %4 {offsets = [0, 640], sizes = [32, 32], strides = [1, 1]} : vector<32x1152xf32> to vector<32x32xf32>
    %cst_46 = arith.constant dense<0.000000e+00> : vector<16x32xf32>
    %168 = tpu.matmul %1, %167, %cst_46 {dimension_numbers = #tpu.dot_dimension_numbers<[1], [0], [0], [1], [0, 0, 1, 1], [], []>} : vector<16x32xf32>, vector<32x32xf32>, vector<16x32xf32> -> vector<16x32xf32>
    %169 = vector.extract_strided_slice %6 {offsets = [7, 0], sizes = [1, 32], strides = [1, 1]} : vector<16x128xf32> to vector<1x32xf32>
    %170 = vector.broadcast %169 : vector<1x32xf32> to vector<16x32xf32>
    %171 = arith.addf %168, %170 : vector<16x32xf32>
    %172 = vector.extract_strided_slice %4 {offsets = [0, 768], sizes = [32, 32], strides = [1, 1]} : vector<32x1152xf32> to vector<32x32xf32>
    %cst_47 = arith.constant dense<0.000000e+00> : vector<16x32xf32>
    %173 = tpu.matmul %1, %172, %cst_47 {dimension_numbers = #tpu.dot_dimension_numbers<[1], [0], [0], [1], [0, 0, 1, 1], [], []>} : vector<16x32xf32>, vector<32x32xf32>, vector<16x32xf32> -> vector<16x32xf32>
    %174 = vector.extract_strided_slice %6 {offsets = [8, 0], sizes = [1, 32], strides = [1, 1]} : vector<16x128xf32> to vector<1x32xf32>
    %175 = vector.broadcast %174 : vector<1x32xf32> to vector<16x32xf32>
    %176 = arith.addf %173, %175 : vector<16x32xf32>
    %177 = vector.shape_cast %166 : vector<16x32xf32> to vector<2x8x32xf32>
    %178 = vector.shape_cast %171 : vector<16x32xf32> to vector<2x8x32xf32>
    %179 = vector.shape_cast %176 : vector<16x32xf32> to vector<2x8x32xf32>
    %cst_48 = arith.constant 0.000000e+00 : f32
    %180 = vector.broadcast %cst_48 : f32 to vector<2x8x32xf32>
    %c0_i32_49 = arith.constant 0 : i32
    %181 = vector.broadcast %c0_i32_49 : i32 to vector<1x1x32xi32>
    %182 = arith.cmpi sge, %7, %181 : vector<1x1x32xi32>
    %c8_i32_50 = arith.constant 8 : i32
    %183 = vector.broadcast %c8_i32_50 : i32 to vector<1x1x32xi32>
    %184 = arith.cmpi slt, %7, %183 : vector<1x1x32xi32>
    %185 = arith.andi %182, %184 : vector<1x1x32xi1>
    %186 = arith.extui %185 : vector<1x1x32xi1> to vector<1x1x32xi32>
    %187 = arith.sitofp %186 : vector<1x1x32xi32> to vector<1x1x32xf32>
    %188 = vector.broadcast %187 : vector<1x1x32xf32> to vector<2x8x32xf32>
    %189 = arith.mulf %177, %188 : vector<2x8x32xf32>
    "tpu.trace_start"() <{level = 10 : i32, message = "bqd,bkd->bqk"}> : () -> ()
    %cst_51 = arith.constant dense<0.000000e+00> : vector<2x8x8xf32>
    %190 = tpu.matmul %189, %178, %cst_51 {dimension_numbers = #tpu.dot_dimension_numbers<[2], [2], [1], [1], [0, 0, 0, 1, 1, 1], [0], [0]>} : vector<2x8x32xf32>, vector<2x8x32xf32>, vector<2x8x8xf32> -> vector<2x8x8xf32>
    "tpu.trace_stop"() : () -> ()
    %191 = arith.addf %190, %3 : vector<2x8x8xf32>
    %cst_52 = arith.constant dense<0xFF800000> : vector<2x8xf32>
    %192 = vector.multi_reduction <maximumf>, %191, %cst_52 [2] : vector<2x8x8xf32> to vector<2x8xf32>
    %193 = vector.shape_cast %192 : vector<2x8xf32> to vector<2x8x1xf32>
    %194 = vector.broadcast %193 : vector<2x8x1xf32> to vector<2x8x8xf32>
    %195 = arith.subf %191, %194 : vector<2x8x8xf32>
    %196 = math.exp %195 : vector<2x8x8xf32>
    %cst_53 = arith.constant dense<0.000000e+00> : vector<2x8xf32>
    %197 = vector.multi_reduction <add>, %196, %cst_53 [2] : vector<2x8x8xf32> to vector<2x8xf32>
    %198 = vector.shape_cast %197 : vector<2x8xf32> to vector<2x8x1xf32>
    %199 = tpu.reciprocal %198 {approx = true} : vector<2x8x1xf32> -> vector<2x8x1xf32>
    %200 = vector.broadcast %199 : vector<2x8x1xf32> to vector<2x8x8xf32>
    %201 = arith.mulf %196, %200 : vector<2x8x8xf32>
    %202 = vector.broadcast %187 : vector<1x1x32xf32> to vector<2x8x32xf32>
    %203 = arith.mulf %179, %202 : vector<2x8x32xf32>
    "tpu.trace_start"() <{level = 10 : i32, message = "bqk,bkd->bqd"}> : () -> ()
    %cst_54 = arith.constant dense<0.000000e+00> : vector<2x8x32xf32>
    %204 = tpu.matmul %201, %203, %cst_54 {dimension_numbers = #tpu.dot_dimension_numbers<[2], [1], [1], [2], [0, 0, 0, 1, 1, 2], [0], [0]>} : vector<2x8x8xf32>, vector<2x8x32xf32>, vector<2x8x32xf32> -> vector<2x8x32xf32>
    "tpu.trace_stop"() : () -> ()
    %205 = arith.addf %180, %204 : vector<2x8x32xf32>
    %c8_i32_55 = arith.constant 8 : i32
    %206 = vector.broadcast %c8_i32_55 : i32 to vector<1x1x32xi32>
    %207 = arith.cmpi sge, %7, %206 : vector<1x1x32xi32>
    %c16_i32_56 = arith.constant 16 : i32
    %208 = vector.broadcast %c16_i32_56 : i32 to vector<1x1x32xi32>
    %209 = arith.cmpi slt, %7, %208 : vector<1x1x32xi32>
    %210 = arith.andi %207, %209 : vector<1x1x32xi1>
    %211 = arith.extui %210 : vector<1x1x32xi1> to vector<1x1x32xi32>
    %212 = arith.sitofp %211 : vector<1x1x32xi32> to vector<1x1x32xf32>
    %213 = vector.broadcast %212 : vector<1x1x32xf32> to vector<2x8x32xf32>
    %214 = arith.mulf %177, %213 : vector<2x8x32xf32>
    "tpu.trace_start"() <{level = 10 : i32, message = "bqd,bkd->bqk"}> : () -> ()
    %cst_57 = arith.constant dense<0.000000e+00> : vector<2x8x8xf32>
    %215 = tpu.matmul %214, %178, %cst_57 {dimension_numbers = #tpu.dot_dimension_numbers<[2], [2], [1], [1], [0, 0, 0, 1, 1, 1], [0], [0]>} : vector<2x8x32xf32>, vector<2x8x32xf32>, vector<2x8x8xf32> -> vector<2x8x8xf32>
    "tpu.trace_stop"() : () -> ()
    %216 = arith.addf %215, %3 : vector<2x8x8xf32>
    %cst_58 = arith.constant dense<0xFF800000> : vector<2x8xf32>
    %217 = vector.multi_reduction <maximumf>, %216, %cst_58 [2] : vector<2x8x8xf32> to vector<2x8xf32>
    %218 = vector.shape_cast %217 : vector<2x8xf32> to vector<2x8x1xf32>
    %219 = vector.broadcast %218 : vector<2x8x1xf32> to vector<2x8x8xf32>
    %220 = arith.subf %216, %219 : vector<2x8x8xf32>
    %221 = math.exp %220 : vector<2x8x8xf32>
    %cst_59 = arith.constant dense<0.000000e+00> : vector<2x8xf32>
    %222 = vector.multi_reduction <add>, %221, %cst_59 [2] : vector<2x8x8xf32> to vector<2x8xf32>
    %223 = vector.shape_cast %222 : vector<2x8xf32> to vector<2x8x1xf32>
    %224 = tpu.reciprocal %223 {approx = true} : vector<2x8x1xf32> -> vector<2x8x1xf32>
    %225 = vector.broadcast %224 : vector<2x8x1xf32> to vector<2x8x8xf32>
    %226 = arith.mulf %221, %225 : vector<2x8x8xf32>
    %227 = vector.broadcast %212 : vector<1x1x32xf32> to vector<2x8x32xf32>
    %228 = arith.mulf %179, %227 : vector<2x8x32xf32>
    "tpu.trace_start"() <{level = 10 : i32, message = "bqk,bkd->bqd"}> : () -> ()
    %cst_60 = arith.constant dense<0.000000e+00> : vector<2x8x32xf32>
    %229 = tpu.matmul %226, %228, %cst_60 {dimension_numbers = #tpu.dot_dimension_numbers<[2], [1], [1], [2], [0, 0, 0, 1, 1, 2], [0], [0]>} : vector<2x8x8xf32>, vector<2x8x32xf32>, vector<2x8x32xf32> -> vector<2x8x32xf32>
    "tpu.trace_stop"() : () -> ()
    %230 = arith.addf %205, %229 : vector<2x8x32xf32>
    %c16_i32_61 = arith.constant 16 : i32
    %231 = vector.broadcast %c16_i32_61 : i32 to vector<1x1x32xi32>
    %232 = arith.cmpi sge, %7, %231 : vector<1x1x32xi32>
    %c24_i32_62 = arith.constant 24 : i32
    %233 = vector.broadcast %c24_i32_62 : i32 to vector<1x1x32xi32>
    %234 = arith.cmpi slt, %7, %233 : vector<1x1x32xi32>
    %235 = arith.andi %232, %234 : vector<1x1x32xi1>
    %236 = arith.extui %235 : vector<1x1x32xi1> to vector<1x1x32xi32>
    %237 = arith.sitofp %236 : vector<1x1x32xi32> to vector<1x1x32xf32>
    %238 = vector.broadcast %237 : vector<1x1x32xf32> to vector<2x8x32xf32>
    %239 = arith.mulf %177, %238 : vector<2x8x32xf32>
    "tpu.trace_start"() <{level = 10 : i32, message = "bqd,bkd->bqk"}> : () -> ()
    %cst_63 = arith.constant dense<0.000000e+00> : vector<2x8x8xf32>
    %240 = tpu.matmul %239, %178, %cst_63 {dimension_numbers = #tpu.dot_dimension_numbers<[2], [2], [1], [1], [0, 0, 0, 1, 1, 1], [0], [0]>} : vector<2x8x32xf32>, vector<2x8x32xf32>, vector<2x8x8xf32> -> vector<2x8x8xf32>
    "tpu.trace_stop"() : () -> ()
    %241 = arith.addf %240, %3 : vector<2x8x8xf32>
    %cst_64 = arith.constant dense<0xFF800000> : vector<2x8xf32>
    %242 = vector.multi_reduction <maximumf>, %241, %cst_64 [2] : vector<2x8x8xf32> to vector<2x8xf32>
    %243 = vector.shape_cast %242 : vector<2x8xf32> to vector<2x8x1xf32>
    %244 = vector.broadcast %243 : vector<2x8x1xf32> to vector<2x8x8xf32>
    %245 = arith.subf %241, %244 : vector<2x8x8xf32>
    %246 = math.exp %245 : vector<2x8x8xf32>
    %cst_65 = arith.constant dense<0.000000e+00> : vector<2x8xf32>
    %247 = vector.multi_reduction <add>, %246, %cst_65 [2] : vector<2x8x8xf32> to vector<2x8xf32>
    %248 = vector.shape_cast %247 : vector<2x8xf32> to vector<2x8x1xf32>
    %249 = tpu.reciprocal %248 {approx = true} : vector<2x8x1xf32> -> vector<2x8x1xf32>
    %250 = vector.broadcast %249 : vector<2x8x1xf32> to vector<2x8x8xf32>
    %251 = arith.mulf %246, %250 : vector<2x8x8xf32>
    %252 = vector.broadcast %237 : vector<1x1x32xf32> to vector<2x8x32xf32>
    %253 = arith.mulf %179, %252 : vector<2x8x32xf32>
    "tpu.trace_start"() <{level = 10 : i32, message = "bqk,bkd->bqd"}> : () -> ()
    %cst_66 = arith.constant dense<0.000000e+00> : vector<2x8x32xf32>
    %254 = tpu.matmul %251, %253, %cst_66 {dimension_numbers = #tpu.dot_dimension_numbers<[2], [1], [1], [2], [0, 0, 0, 1, 1, 2], [0], [0]>} : vector<2x8x8xf32>, vector<2x8x32xf32>, vector<2x8x32xf32> -> vector<2x8x32xf32>
    "tpu.trace_stop"() : () -> ()
    %255 = arith.addf %230, %254 : vector<2x8x32xf32>
    %c24_i32_67 = arith.constant 24 : i32
    %256 = vector.broadcast %c24_i32_67 : i32 to vector<1x1x32xi32>
    %257 = arith.cmpi sge, %7, %256 : vector<1x1x32xi32>
    %c32_i32_68 = arith.constant 32 : i32
    %258 = vector.broadcast %c32_i32_68 : i32 to vector<1x1x32xi32>
    %259 = arith.cmpi slt, %7, %258 : vector<1x1x32xi32>
    %260 = arith.andi %257, %259 : vector<1x1x32xi1>
    %261 = arith.extui %260 : vector<1x1x32xi1> to vector<1x1x32xi32>
    %262 = arith.sitofp %261 : vector<1x1x32xi32> to vector<1x1x32xf32>
    %263 = vector.broadcast %262 : vector<1x1x32xf32> to vector<2x8x32xf32>
    %264 = arith.mulf %177, %263 : vector<2x8x32xf32>
    "tpu.trace_start"() <{level = 10 : i32, message = "bqd,bkd->bqk"}> : () -> ()
    %cst_69 = arith.constant dense<0.000000e+00> : vector<2x8x8xf32>
    %265 = tpu.matmul %264, %178, %cst_69 {dimension_numbers = #tpu.dot_dimension_numbers<[2], [2], [1], [1], [0, 0, 0, 1, 1, 1], [0], [0]>} : vector<2x8x32xf32>, vector<2x8x32xf32>, vector<2x8x8xf32> -> vector<2x8x8xf32>
    "tpu.trace_stop"() : () -> ()
    %266 = arith.addf %265, %3 : vector<2x8x8xf32>
    %cst_70 = arith.constant dense<0xFF800000> : vector<2x8xf32>
    %267 = vector.multi_reduction <maximumf>, %266, %cst_70 [2] : vector<2x8x8xf32> to vector<2x8xf32>
    %268 = vector.shape_cast %267 : vector<2x8xf32> to vector<2x8x1xf32>
    %269 = vector.broadcast %268 : vector<2x8x1xf32> to vector<2x8x8xf32>
    %270 = arith.subf %266, %269 : vector<2x8x8xf32>
    %271 = math.exp %270 : vector<2x8x8xf32>
    %cst_71 = arith.constant dense<0.000000e+00> : vector<2x8xf32>
    %272 = vector.multi_reduction <add>, %271, %cst_71 [2] : vector<2x8x8xf32> to vector<2x8xf32>
    %273 = vector.shape_cast %272 : vector<2x8xf32> to vector<2x8x1xf32>
    %274 = tpu.reciprocal %273 {approx = true} : vector<2x8x1xf32> -> vector<2x8x1xf32>
    %275 = vector.broadcast %274 : vector<2x8x1xf32> to vector<2x8x8xf32>
    %276 = arith.mulf %271, %275 : vector<2x8x8xf32>
    %277 = vector.broadcast %262 : vector<1x1x32xf32> to vector<2x8x32xf32>
    %278 = arith.mulf %179, %277 : vector<2x8x32xf32>
    "tpu.trace_start"() <{level = 10 : i32, message = "bqk,bkd->bqd"}> : () -> ()
    %cst_72 = arith.constant dense<0.000000e+00> : vector<2x8x32xf32>
    %279 = tpu.matmul %276, %278, %cst_72 {dimension_numbers = #tpu.dot_dimension_numbers<[2], [1], [1], [2], [0, 0, 0, 1, 1, 2], [0], [0]>} : vector<2x8x8xf32>, vector<2x8x32xf32>, vector<2x8x32xf32> -> vector<2x8x32xf32>
    "tpu.trace_stop"() : () -> ()
    %280 = arith.addf %255, %279 : vector<2x8x32xf32>
    %281 = vector.shape_cast %280 : vector<2x8x32xf32> to vector<16x32xf32>
    %282 = vector.extract_strided_slice %4 {offsets = [0, 896], sizes = [32, 32], strides = [1, 1]} : vector<32x1152xf32> to vector<32x32xf32>
    %cst_73 = arith.constant dense<0.000000e+00> : vector<16x32xf32>
    %283 = tpu.matmul %281, %282, %cst_73 {dimension_numbers = #tpu.dot_dimension_numbers<[1], [0], [0], [1], [0, 0, 1, 1], [], []>} : vector<16x32xf32>, vector<32x32xf32>, vector<16x32xf32> -> vector<16x32xf32>
    %284 = vector.extract_strided_slice %6 {offsets = [9, 0], sizes = [1, 32], strides = [1, 1]} : vector<16x128xf32> to vector<1x32xf32>
    %285 = vector.broadcast %284 : vector<1x32xf32> to vector<16x32xf32>
    %286 = arith.addf %283, %285 : vector<16x32xf32>
    %287 = arith.addf %159, %286 : vector<16x32xf32>
    %288 = vector.extract_strided_slice %6 {offsets = [10, 0], sizes = [1, 32], strides = [1, 1]} : vector<16x128xf32> to vector<1x32xf32>
    %289 = vector.extract_strided_slice %6 {offsets = [11, 0], sizes = [1, 32], strides = [1, 1]} : vector<16x128xf32> to vector<1x32xf32>
    %cst_74 = arith.constant dense<0.000000e+00> : vector<16xf32>
    %290 = vector.multi_reduction <add>, %287, %cst_74 [1] : vector<16x32xf32> to vector<16xf32>
    %291 = vector.shape_cast %290 : vector<16xf32> to vector<16x1xf32>
    %cst_75 = arith.constant 3.200000e+01 : f32
    %292 = vector.broadcast %cst_75 : f32 to vector<16x1xf32>
    %293 = arith.divf %291, %292 : vector<16x1xf32>
    %294 = vector.broadcast %293 : vector<16x1xf32> to vector<16x32xf32>
    %295 = arith.subf %287, %294 : vector<16x32xf32>
    %296 = arith.mulf %295, %295 : vector<16x32xf32>
    %cst_76 = arith.constant dense<0.000000e+00> : vector<16xf32>
    %297 = vector.multi_reduction <add>, %296, %cst_76 [1] : vector<16x32xf32> to vector<16xf32>
    %298 = vector.shape_cast %297 : vector<16xf32> to vector<16x1xf32>
    %cst_77 = arith.constant 3.200000e+01 : f32
    %299 = vector.broadcast %cst_77 : f32 to vector<16x1xf32>
    %300 = arith.divf %298, %299 : vector<16x1xf32>
    %301 = vector.broadcast %293 : vector<16x1xf32> to vector<16x32xf32>
    %302 = arith.subf %287, %301 : vector<16x32xf32>
    %cst_78 = arith.constant 9.99999974E-6 : f32
    %303 = vector.broadcast %cst_78 : f32 to vector<16x1xf32>
    %304 = arith.addf %300, %303 : vector<16x1xf32>
    %305 = math.rsqrt %304 : vector<16x1xf32>
    %306 = vector.broadcast %305 : vector<16x1xf32> to vector<16x32xf32>
    %307 = arith.mulf %302, %306 : vector<16x32xf32>
    %308 = vector.broadcast %288 : vector<1x32xf32> to vector<16x32xf32>
    %309 = arith.mulf %307, %308 : vector<16x32xf32>
    %310 = vector.broadcast %289 : vector<1x32xf32> to vector<16x32xf32>
    %311 = arith.addf %309, %310 : vector<16x32xf32>
    %312 = vector.extract_strided_slice %4 {offsets = [0, 1024], sizes = [32, 128], strides = [1, 1]} : vector<32x1152xf32> to vector<32x128xf32>
    %cst_79 = arith.constant dense<0.000000e+00> : vector<16x128xf32>
    %313 = tpu.matmul %311, %312, %cst_79 {dimension_numbers = #tpu.dot_dimension_numbers<[1], [0], [0], [1], [0, 0, 1, 1], [], []>} : vector<16x32xf32>, vector<32x128xf32>, vector<16x128xf32> -> vector<16x128xf32>
    %314 = vector.extract_strided_slice %6 {offsets = [12, 0], sizes = [1, 128], strides = [1, 1]} : vector<16x128xf32> to vector<1x128xf32>
    %315 = vector.broadcast %314 : vector<1x128xf32> to vector<16x128xf32>
    %316 = arith.addf %313, %315 : vector<16x128xf32>
    %cst_80 = arith.constant 0.000000e+00 : f32
    %317 = vector.broadcast %cst_80 : f32 to vector<16x128xf32>
    %318 = arith.maximumf %316, %317 : vector<16x128xf32>
    %cst_81 = arith.constant dense<0.000000e+00> : vector<16x32xf32>
    %319 = tpu.matmul %318, %5, %cst_81 {dimension_numbers = #tpu.dot_dimension_numbers<[1], [0], [0], [1], [0, 0, 1, 1], [], []>} : vector<16x128xf32>, vector<128x32xf32>, vector<16x32xf32> -> vector<16x32xf32>
    %320 = vector.extract_strided_slice %6 {offsets = [13, 0], sizes = [1, 32], strides = [1, 1]} : vector<16x128xf32> to vector<1x32xf32>
    %321 = vector.broadcast %320 : vector<1x32xf32> to vector<16x32xf32>
    %322 = arith.addf %319, %321 : vector<16x32xf32>
    %323 = arith.addf %311, %322 : vector<16x32xf32>
    %324 = vector.extract_strided_slice %6 {offsets = [14, 0], sizes = [1, 32], strides = [1, 1]} : vector<16x128xf32> to vector<1x32xf32>
    %325 = vector.extract_strided_slice %6 {offsets = [15, 0], sizes = [1, 32], strides = [1, 1]} : vector<16x128xf32> to vector<1x32xf32>
    %cst_82 = arith.constant dense<0.000000e+00> : vector<16xf32>
    %326 = vector.multi_reduction <add>, %323, %cst_82 [1] : vector<16x32xf32> to vector<16xf32>
    %327 = vector.shape_cast %326 : vector<16xf32> to vector<16x1xf32>
    %cst_83 = arith.constant 3.200000e+01 : f32
    %328 = vector.broadcast %cst_83 : f32 to vector<16x1xf32>
    %329 = arith.divf %327, %328 : vector<16x1xf32>
    %330 = vector.broadcast %329 : vector<16x1xf32> to vector<16x32xf32>
    %331 = arith.subf %323, %330 : vector<16x32xf32>
    %332 = arith.mulf %331, %331 : vector<16x32xf32>
    %cst_84 = arith.constant dense<0.000000e+00> : vector<16xf32>
    %333 = vector.multi_reduction <add>, %332, %cst_84 [1] : vector<16x32xf32> to vector<16xf32>
    %334 = vector.shape_cast %333 : vector<16xf32> to vector<16x1xf32>
    %cst_85 = arith.constant 3.200000e+01 : f32
    %335 = vector.broadcast %cst_85 : f32 to vector<16x1xf32>
    %336 = arith.divf %334, %335 : vector<16x1xf32>
    %337 = vector.broadcast %329 : vector<16x1xf32> to vector<16x32xf32>
    %338 = arith.subf %323, %337 : vector<16x32xf32>
    %cst_86 = arith.constant 9.99999974E-6 : f32
    %339 = vector.broadcast %cst_86 : f32 to vector<16x1xf32>
    %340 = arith.addf %336, %339 : vector<16x1xf32>
    %341 = math.rsqrt %340 : vector<16x1xf32>
    %342 = vector.broadcast %341 : vector<16x1xf32> to vector<16x32xf32>
    %343 = arith.mulf %338, %342 : vector<16x32xf32>
    %344 = vector.broadcast %324 : vector<1x32xf32> to vector<16x32xf32>
    %345 = arith.mulf %343, %344 : vector<16x32xf32>
    %346 = vector.broadcast %325 : vector<1x32xf32> to vector<16x32xf32>
    %347 = arith.addf %345, %346 : vector<16x32xf32>
    %c0_87 = arith.constant 0 : index
    %c0_88 = arith.constant 0 : index
    %348 = vector.load %arg7[%c0_87, %c0_88] : memref<16x32xf32, #tpu.memory_space<vmem>>, vector<16x32xf32>
    tpu.vector_store %arg7[%c0_87, %c0_88], %347 {strides = array<i32>} : memref<16x32xf32, #tpu.memory_space<vmem>>, vector<16x32xf32>,
    return
  }
}

</mosaic_0001>

<llo_original>
// kernel: tpu_custom_call.1
$region0: #{tpu_custom_call.1}
  #allocation0 [shape = 'u32[]', space=smem, size = 0x4, offset = 0x4, fixed_abs, tag = 'smem constant byte address 0x4 - core index']
  #allocation1 [shape = 'u32[144,128]{1,0:T(1,128)}', space=vmem, size = 0x12000, scoped, tag = 'internal scratch']
  %s0 = inlined_call_operand.vmem [shape: f32[16,32], index: 0, kind: input, shape index: {}]
  %s1 = inlined_call_operand.vmem [shape: f32[16,32], index: 1, kind: input, shape index: {}]
  %s2 = inlined_call_operand.vmem [shape: f32[2,8,8], index: 2, kind: input, shape index: {}]
  %s3 = inlined_call_operand.vmem [shape: f32[2,8,8], index: 3, kind: input, shape index: {}]
  %s4 = inlined_call_operand.hbm [shape: f32[32,1152], index: 4, kind: input, shape index: {}]
  %s5 = inlined_call_operand.vmem [shape: f32[128,32], index: 5, kind: input, shape index: {}]
  %s6 = inlined_call_operand.vmem [shape: f32[16,128], index: 6, kind: input, shape index: {}]
  %s7 = inlined_call_operand.hbm [shape: f32[16,32], index: 7, kind: output, shape index: {}]
  %s8 = sld [smem:[#allocation0]]
  $region42: #{tpu_custom_call.1} parent=0
    _
  %s10 = ssub.s32 1, %s8
  %s11 = scalar_select 0, %s10, %s8
  $region1: #{tpu_custom_call.1} parent=0
    #allocation2 [shape = 'u8[147456]{0}', space=vmem, size = 0x24000, scoped, tag = 'input window, operand 4, single buffered']
    #allocation3 [shape = 's32[1]{0}', space=sflag, size = 0x4, scoped, tag = 'scoped memory for tpu_custom_call.1']
    #allocation4 [shape = 's32[1]{0}', space=sflag, size = 0x4, scoped, tag = 'scoped memory for tpu_custom_call.1']
    #allocation5 [shape = 'u8[8192]{0}', space=vmem, size = 0x2000, scoped, tag = 'output window, operand 0, single buffered']
    %12 = vsyncpa [#allocation3], 0
    %13 = vsyncpa [#allocation4], 0
    // Predicated region
    $region2: #{tpu_custom_call.1} parent=1 // pred_check
      _
    $region3: #{tpu_custom_call.1} parent=1 // pred_check_branch
      %15 = sbr.rel (0) target = $region5
    $region4: #{tpu_custom_call.1} parent=1 // pred_region
      _
    $region5: #{tpu_custom_call.1} parent=1 // pred_fallthru
      _
    // Predicated region
    $region6: #{tpu_custom_call.1} parent=1 // pred_check
      _
    $region7: #{tpu_custom_call.1} parent=1 // pred_check_branch
      %17 = sbr.rel (0) target = $region9
    $region8: #{tpu_custom_call.1} parent=1 // pred_region
      _
    $region9: #{tpu_custom_call.1} parent=1 // pred_fallthru
      _
    // Predicated region
    $region10: #{tpu_custom_call.1} parent=1 // pred_check
      _
    $region11: #{tpu_custom_call.1} parent=1 // pred_check_branch
      %19 = sbr.rel (0) target = $region13
    $region12: #{tpu_custom_call.1} parent=1 // pred_region
      _
    $region13: #{tpu_custom_call.1} parent=1 // pred_fallthru
      _
    // Predicated region
    $region14: #{tpu_custom_call.1} parent=1 // pred_check
      _
    $region15: #{tpu_custom_call.1} parent=1 // pred_check_branch
      %21 = sbr.rel (0) target = $region17
    $region16: #{tpu_custom_call.1} parent=1 // pred_region
      _
    $region17: #{tpu_custom_call.1} parent=1 // pred_fallthru
      _
    // Predicated region
    $region18: #{tpu_custom_call.1} parent=1 // pred_check
      _
    $region19: #{tpu_custom_call.1} parent=1 // pred_check_branch
      %23 = sbr.rel (0) target = $region21
    $region20: #{tpu_custom_call.1} parent=1 // pred_region
      %s25 = ssub.s32 4608, 4608
      %26 = vsyncadd [#allocation3], %s25
      %s27 = sshll.u32 [#allocation2], 4
      %s28 = int_to_ptr.vmem [resolvable:$true] %s27
      %33 = dma.hbm_to_vmem [thread:$0]  %s4, 4608, %s28, [#allocation3], 1152, 1152, 72
    $region21: #{tpu_custom_call.1} parent=1 // pred_fallthru
      _
    // Predicated region
    $region22: #{tpu_custom_call.1} parent=1 // pred_check
      _
    $region23: #{tpu_custom_call.1} parent=1 // pred_check_branch
      %35 = sbr.rel (0) target = $region25
    $region24: #{tpu_custom_call.1} parent=1 // pred_region
      _
    $region25: #{tpu_custom_call.1} parent=1 // pred_fallthru
      _
    // Predicated region
    $region26: #{tpu_custom_call.1} parent=1 // pred_check
      _
    $region27: #{tpu_custom_call.1} parent=1 // pred_check_branch
      %37 = sbr.rel (0) target = $region29
    $region28: #{tpu_custom_call.1} parent=1 // pred_region
      _
    $region29: #{tpu_custom_call.1} parent=1 // pred_fallthru
      _
    // Predicated region
    $region30: #{tpu_custom_call.1} parent=1 // pred_check
      _
    $region31: #{tpu_custom_call.1} parent=1 // pred_check_branch
      %39 = sbr.rel (0) target = $region33
    $region32: #{tpu_custom_call.1} parent=1 // pred_region
      %40 = dma.done [#allocation3], 4608
    $region33: #{tpu_custom_call.1} parent=1 // pred_fallthru
      _
    %v41 = vld [vmem:[%s0] sm:$0xff]
    %v42 = vld [vmem:[%s0 + $0x8] sm:$0xff]
    %v43 = vld [vmem:[%s1] sm:$0xff]
    %v44 = vld [vmem:[%s1 + $0x8] sm:$0xff]
    %v45 = vld [vmem:[%s2] sm:$0xff]
    %v46 = vld [vmem:[%s2 + $0x8] sm:$0xff]
    %v47 = vld [vmem:[%s3] sm:$0xff]
    %v48 = vld [vmem:[%s3 + $0x8] sm:$0xff]
    %v49 = vld [vmem:[#allocation2] sm:$0xff]
    %v50 = vld [vmem:[#allocation2 + $0x8] sm:$0xff]
    %v51 = vld [vmem:[#allocation2 + $0x10] sm:$0xff]
    %v52 = vld [vmem:[#allocation2 + $0x18] sm:$0xff]
    %v53 = vld [vmem:[#allocation2 + $0x20] sm:$0xff]
    %v54 = vld [vmem:[#allocation2 + $0x28] sm:$0xff]
    %v55 = vld [vmem:[#allocation2 + $0x30] sm:$0xff]
    %v56 = vld [vmem:[#allocation2 + $0x38] sm:$0xff]
    %v57 = vld [vmem:[#allocation2 + $0x40] sm:$0xff]
    %v58 = vld [vmem:[#allocation2 + $0x48] sm:$0xff]
    %v59 = vld [vmem:[#allocation2 + $0x50] sm:$0xff]
    %v60 = vld [vmem:[#allocation2 + $0x58] sm:$0xff]
    %v61 = vld [vmem:[#allocation2 + $0x60] sm:$0xff]
    %v62 = vld [vmem:[#allocation2 + $0x68] sm:$0xff]
    %v63 = vld [vmem:[#allocation2 + $0x70] sm:$0xff]
    %v64 = vld [vmem:[#allocation2 + $0x78] sm:$0xff]
    %v65 = vld [vmem:[#allocation2 + $0x80] sm:$0xff]
    %v66 = vld [vmem:[#allocation2 + $0x88] sm:$0xff]
    %v67 = vld [vmem:[#allocation2 + $0x90] sm:$0xff]
    %v68 = vld [vmem:[#allocation2 + $0x98] sm:$0xff]
    %v69 = vld [vmem:[#allocation2 + $0xa0] sm:$0xff]
    %v70 = vld [vmem:[#allocation2 + $0xa8] sm:$0xff]
    %v71 = vld [vmem:[#allocation2 + $0xb0] sm:$0xff]
    %v72 = vld [vmem:[#allocation2 + $0xb8] sm:$0xff]
    %v73 = vld [vmem:[#allocation2 + $0xc0] sm:$0xff]
    %v74 = vld [vmem:[#allocation2 + $0xc8] sm:$0xff]
    %v75 = vld [vmem:[#allocation2 + $0xd0] sm:$0xff]
    %v76 = vld [vmem:[#allocation2 + $0xd8] sm:$0xff]
    %v77 = vld [vmem:[#allocation2 + $0xe0] sm:$0xff]
    %v78 = vld [vmem:[#allocation2 + $0xe8] sm:$0xff]
    %v79 = vld [vmem:[#allocation2 + $0xf0] sm:$0xff]
    %v80 = vld [vmem:[#allocation2 + $0xf8] sm:$0xff]
    %v81 = vld [vmem:[#allocation2 + $0x100] sm:$0xff]
    %v82 = vld [vmem:[#allocation2 + $0x108] sm:$0xff]
    %v83 = vld [vmem:[#allocation2 + $0x110] sm:$0xff]
    %v84 = vld [vmem:[#allocation2 + $0x118] sm:$0xff]
    %v85 = vld [vmem:[%s5] sm:$0xff]
    %v86 = vld [vmem:[%s5 + $0x8] sm:$0xff]
    %v87 = vld [vmem:[%s5 + $0x10] sm:$0xff]
    %v88 = vld [vmem:[%s5 + $0x18] sm:$0xff]
    %v89 = vld [vmem:[%s5 + $0x20] sm:$0xff]
    %v90 = vld [vmem:[%s5 + $0x28] sm:$0xff]
    %v91 = vld [vmem:[%s5 + $0x30] sm:$0xff]
    %v92 = vld [vmem:[%s5 + $0x38] sm:$0xff]
    %v93 = vld [vmem:[%s5 + $0x40] sm:$0xff]
    %v94 = vld [vmem:[%s5 + $0x48] sm:$0xff]
    %v95 = vld [vmem:[%s5 + $0x50] sm:$0xff]
    %v96 = vld [vmem:[%s5 + $0x58] sm:$0xff]
    %v97 = vld [vmem:[%s5 + $0x60] sm:$0xff]
    %v98 = vld [vmem:[%s5 + $0x68] sm:$0xff]
    %v99 = vld [vmem:[%s5 + $0x70] sm:$0xff]
    %v100 = vld [vmem:[%s5 + $0x78] sm:$0xff]
    %v101 = vld [vmem:[%s6] sm:$0xff]
    %v102 = vld [vmem:[%s6 + $0x8] sm:$0xff]
    %v103 = vlaneseq
    %v104 = vand.u32 %v103, 127
    %v105 = vlaneseq
    %v106 = vshrl.u32 %v105, 7
    %v107 = vsub.s32 0, %v106
    %v108 = vrot.slane %v101, %v107
    %vm109 = vcmask 261120
    %v111 = vsel %vm109, %v41, 0
    %v114 = vsel %vm109, %v42, 0
    %116 = vmatprep.subr.mxu0 0.0
    %117 = vmatpush1.msra.mxu0 0.0
    %118 = vmatprep.subr.mxu0 0.0
    %119 = vmatpush1.msra.mxu0 0.0
    %120 = vmatprep.subr.mxu0 0.0
    %121 = vmatpush1.msra.mxu0 0.0
    %122 = vmatprep.subr.mxu0 0.0
    %123 = vmatpush1.msra.mxu0 0.0
    %124 = vmatprep.subr.mxu0 0.0
    %125 = vmatpush1.msra.mxu0 0.0
    %126 = vmatprep.subr.mxu0 0.0
    %127 = vmatpush1.msra.mxu0 0.0
    %128 = vmatprep.subr.mxu0 0.0
    %129 = vmatpush1.msra.mxu0 0.0
    %130 = vmatprep.subr.mxu0 0.0
    %131 = vmatpush1.msra.mxu0 0.0
    %132 = vmatprep.subr.mxu0 0.0
    %133 = vmatpush1.msra.mxu0 0.0
    %134 = vmatprep.subr.mxu0 0.0
    %135 = vmatpush1.msra.mxu0 0.0
    %136 = vmatprep.subr.mxu0 0.0
    %137 = vmatpush1.msra.mxu0 0.0
    %138 = vmatprep.subr.mxu0 0.0
    %139 = vmatpush1.msra.mxu0 0.0
    %140 = vmatprep.subr.mxu0 0.0
    %141 = vmatpush1.msra.mxu0 %v76
    %142 = vmatprep.subr.mxu0 0.0
    %143 = vmatpush1.msra.mxu0 %v67
    %144 = vmatprep.subr.mxu0 0.0
    %145 = vmatpush1.msra.mxu0 %v58
    %146 = vmatprep.subr.mxu0 0.0
    %147 = vmatpush1.msra.mxu0 %v49
    %148 = vmatprep.subr.mxu0 0.0
    %149 = vmatpush2.msra.mxu0 0.0
    %150 = vmatprep.subr.mxu0 0.0
    %151 = vmatpush2.msra.mxu0 0.0
    %152 = vmatprep.subr.mxu0 0.0
    %153 = vmatpush2.msra.mxu0 0.0
    %154 = vmatprep.subr.mxu0 0.0
    %155 = vmatpush2.msra.mxu0 0.0
    %156 = vmatprep.subr.mxu0 0.0
    %157 = vmatpush2.msra.mxu0 0.0
    %158 = vmatprep.subr.mxu0 0.0
    %159 = vmatpush2.msra.mxu0 0.0
    %160 = vmatprep.subr.mxu0 0.0
    %161 = vmatpush2.msra.mxu0 0.0
    %162 = vmatprep.subr.mxu0 0.0
    %163 = vmatpush2.msra.mxu0 0.0
    %164 = vmatprep.subr.mxu0 0.0
    %165 = vmatpush2.msra.mxu0 0.0
    %166 = vmatprep.subr.mxu0 0.0
    %167 = vmatpush2.msra.mxu0 0.0
    %168 = vmatprep.subr.mxu0 0.0
    %169 = vmatpush2.msra.mxu0 0.0
    %170 = vmatprep.subr.mxu0 0.0
    %171 = vmatpush2.msra.mxu0 0.0
    %172 = vmatprep.subr.mxu0 0.0
    %173 = vmatpush2.msra.mxu0 0.0
    %174 = vmatprep.subr.mxu0 0.0
    %175 = vmatpush2.msra.mxu0 0.0
    %176 = vmatprep.subr.mxu0 0.0
    %177 = vmatpush2.msra.mxu0 0.0
    %178 = vmatprep.subr.mxu0 0.0
    %179 = vmatpush2.msra.mxu0 0.0
    %180 = vmatprep.mubr.f32.mxu0 0.0
    %181 = vmatmul.mubr.f32.gmra.mxu0 %v111
    %v182 = vpop.f32.mrf.mxu0
    %v183 = vadd.f32 %v108, %v182
    %v184 = vpop.f32.mrf.mxu0
    %185 = vmatprep.mubr.f32.mxu0 0.0
    %186 = vmatmul.mubr.f32.gmra.mxu0 %v114
    %v187 = vpop.f32.mrf.mxu0
    %v188 = vadd.f32 %v108, %v187
    %v189 = vpop.f32.mrf.mxu0
    %190 = vdwg.mxu0
    %v191 = vmul.f32 %v183, 0.35355338
    %v192 = vmul.f32 %v188, 0.35355338
    %v193 = vlaneseq
    %v194 = vshrl.u32 %v193, 7
    %v195 = vsub.s32 1, %v194
    %v196 = vrot.slane %v101, %v195
    %197 = vmatprep.subr.mxu0 0.0
    %198 = vmatpush1.msra.mxu0 0.0
    %199 = vmatprep.subr.mxu0 0.0
    %200 = vmatpush1.msra.mxu0 0.0
    %201 = vmatprep.subr.mxu0 0.0
    %202 = vmatpush1.msra.mxu0 0.0
    %203 = vmatprep.subr.mxu0 0.0
    %204 = vmatpush1.msra.mxu0 0.0
    %205 = vmatprep.subr.mxu0 0.0
    %206 = vmatpush1.msra.mxu0 0.0
    %207 = vmatprep.subr.mxu0 0.0
    %208 = vmatpush1.msra.mxu0 0.0
    %209 = vmatprep.subr.mxu0 0.0
    %210 = vmatpush1.msra.mxu0 0.0
    %211 = vmatprep.subr.mxu0 0.0
    %212 = vmatpush1.msra.mxu0 0.0
    %213 = vmatprep.subr.mxu0 0.0
    %214 = vmatpush1.msra.mxu0 0.0
    %215 = vmatprep.subr.mxu0 0.0
    %216 = vmatpush1.msra.mxu0 0.0
    %217 = vmatprep.subr.mxu0 0.0
    %218 = vmatpush1.msra.mxu0 0.0
    %219 = vmatprep.subr.mxu0 0.0
    %220 = vmatpush1.msra.mxu0 0.0
    %221 = vmatprep.subr.mxu0 0.0
    %222 = vmatpush1.msra.mxu0 %v77
    %223 = vmatprep.subr.mxu0 0.0
    %224 = vmatpush1.msra.mxu0 %v68
    %225 = vmatprep.subr.mxu0 0.0
    %226 = vmatpush1.msra.mxu0 %v59
    %227 = vmatprep.subr.mxu0 0.0
    %228 = vmatpush1.msra.mxu0 %v50
    %229 = vmatprep.subr.mxu0 0.0
    %230 = vmatpush2.msra.mxu0 0.0
    %231 = vmatprep.subr.mxu0 0.0
    %232 = vmatpush2.msra.mxu0 0.0
    %233 = vmatprep.subr.mxu0 0.0
    %234 = vmatpush2.msra.mxu0 0.0
    %235 = vmatprep.subr.mxu0 0.0
    %236 = vmatpush2.msra.mxu0 0.0
    %237 = vmatprep.subr.mxu0 0.0
    %238 = vmatpush2.msra.mxu0 0.0
    %239 = vmatprep.subr.mxu0 0.0
    %240 = vmatpush2.msra.mxu0 0.0
    %241 = vmatprep.subr.mxu0 0.0
    %242 = vmatpush2.msra.mxu0 0.0
    %243 = vmatprep.subr.mxu0 0.0
    %244 = vmatpush2.msra.mxu0 0.0
    %245 = vmatprep.subr.mxu0 0.0
    %246 = vmatpush2.msra.mxu0 0.0
    %247 = vmatprep.subr.mxu0 0.0
    %248 = vmatpush2.msra.mxu0 0.0
    %249 = vmatprep.subr.mxu0 0.0
    %250 = vmatpush2.msra.mxu0 0.0
    %251 = vmatprep.subr.mxu0 0.0
    %252 = vmatpush2.msra.mxu0 0.0
    %253 = vmatprep.subr.mxu0 0.0
    %254 = vmatpush2.msra.mxu0 0.0
    %255 = vmatprep.subr.mxu0 0.0
    %256 = vmatpush2.msra.mxu0 0.0
    %257 = vmatprep.subr.mxu0 0.0
    %258 = vmatpush2.msra.mxu0 0.0
    %259 = vmatprep.subr.mxu0 0.0
    %260 = vmatpush2.msra.mxu0 0.0
    %261 = vmatprep.mubr.f32.mxu0 0.0
    %262 = vmatmul.mubr.f32.gmra.mxu0 %v111
    %v263 = vpop.f32.mrf.mxu0
    %v264 = vadd.f32 %v196, %v263
    %v265 = vpop.f32.mrf.mxu0
    %266 = vmatprep.mubr.f32.mxu0 0.0
    %267 = vmatmul.mubr.f32.gmra.mxu0 %v114
    %v268 = vpop.f32.mrf.mxu0
    %v269 = vadd.f32 %v196, %v268
    %v270 = vpop.f32.mrf.mxu0
    %271 = vdwg.mxu0
    %v272 = vlaneseq
    %v273 = vshrl.u32 %v272, 7
    %v274 = vsub.s32 2, %v273
    %v275 = vrot.slane %v101, %v274
    %276 = vmatprep.subr.mxu0 0.0
    %277 = vmatpush1.msra.mxu0 0.0
    %278 = vmatprep.subr.mxu0 0.0
    %279 = vmatpush1.msra.mxu0 0.0
    %280 = vmatprep.subr.mxu0 0.0
    %281 = vmatpush1.msra.mxu0 0.0
    %282 = vmatprep.subr.mxu0 0.0
    %283 = vmatpush1.msra.mxu0 0.0
    %284 = vmatprep.subr.mxu0 0.0
    %285 = vmatpush1.msra.mxu0 0.0
    %286 = vmatprep.subr.mxu0 0.0
    %287 = vmatpush1.msra.mxu0 0.0
    %288 = vmatprep.subr.mxu0 0.0
    %289 = vmatpush1.msra.mxu0 0.0
    %290 = vmatprep.subr.mxu0 0.0
    %291 = vmatpush1.msra.mxu0 0.0
    %292 = vmatprep.subr.mxu0 0.0
    %293 = vmatpush1.msra.mxu0 0.0
    %294 = vmatprep.subr.mxu0 0.0
    %295 = vmatpush1.msra.mxu0 0.0
    %296 = vmatprep.subr.mxu0 0.0
    %297 = vmatpush1.msra.mxu0 0.0
    %298 = vmatprep.subr.mxu0 0.0
    %299 = vmatpush1.msra.mxu0 0.0
    %300 = vmatprep.subr.mxu0 0.0
    %301 = vmatpush1.msra.mxu0 %v78
    %302 = vmatprep.subr.mxu0 0.0
    %303 = vmatpush1.msra.mxu0 %v69
    %304 = vmatprep.subr.mxu0 0.0
    %305 = vmatpush1.msra.mxu0 %v60
    %306 = vmatprep.subr.mxu0 0.0
    %307 = vmatpush1.msra.mxu0 %v51
    %308 = vmatprep.subr.mxu0 0.0
    %309 = vmatpush2.msra.mxu0 0.0
    %310 = vmatprep.subr.mxu0 0.0
    %311 = vmatpush2.msra.mxu0 0.0
    %312 = vmatprep.subr.mxu0 0.0
    %313 = vmatpush2.msra.mxu0 0.0
    %314 = vmatprep.subr.mxu0 0.0
    %315 = vmatpush2.msra.mxu0 0.0
    %316 = vmatprep.subr.mxu0 0.0
    %317 = vmatpush2.msra.mxu0 0.0
    %318 = vmatprep.subr.mxu0 0.0
    %319 = vmatpush2.msra.mxu0 0.0
    %320 = vmatprep.subr.mxu0 0.0
    %321 = vmatpush2.msra.mxu0 0.0
    %322 = vmatprep.subr.mxu0 0.0
    %323 = vmatpush2.msra.mxu0 0.0
    %324 = vmatprep.subr.mxu0 0.0
    %325 = vmatpush2.msra.mxu0 0.0
    %326 = vmatprep.subr.mxu0 0.0
    %327 = vmatpush2.msra.mxu0 0.0
    %328 = vmatprep.subr.mxu0 0.0
    %329 = vmatpush2.msra.mxu0 0.0
    %330 = vmatprep.subr.mxu0 0.0
    %331 = vmatpush2.msra.mxu0 0.0
    %332 = vmatprep.subr.mxu0 0.0
    %333 = vmatpush2.msra.mxu0 0.0
    %334 = vmatprep.subr.mxu0 0.0
    %335 = vmatpush2.msra.mxu0 0.0
    %336 = vmatprep.subr.mxu0 0.0
    %337 = vmatpush2.msra.mxu0 0.0
    %338 = vmatprep.subr.mxu0 0.0
    %339 = vmatpush2.msra.mxu0 0.0
    %340 = vmatprep.mubr.f32.mxu0 0.0
    %341 = vmatmul.mubr.f32.gmra.mxu0 %v111
    %v342 = vpop.f32.mrf.mxu0
    %v343 = vadd.f32 %v275, %v342
    %v344 = vpop.f32.mrf.mxu0
    %345 = vmatprep.mubr.f32.mxu0 0.0
    %346 = vmatmul.mubr.f32.gmra.mxu0 %v114
    %v347 = vpop.f32.mrf.mxu0
    %v348 = vadd.f32 %v275, %v347
    %v349 = vpop.f32.mrf.mxu0
    %350 = vdwg.mxu0
    %vm351 = vcmp.ge.s32.totalorder %v104, 0
    %vm352 = vcmp.lt.s32.totalorder %v104, 8
    %vm353 = vmand %vm351, %vm352
    %v354 = vsel %vm353, 1, 0
    %v355 = vcvt.s32.f32 %v354
    %v356 = vmul.f32 %v191, %v355
    %v357 = vmul.f32 %v192, %v355
    %v359 = vsel %vm109, %v356, 0
    %v362 = vsel %vm109, %v264, 0
    %364 = vmatprep.subr.mxu0 0.0
    %365 = vmatpush1.xpose.msra.mxu0 0.0
    %366 = vmatprep.subr.mxu0 0.0
    %367 = vmatpush1.xpose.msra.mxu0 0.0
    %368 = vmatprep.subr.mxu0 0.0
    %369 = vmatpush1.xpose.msra.mxu0 0.0
    %370 = vmatprep.subr.mxu0 0.0
    %371 = vmatpush1.xpose.msra.mxu0 0.0
    %372 = vmatprep.subr.mxu0 0.0
    %373 = vmatpush1.xpose.msra.mxu0 0.0
    %374 = vmatprep.subr.mxu0 0.0
    %375 = vmatpush1.xpose.msra.mxu0 0.0
    %376 = vmatprep.subr.mxu0 0.0
    %377 = vmatpush1.xpose.msra.mxu0 0.0
    %378 = vmatprep.subr.mxu0 0.0
    %379 = vmatpush1.xpose.msra.mxu0 0.0
    %380 = vmatprep.subr.mxu0 0.0
    %381 = vmatpush1.xpose.msra.mxu0 0.0
    %382 = vmatprep.subr.mxu0 0.0
    %383 = vmatpush1.xpose.msra.mxu0 0.0
    %384 = vmatprep.subr.mxu0 0.0
    %385 = vmatpush1.xpose.msra.mxu0 0.0
    %386 = vmatprep.subr.mxu0 0.0
    %387 = vmatpush1.xpose.msra.mxu0 0.0
    %388 = vmatprep.subr.mxu0 0.0
    %389 = vmatpush1.xpose.msra.mxu0 0.0
    %390 = vmatprep.subr.mxu0 0.0
    %391 = vmatpush1.xpose.msra.mxu0 0.0
    %392 = vmatprep.subr.mxu0 0.0
    %393 = vmatpush1.xpose.msra.mxu0 0.0
    %394 = vmatprep.subr.mxu0 0.0
    %395 = vmatpush1.xpose.msra.mxu0 %v362
    %396 = vmatprep.subr.mxu0 0.0
    %397 = vmatpush2.xpose.msra.mxu0 0.0
    %398 = vmatprep.subr.mxu0 0.0
    %399 = vmatpush2.xpose.msra.mxu0 0.0
    %400 = vmatprep.subr.mxu0 0.0
    %401 = vmatpush2.xpose.msra.mxu0 0.0
    %402 = vmatprep.subr.mxu0 0.0
    %403 = vmatpush2.xpose.msra.mxu0 0.0
    %404 = vmatprep.subr.mxu0 0.0
    %405 = vmatpush2.xpose.msra.mxu0 0.0
    %406 = vmatprep.subr.mxu0 0.0
    %407 = vmatpush2.xpose.msra.mxu0 0.0
    %408 = vmatprep.subr.mxu0 0.0
    %409 = vmatpush2.xpose.msra.mxu0 0.0
    %410 = vmatprep.subr.mxu0 0.0
    %411 = vmatpush2.xpose.msra.mxu0 0.0
    %412 = vmatprep.subr.mxu0 0.0
    %413 = vmatpush2.xpose.msra.mxu0 0.0
    %414 = vmatprep.subr.mxu0 0.0
    %415 = vmatpush2.xpose.msra.mxu0 0.0
    %416 = vmatprep.subr.mxu0 0.0
    %417 = vmatpush2.xpose.msra.mxu0 0.0
    %418 = vmatprep.subr.mxu0 0.0
    %419 = vmatpush2.xpose.msra.mxu0 0.0
    %420 = vmatprep.subr.mxu0 0.0
    %421 = vmatpush2.xpose.msra.mxu0 0.0
    %422 = vmatprep.subr.mxu0 0.0
    %423 = vmatpush2.xpose.msra.mxu0 0.0
    %424 = vmatprep.subr.mxu0 0.0
    %425 = vmatpush2.xpose.msra.mxu0 0.0
    %426 = vmatprep.subr.mxu0 0.0
    %427 = vmatpush2.xpose.msra.mxu0 0.0
    %428 = vmatprep.mubr.f32.mxu0 0.0
    %429 = vmatmul.mubr.f32.gmra.mxu0 %v359
    %v430 = vpop.f32.mrf.mxu0
    %v431 = vadd.f32 %v45, %v430
    %v432 = vpop.f32.mrf.mxu0
    %433 = vdwg.mxu0
    %v435 = vsel %vm109, %v357, 0
    %v438 = vsel %vm109, %v269, 0
    %440 = vmatprep.subr.mxu0 0.0
    %441 = vmatpush1.xpose.msra.mxu0 0.0
    %442 = vmatprep.subr.mxu0 0.0
    %443 = vmatpush1.xpose.msra.mxu0 0.0
    %444 = vmatprep.subr.mxu0 0.0
    %445 = vmatpush1.xpose.msra.mxu0 0.0
    %446 = vmatprep.subr.mxu0 0.0
    %447 = vmatpush1.xpose.msra.mxu0 0.0
    %448 = vmatprep.subr.mxu0 0.0
    %449 = vmatpush1.xpose.msra.mxu0 0.0
    %450 = vmatprep.subr.mxu0 0.0
    %451 = vmatpush1.xpose.msra.mxu0 0.0
    %452 = vmatprep.subr.mxu0 0.0
    %453 = vmatpush1.xpose.msra.mxu0 0.0
    %454 = vmatprep.subr.mxu0 0.0
    %455 = vmatpush1.xpose.msra.mxu0 0.0
    %456 = vmatprep.subr.mxu0 0.0
    %457 = vmatpush1.xpose.msra.mxu0 0.0
    %458 = vmatprep.subr.mxu0 0.0
    %459 = vmatpush1.xpose.msra.mxu0 0.0
    %460 = vmatprep.subr.mxu0 0.0
    %461 = vmatpush1.xpose.msra.mxu0 0.0
    %462 = vmatprep.subr.mxu0 0.0
    %463 = vmatpush1.xpose.msra.mxu0 0.0
    %464 = vmatprep.subr.mxu0 0.0
    %465 = vmatpush1.xpose.msra.mxu0 0.0
    %466 = vmatprep.subr.mxu0 0.0
    %467 = vmatpush1.xpose.msra.mxu0 0.0
    %468 = vmatprep.subr.mxu0 0.0
    %469 = vmatpush1.xpose.msra.mxu0 0.0
    %470 = vmatprep.subr.mxu0 0.0
    %471 = vmatpush1.xpose.msra.mxu0 %v438
    %472 = vmatprep.subr.mxu0 0.0
    %473 = vmatpush2.xpose.msra.mxu0 0.0
    %474 = vmatprep.subr.mxu0 0.0
    %475 = vmatpush2.xpose.msra.mxu0 0.0
    %476 = vmatprep.subr.mxu0 0.0
    %477 = vmatpush2.xpose.msra.mxu0 0.0
    %478 = vmatprep.subr.mxu0 0.0
    %479 = vmatpush2.xpose.msra.mxu0 0.0
    %480 = vmatprep.subr.mxu0 0.0
    %481 = vmatpush2.xpose.msra.mxu0 0.0
    %482 = vmatprep.subr.mxu0 0.0
    %483 = vmatpush2.xpose.msra.mxu0 0.0
    %484 = vmatprep.subr.mxu0 0.0
    %485 = vmatpush2.xpose.msra.mxu0 0.0
    %486 = vmatprep.subr.mxu0 0.0
    %487 = vmatpush2.xpose.msra.mxu0 0.0
    %488 = vmatprep.subr.mxu0 0.0
    %489 = vmatpush2.xpose.msra.mxu0 0.0
    %490 = vmatprep.subr.mxu0 0.0
    %491 = vmatpush2.xpose.msra.mxu0 0.0
    %492 = vmatprep.subr.mxu0 0.0
    %493 = vmatpush2.xpose.msra.mxu0 0.0
    %494 = vmatprep.subr.mxu0 0.0
    %495 = vmatpush2.xpose.msra.mxu0 0.0
    %496 = vmatprep.subr.mxu0 0.0
    %497 = vmatpush2.xpose.msra.mxu0 0.0
    %498 = vmatprep.subr.mxu0 0.0
    %499 = vmatpush2.xpose.msra.mxu0 0.0
    %500 = vmatprep.subr.mxu0 0.0
    %501 = vmatpush2.xpose.msra.mxu0 0.0
    %502 = vmatprep.subr.mxu0 0.0
    %503 = vmatpush2.xpose.msra.mxu0 0.0
    %504 = vmatprep.mubr.f32.mxu0 0.0
    %505 = vmatmul.mubr.f32.gmra.mxu0 %v435
    %v506 = vpop.f32.mrf.mxu0
    %v507 = vadd.f32 %v46, %v506
    %v508 = vpop.f32.mrf.mxu0
    %509 = vdwg.mxu0
    %vm510 = vcmask 64512
    %v511 = vsel %vm510, %v431, -inf
    %512 = vmax.xlane.f32.xlu0 %v511
    %v513 = vpop.xlane.xlu0 %512
    %v514 = vsel %vm510, %v507, -inf
    %515 = vmax.xlane.f32.xlu0 %v514
    %v516 = vpop.xlane.xlu0 %515
    %v517 = vsub.f32 %v431, %v513
    %v518 = vsub.f32 %v507, %v516
    %v519 = vmul.f32 %v517, 1.442695
    %v520 = vpow.pop %v519
    %v521 = vmul.f32 %v518, 1.442695
    %v522 = vpow.pop %v521
    %v523 = vsel %vm510, %v520, 0.0
    %524 = vadd.xlane.f32.xlu0 %v523
    %v525 = vpop.xlane.xlu0 %524
    %v526 = vsel %vm510, %v522, 0.0
    %527 = vadd.xlane.f32.xlu0 %v526
    %v528 = vpop.xlane.xlu0 %527
    %v529 = vrcp.pop %v525
    %v530 = vrcp.pop %v528
    %v531 = vmul.f32 %v520, %v529
    %v532 = vmul.f32 %v522, %v530
    %v533 = vmul.f32 %v343, %v355
    %v534 = vmul.f32 %v348, %v355
    %vm535 = vcmp.ge.s32.totalorder %v104, 8
    %vm536 = vcmp.lt.s32.totalorder %v104, 16
    %vm537 = vmand %vm535, %vm536
    %v538 = vsel %vm537, 1, 0
    %v539 = vcvt.s32.f32 %v538
    %v540 = vmul.f32 %v191, %v539
    %v541 = vmul.f32 %v192, %v539
    %v543 = vsel %vm109, %v540, 0
    %545 = vmatprep.subr.mxu0 0.0
    %546 = vmatpush1.xpose.msra.mxu0 0.0
    %547 = vmatprep.subr.mxu0 0.0
    %548 = vmatpush1.xpose.msra.mxu0 0.0
    %549 = vmatprep.subr.mxu0 0.0
    %550 = vmatpush1.xpose.msra.mxu0 0.0
    %551 = vmatprep.subr.mxu0 0.0
    %552 = vmatpush1.xpose.msra.mxu0 0.0
    %553 = vmatprep.subr.mxu0 0.0
    %554 = vmatpush1.xpose.msra.mxu0 0.0
    %555 = vmatprep.subr.mxu0 0.0
    %556 = vmatpush1.xpose.msra.mxu0 0.0
    %557 = vmatprep.subr.mxu0 0.0
    %558 = vmatpush1.xpose.msra.mxu0 0.0
    %559 = vmatprep.subr.mxu0 0.0
    %560 = vmatpush1.xpose.msra.mxu0 0.0
    %561 = vmatprep.subr.mxu0 0.0
    %562 = vmatpush1.xpose.msra.mxu0 0.0
    %563 = vmatprep.subr.mxu0 0.0
    %564 = vmatpush1.xpose.msra.mxu0 0.0
    %565 = vmatprep.subr.mxu0 0.0
    %566 = vmatpush1.xpose.msra.mxu0 0.0
    %567 = vmatprep.subr.mxu0 0.0
    %568 = vmatpush1.xpose.msra.mxu0 0.0
    %569 = vmatprep.subr.mxu0 0.0
    %570 = vmatpush1.xpose.msra.mxu0 0.0
    %571 = vmatprep.subr.mxu0 0.0
    %572 = vmatpush1.xpose.msra.mxu0 0.0
    %573 = vmatprep.subr.mxu0 0.0
    %574 = vmatpush1.xpose.msra.mxu0 0.0
    %575 = vmatprep.subr.mxu0 0.0
    %576 = vmatpush1.xpose.msra.mxu0 %v362
    %577 = vmatprep.subr.mxu0 0.0
    %578 = vmatpush2.xpose.msra.mxu0 0.0
    %579 = vmatprep.subr.mxu0 0.0
    %580 = vmatpush2.xpose.msra.mxu0 0.0
    %581 = vmatprep.subr.mxu0 0.0
    %582 = vmatpush2.xpose.msra.mxu0 0.0
    %583 = vmatprep.subr.mxu0 0.0
    %584 = vmatpush2.xpose.msra.mxu0 0.0
    %585 = vmatprep.subr.mxu0 0.0
    %586 = vmatpush2.xpose.msra.mxu0 0.0
    %587 = vmatprep.subr.mxu0 0.0
    %588 = vmatpush2.xpose.msra.mxu0 0.0
    %589 = vmatprep.subr.mxu0 0.0
    %590 = vmatpush2.xpose.msra.mxu0 0.0
    %591 = vmatprep.subr.mxu0 0.0
    %592 = vmatpush2.xpose.msra.mxu0 0.0
    %593 = vmatprep.subr.mxu0 0.0
    %594 = vmatpush2.xpose.msra.mxu0 0.0
    %595 = vmatprep.subr.mxu0 0.0
    %596 = vmatpush2.xpose.msra.mxu0 0.0
    %597 = vmatprep.subr.mxu0 0.0
    %598 = vmatpush2.xpose.msra.mxu0 0.0
    %599 = vmatprep.subr.mxu0 0.0
    %600 = vmatpush2.xpose.msra.mxu0 0.0
    %601 = vmatprep.subr.mxu0 0.0
    %602 = vmatpush2.xpose.msra.mxu0 0.0
    %603 = vmatprep.subr.mxu0 0.0
    %604 = vmatpush2.xpose.msra.mxu0 0.0
    %605 = vmatprep.subr.mxu0 0.0
    %606 = vmatpush2.xpose.msra.mxu0 0.0
    %607 = vmatprep.subr.mxu0 0.0
    %608 = vmatpush2.xpose.msra.mxu0 0.0
    %609 = vmatprep.mubr.f32.mxu0 0.0
    %610 = vmatmul.mubr.f32.gmra.mxu0 %v543
    %v611 = vpop.f32.mrf.mxu0
    %v612 = vadd.f32 %v45, %v611
    %v613 = vpop.f32.mrf.mxu0
    %614 = vdwg.mxu0
    %v616 = vsel %vm109, %v541, 0
    %618 = vmatprep.subr.mxu0 0.0
    %619 = vmatpush1.xpose.msra.mxu0 0.0
    %620 = vmatprep.subr.mxu0 0.0
    %621 = vmatpush1.xpose.msra.mxu0 0.0
    %622 = vmatprep.subr.mxu0 0.0
    %623 = vmatpush1.xpose.msra.mxu0 0.0
    %624 = vmatprep.subr.mxu0 0.0
    %625 = vmatpush1.xpose.msra.mxu0 0.0
    %626 = vmatprep.subr.mxu0 0.0
    %627 = vmatpush1.xpose.msra.mxu0 0.0
    %628 = vmatprep.subr.mxu0 0.0
    %629 = vmatpush1.xpose.msra.mxu0 0.0
    %630 = vmatprep.subr.mxu0 0.0
    %631 = vmatpush1.xpose.msra.mxu0 0.0
    %632 = vmatprep.subr.mxu0 0.0
    %633 = vmatpush1.xpose.msra.mxu0 0.0
    %634 = vmatprep.subr.mxu0 0.0
    %635 = vmatpush1.xpose.msra.mxu0 0.0
    %636 = vmatprep.subr.mxu0 0.0
    %637 = vmatpush1.xpose.msra.mxu0 0.0
    %638 = vmatprep.subr.mxu0 0.0
    %639 = vmatpush1.xpose.msra.mxu0 0.0
    %640 = vmatprep.subr.mxu0 0.0
    %641 = vmatpush1.xpose.msra.mxu0 0.0
    %642 = vmatprep.subr.mxu0 0.0
    %643 = vmatpush1.xpose.msra.mxu0 0.0
    %644 = vmatprep.subr.mxu0 0.0
    %645 = vmatpush1.xpose.msra.mxu0 0.0
    %646 = vmatprep.subr.mxu0 0.0
    %647 = vmatpush1.xpose.msra.mxu0 0.0
    %648 = vmatprep.subr.mxu0 0.0
    %649 = vmatpush1.xpose.msra.mxu0 %v438
    %650 = vmatprep.subr.mxu0 0.0
    %651 = vmatpush2.xpose.msra.mxu0 0.0
    %652 = vmatprep.subr.mxu0 0.0
    %653 = vmatpush2.xpose.msra.mxu0 0.0
    %654 = vmatprep.subr.mxu0 0.0
    %655 = vmatpush2.xpose.msra.mxu0 0.0
    %656 = vmatprep.subr.mxu0 0.0
    %657 = vmatpush2.xpose.msra.mxu0 0.0
    %658 = vmatprep.subr.mxu0 0.0
    %659 = vmatpush2.xpose.msra.mxu0 0.0
    %660 = vmatprep.subr.mxu0 0.0
    %661 = vmatpush2.xpose.msra.mxu0 0.0
    %662 = vmatprep.subr.mxu0 0.0
    %663 = vmatpush2.xpose.msra.mxu0 0.0
    %664 = vmatprep.subr.mxu0 0.0
    %665 = vmatpush2.xpose.msra.mxu0 0.0
    %666 = vmatprep.subr.mxu0 0.0
    %667 = vmatpush2.xpose.msra.mxu0 0.0
    %668 = vmatprep.subr.mxu0 0.0
    %669 = vmatpush2.xpose.msra.mxu0 0.0
    %670 = vmatprep.subr.mxu0 0.0
    %671 = vmatpush2.xpose.msra.mxu0 0.0
    %672 = vmatprep.subr.mxu0 0.0
    %673 = vmatpush2.xpose.msra.mxu0 0.0
    %674 = vmatprep.subr.mxu0 0.0
    %675 = vmatpush2.xpose.msra.mxu0 0.0
    %676 = vmatprep.subr.mxu0 0.0
    %677 = vmatpush2.xpose.msra.mxu0 0.0
    %678 = vmatprep.subr.mxu0 0.0
    %679 = vmatpush2.xpose.msra.mxu0 0.0
    %680 = vmatprep.subr.mxu0 0.0
    %681 = vmatpush2.xpose.msra.mxu0 0.0
    %682 = vmatprep.mubr.f32.mxu0 0.0
    %683 = vmatmul.mubr.f32.gmra.mxu0 %v616
    %v684 = vpop.f32.mrf.mxu0
    %v685 = vadd.f32 %v46, %v684
    %v686 = vpop.f32.mrf.mxu0
    %687 = vdwg.mxu0
    %v688 = vsel %vm510, %v612, -inf
    %689 = vmax.xlane.f32.xlu0 %v688
    %v690 = vpop.xlane.xlu0 %689
    %v691 = vsel %vm510, %v685, -inf
    %692 = vmax.xlane.f32.xlu0 %v691
    %v693 = vpop.xlane.xlu0 %692
    %v694 = vsub.f32 %v612, %v690
    %v695 = vsub.f32 %v685, %v693
    %v696 = vmul.f32 %v694, 1.442695
    %v697 = vpow.pop %v696
    %v698 = vmul.f32 %v695, 1.442695
    %v699 = vpow.pop %v698
    %v700 = vsel %vm510, %v697, 0.0
    %701 = vadd.xlane.f32.xlu0 %v700
    %v702 = vpop.xlane.xlu0 %701
    %v703 = vsel %vm510, %v699, 0.0
    %704 = vadd.xlane.f32.xlu0 %v703
    %v705 = vpop.xlane.xlu0 %704
    %v706 = vrcp.pop %v702
    %v707 = vrcp.pop %v705
    %v708 = vmul.f32 %v697, %v706
    %v709 = vmul.f32 %v699, %v707
    %v710 = vmul.f32 %v343, %v539
    %v711 = vmul.f32 %v348, %v539
    %v713 = vsel %vm510, %v708, 0
    %715 = vmatprep.subr.mxu0 0.0
    %716 = vmatpush1.msra.mxu0 0.0
    %717 = vmatprep.subr.mxu0 0.0
    %718 = vmatpush1.msra.mxu0 0.0
    %719 = vmatprep.subr.mxu0 0.0
    %720 = vmatpush1.msra.mxu0 0.0
    %721 = vmatprep.subr.mxu0 0.0
    %722 = vmatpush1.msra.mxu0 0.0
    %723 = vmatprep.subr.mxu0 0.0
    %724 = vmatpush1.msra.mxu0 0.0
    %725 = vmatprep.subr.mxu0 0.0
    %726 = vmatpush1.msra.mxu0 0.0
    %727 = vmatprep.subr.mxu0 0.0
    %728 = vmatpush1.msra.mxu0 0.0
    %729 = vmatprep.subr.mxu0 0.0
    %730 = vmatpush1.msra.mxu0 0.0
    %731 = vmatprep.subr.mxu0 0.0
    %732 = vmatpush1.msra.mxu0 0.0
    %733 = vmatprep.subr.mxu0 0.0
    %734 = vmatpush1.msra.mxu0 0.0
    %735 = vmatprep.subr.mxu0 0.0
    %736 = vmatpush1.msra.mxu0 0.0
    %737 = vmatprep.subr.mxu0 0.0
    %738 = vmatpush1.msra.mxu0 0.0
    %739 = vmatprep.subr.mxu0 0.0
    %740 = vmatpush1.msra.mxu0 0.0
    %741 = vmatprep.subr.mxu0 0.0
    %742 = vmatpush1.msra.mxu0 0.0
    %743 = vmatprep.subr.mxu0 0.0
    %744 = vmatpush1.msra.mxu0 0.0
    %745 = vmatprep.subr.mxu0 0.0
    %746 = vmatpush1.msra.mxu0 %v710
    %747 = vmatprep.subr.mxu0 0.0
    %748 = vmatpush2.msra.mxu0 0.0
    %749 = vmatprep.subr.mxu0 0.0
    %750 = vmatpush2.msra.mxu0 0.0
    %751 = vmatprep.subr.mxu0 0.0
    %752 = vmatpush2.msra.mxu0 0.0
    %753 = vmatprep.subr.mxu0 0.0
    %754 = vmatpush2.msra.mxu0 0.0
    %755 = vmatprep.subr.mxu0 0.0
    %756 = vmatpush2.msra.mxu0 0.0
    %757 = vmatprep.subr.mxu0 0.0
    %758 = vmatpush2.msra.mxu0 0.0
    %759 = vmatprep.subr.mxu0 0.0
    %760 = vmatpush2.msra.mxu0 0.0
    %761 = vmatprep.subr.mxu0 0.0
    %762 = vmatpush2.msra.mxu0 0.0
    %763 = vmatprep.subr.mxu0 0.0
    %764 = vmatpush2.msra.mxu0 0.0
    %765 = vmatprep.subr.mxu0 0.0
    %766 = vmatpush2.msra.mxu0 0.0
    %767 = vmatprep.subr.mxu0 0.0
    %768 = vmatpush2.msra.mxu0 0.0
    %769 = vmatprep.subr.mxu0 0.0
    %770 = vmatpush2.msra.mxu0 0.0
    %771 = vmatprep.subr.mxu0 0.0
    %772 = vmatpush2.msra.mxu0 0.0
    %773 = vmatprep.subr.mxu0 0.0
    %774 = vmatpush2.msra.mxu0 0.0
    %775 = vmatprep.subr.mxu0 0.0
    %776 = vmatpush2.msra.mxu0 0.0
    %777 = vmatprep.subr.mxu0 0.0
    %778 = vmatpush2.msra.mxu0 0.0
    %779 = vmatprep.mubr.f32.mxu0 0.0
    %780 = vmatmul.mubr.f32.gmra.mxu0 %v713
    %v781 = vpop.f32.mrf.mxu0
    %v782 = vadd.f32 0.0, %v781
    %v783 = vpop.f32.mrf.mxu0
    %784 = vdwg.mxu0
    %v786 = vsel %vm510, %v709, 0
    %788 = vmatprep.subr.mxu0 0.0
    %789 = vmatpush1.msra.mxu0 0.0
    %790 = vmatprep.subr.mxu0 0.0
    %791 = vmatpush1.msra.mxu0 0.0
    %792 = vmatprep.subr.mxu0 0.0
    %793 = vmatpush1.msra.mxu0 0.0
    %794 = vmatprep.subr.mxu0 0.0
    %795 = vmatpush1.msra.mxu0 0.0
    %796 = vmatprep.subr.mxu0 0.0
    %797 = vmatpush1.msra.mxu0 0.0
    %798 = vmatprep.subr.mxu0 0.0
    %799 = vmatpush1.msra.mxu0 0.0
    %800 = vmatprep.subr.mxu0 0.0
    %801 = vmatpush1.msra.mxu0 0.0
    %802 = vmatprep.subr.mxu0 0.0
    %803 = vmatpush1.msra.mxu0 0.0
    %804 = vmatprep.subr.mxu0 0.0
    %805 = vmatpush1.msra.mxu0 0.0
    %806 = vmatprep.subr.mxu0 0.0
    %807 = vmatpush1.msra.mxu0 0.0
    %808 = vmatprep.subr.mxu0 0.0
    %809 = vmatpush1.msra.mxu0 0.0
    %810 = vmatprep.subr.mxu0 0.0
    %811 = vmatpush1.msra.mxu0 0.0
    %812 = vmatprep.subr.mxu0 0.0
    %813 = vmatpush1.msra.mxu0 0.0
    %814 = vmatprep.subr.mxu0 0.0
    %815 = vmatpush1.msra.mxu0 0.0
    %816 = vmatprep.subr.mxu0 0.0
    %817 = vmatpush1.msra.mxu0 0.0
    %818 = vmatprep.subr.mxu0 0.0
    %819 = vmatpush1.msra.mxu0 %v711
    %820 = vmatprep.subr.mxu0 0.0
    %821 = vmatpush2.msra.mxu0 0.0
    %822 = vmatprep.subr.mxu0 0.0
    %823 = vmatpush2.msra.mxu0 0.0
    %824 = vmatprep.subr.mxu0 0.0
    %825 = vmatpush2.msra.mxu0 0.0
    %826 = vmatprep.subr.mxu0 0.0
    %827 = vmatpush2.msra.mxu0 0.0
    %828 = vmatprep.subr.mxu0 0.0
    %829 = vmatpush2.msra.mxu0 0.0
    %830 = vmatprep.subr.mxu0 0.0
    %831 = vmatpush2.msra.mxu0 0.0
    %832 = vmatprep.subr.mxu0 0.0
    %833 = vmatpush2.msra.mxu0 0.0
    %834 = vmatprep.subr.mxu0 0.0
    %835 = vmatpush2.msra.mxu0 0.0
    %836 = vmatprep.subr.mxu0 0.0
    %837 = vmatpush2.msra.mxu0 0.0
    %838 = vmatprep.subr.mxu0 0.0
    %839 = vmatpush2.msra.mxu0 0.0
    %840 = vmatprep.subr.mxu0 0.0
    %841 = vmatpush2.msra.mxu0 0.0
    %842 = vmatprep.subr.mxu0 0.0
    %843 = vmatpush2.msra.mxu0 0.0
    %844 = vmatprep.subr.mxu0 0.0
    %845 = vmatpush2.msra.mxu0 0.0
    %846 = vmatprep.subr.mxu0 0.0
    %847 = vmatpush2.msra.mxu0 0.0
    %848 = vmatprep.subr.mxu0 0.0
    %849 = vmatpush2.msra.mxu0 0.0
    %850 = vmatprep.subr.mxu0 0.0
    %851 = vmatpush2.msra.mxu0 0.0
    %852 = vmatprep.mubr.f32.mxu0 0.0
    %853 = vmatmul.mubr.f32.gmra.mxu0 %v786
    %v854 = vpop.f32.mrf.mxu0
    %v855 = vadd.f32 0.0, %v854
    %v856 = vpop.f32.mrf.mxu0
    %857 = vdwg.mxu0
    %v859 = vsel %vm510, %v531, 0
    %861 = vmatprep.subr.mxu0 0.0
    %862 = vmatpush1.msra.mxu0 0.0
    %863 = vmatprep.subr.mxu0 0.0
    %864 = vmatpush1.msra.mxu0 0.0
    %865 = vmatprep.subr.mxu0 0.0
    %866 = vmatpush1.msra.mxu0 0.0
    %867 = vmatprep.subr.mxu0 0.0
    %868 = vmatpush1.msra.mxu0 0.0
    %869 = vmatprep.subr.mxu0 0.0
    %870 = vmatpush1.msra.mxu0 0.0
    %871 = vmatprep.subr.mxu0 0.0
    %872 = vmatpush1.msra.mxu0 0.0
    %873 = vmatprep.subr.mxu0 0.0
    %874 = vmatpush1.msra.mxu0 0.0
    %875 = vmatprep.subr.mxu0 0.0
    %876 = vmatpush1.msra.mxu0 0.0
    %877 = vmatprep.subr.mxu0 0.0
    %878 = vmatpush1.msra.mxu0 0.0
    %879 = vmatprep.subr.mxu0 0.0
    %880 = vmatpush1.msra.mxu0 0.0
    %881 = vmatprep.subr.mxu0 0.0
    %882 = vmatpush1.msra.mxu0 0.0
    %883 = vmatprep.subr.mxu0 0.0
    %884 = vmatpush1.msra.mxu0 0.0
    %885 = vmatprep.subr.mxu0 0.0
    %886 = vmatpush1.msra.mxu0 0.0
    %887 = vmatprep.subr.mxu0 0.0
    %888 = vmatpush1.msra.mxu0 0.0
    %889 = vmatprep.subr.mxu0 0.0
    %890 = vmatpush1.msra.mxu0 0.0
    %891 = vmatprep.subr.mxu0 0.0
    %892 = vmatpush1.msra.mxu0 %v533
    %893 = vmatprep.subr.mxu0 0.0
    %894 = vmatpush2.msra.mxu0 0.0
    %895 = vmatprep.subr.mxu0 0.0
    %896 = vmatpush2.msra.mxu0 0.0
    %897 = vmatprep.subr.mxu0 0.0
    %898 = vmatpush2.msra.mxu0 0.0
    %899 = vmatprep.subr.mxu0 0.0
    %900 = vmatpush2.msra.mxu0 0.0
    %901 = vmatprep.subr.mxu0 0.0
    %902 = vmatpush2.msra.mxu0 0.0
    %903 = vmatprep.subr.mxu0 0.0
    %904 = vmatpush2.msra.mxu0 0.0
    %905 = vmatprep.subr.mxu0 0.0
    %906 = vmatpush2.msra.mxu0 0.0
    %907 = vmatprep.subr.mxu0 0.0
    %908 = vmatpush2.msra.mxu0 0.0
    %909 = vmatprep.subr.mxu0 0.0
    %910 = vmatpush2.msra.mxu0 0.0
    %911 = vmatprep.subr.mxu0 0.0
    %912 = vmatpush2.msra.mxu0 0.0
    %913 = vmatprep.subr.mxu0 0.0
    %914 = vmatpush2.msra.mxu0 0.0
    %915 = vmatprep.subr.mxu0 0.0
    %916 = vmatpush2.msra.mxu0 0.0
    %917 = vmatprep.subr.mxu0 0.0
    %918 = vmatpush2.msra.mxu0 0.0
    %919 = vmatprep.subr.mxu0 0.0
    %920 = vmatpush2.msra.mxu0 0.0
    %921 = vmatprep.subr.mxu0 0.0
    %922 = vmatpush2.msra.mxu0 0.0
    %923 = vmatprep.subr.mxu0 0.0
    %924 = vmatpush2.msra.mxu0 0.0
    %925 = vmatprep.mubr.f32.mxu0 0.0
    %926 = vmatmul.mubr.f32.gmra.mxu0 %v859
    %v927 = vpop.f32.mrf.mxu0
    %v928 = vadd.f32 %v782, %v927
    %v929 = vpop.f32.mrf.mxu0
    %930 = vdwg.mxu0
    %v932 = vsel %vm510, %v532, 0
    %934 = vmatprep.subr.mxu0 0.0
    %935 = vmatpush1.msra.mxu0 0.0
    %936 = vmatprep.subr.mxu0 0.0
    %937 = vmatpush1.msra.mxu0 0.0
    %938 = vmatprep.subr.mxu0 0.0
    %939 = vmatpush1.msra.mxu0 0.0
    %940 = vmatprep.subr.mxu0 0.0
    %941 = vmatpush1.msra.mxu0 0.0
    %942 = vmatprep.subr.mxu0 0.0
    %943 = vmatpush1.msra.mxu0 0.0
    %944 = vmatprep.subr.mxu0 0.0
    %945 = vmatpush1.msra.mxu0 0.0
    %946 = vmatprep.subr.mxu0 0.0
    %947 = vmatpush1.msra.mxu0 0.0
    %948 = vmatprep.subr.mxu0 0.0
    %949 = vmatpush1.msra.mxu0 0.0
    %950 = vmatprep.subr.mxu0 0.0
    %951 = vmatpush1.msra.mxu0 0.0
    %952 = vmatprep.subr.mxu0 0.0
    %953 = vmatpush1.msra.mxu0 0.0
    %954 = vmatprep.subr.mxu0 0.0
    %955 = vmatpush1.msra.mxu0 0.0
    %956 = vmatprep.subr.mxu0 0.0
    %957 = vmatpush1.msra.mxu0 0.0
    %958 = vmatprep.subr.mxu0 0.0
    %959 = vmatpush1.msra.mxu0 0.0
    %960 = vmatprep.subr.mxu0 0.0
    %961 = vmatpush1.msra.mxu0 0.0
    %962 = vmatprep.subr.mxu0 0.0
    %963 = vmatpush1.msra.mxu0 0.0
    %964 = vmatprep.subr.mxu0 0.0
    %965 = vmatpush1.msra.mxu0 %v534
    %966 = vmatprep.subr.mxu0 0.0
    %967 = vmatpush2.msra.mxu0 0.0
    %968 = vmatprep.subr.mxu0 0.0
    %969 = vmatpush2.msra.mxu0 0.0
    %970 = vmatprep.subr.mxu0 0.0
    %971 = vmatpush2.msra.mxu0 0.0
    %972 = vmatprep.subr.mxu0 0.0
    %973 = vmatpush2.msra.mxu0 0.0
    %974 = vmatprep.subr.mxu0 0.0
    %975 = vmatpush2.msra.mxu0 0.0
    %976 = vmatprep.subr.mxu0 0.0
    %977 = vmatpush2.msra.mxu0 0.0
    %978 = vmatprep.subr.mxu0 0.0
    %979 = vmatpush2.msra.mxu0 0.0
    %980 = vmatprep.subr.mxu0 0.0
    %981 = vmatpush2.msra.mxu0 0.0
    %982 = vmatprep.subr.mxu0 0.0
    %983 = vmatpush2.msra.mxu0 0.0
    %984 = vmatprep.subr.mxu0 0.0
    %985 = vmatpush2.msra.mxu0 0.0
    %986 = vmatprep.subr.mxu0 0.0
    %987 = vmatpush2.msra.mxu0 0.0
    %988 = vmatprep.subr.mxu0 0.0
    %989 = vmatpush2.msra.mxu0 0.0
    %990 = vmatprep.subr.mxu0 0.0
    %991 = vmatpush2.msra.mxu0 0.0
    %992 = vmatprep.subr.mxu0 0.0
    %993 = vmatpush2.msra.mxu0 0.0
    %994 = vmatprep.subr.mxu0 0.0
    %995 = vmatpush2.msra.mxu0 0.0
    %996 = vmatprep.subr.mxu0 0.0
    %997 = vmatpush2.msra.mxu0 0.0
    %998 = vmatprep.mubr.f32.mxu0 0.0
    %999 = vmatmul.mubr.f32.gmra.mxu0 %v932
    %v1000 = vpop.f32.mrf.mxu0
    %v1001 = vadd.f32 %v855, %v1000
    %v1002 = vpop.f32.mrf.mxu0
    %1003 = vdwg.mxu0
    %vm1004 = vcmp.ge.s32.totalorder %v104, 16
    %vm1005 = vcmp.lt.s32.totalorder %v104, 24
    %vm1006 = vmand %vm1004, %vm1005
    %v1007 = vsel %vm1006, 1, 0
    %v1008 = vcvt.s32.f32 %v1007
    %v1009 = vmul.f32 %v191, %v1008
    %v1010 = vmul.f32 %v192, %v1008
    %v1012 = vsel %vm109, %v1009, 0
    %1014 = vmatprep.subr.mxu0 0.0
    %1015 = vmatpush1.xpose.msra.mxu0 0.0
    %1016 = vmatprep.subr.mxu0 0.0
    %1017 = vmatpush1.xpose.msra.mxu0 0.0
    %1018 = vmatprep.subr.mxu0 0.0
    %1019 = vmatpush1.xpose.msra.mxu0 0.0
    %1020 = vmatprep.subr.mxu0 0.0
    %1021 = vmatpush1.xpose.msra.mxu0 0.0
    %1022 = vmatprep.subr.mxu0 0.0
    %1023 = vmatpush1.xpose.msra.mxu0 0.0
    %1024 = vmatprep.subr.mxu0 0.0
    %1025 = vmatpush1.xpose.msra.mxu0 0.0
    %1026 = vmatprep.subr.mxu0 0.0
    %1027 = vmatpush1.xpose.msra.mxu0 0.0
    %1028 = vmatprep.subr.mxu0 0.0
    %1029 = vmatpush1.xpose.msra.mxu0 0.0
    %1030 = vmatprep.subr.mxu0 0.0
    %1031 = vmatpush1.xpose.msra.mxu0 0.0
    %1032 = vmatprep.subr.mxu0 0.0
    %1033 = vmatpush1.xpose.msra.mxu0 0.0
    %1034 = vmatprep.subr.mxu0 0.0
    %1035 = vmatpush1.xpose.msra.mxu0 0.0
    %1036 = vmatprep.subr.mxu0 0.0
    %1037 = vmatpush1.xpose.msra.mxu0 0.0
    %1038 = vmatprep.subr.mxu0 0.0
    %1039 = vmatpush1.xpose.msra.mxu0 0.0
    %1040 = vmatprep.subr.mxu0 0.0
    %1041 = vmatpush1.xpose.msra.mxu0 0.0
    %1042 = vmatprep.subr.mxu0 0.0
    %1043 = vmatpush1.xpose.msra.mxu0 0.0
    %1044 = vmatprep.subr.mxu0 0.0
    %1045 = vmatpush1.xpose.msra.mxu0 %v362
    %1046 = vmatprep.subr.mxu0 0.0
    %1047 = vmatpush2.xpose.msra.mxu0 0.0
    %1048 = vmatprep.subr.mxu0 0.0
    %1049 = vmatpush2.xpose.msra.mxu0 0.0
    %1050 = vmatprep.subr.mxu0 0.0
    %1051 = vmatpush2.xpose.msra.mxu0 0.0
    %1052 = vmatprep.subr.mxu0 0.0
    %1053 = vmatpush2.xpose.msra.mxu0 0.0
    %1054 = vmatprep.subr.mxu0 0.0
    %1055 = vmatpush2.xpose.msra.mxu0 0.0
    %1056 = vmatprep.subr.mxu0 0.0
    %1057 = vmatpush2.xpose.msra.mxu0 0.0
    %1058 = vmatprep.subr.mxu0 0.0
    %1059 = vmatpush2.xpose.msra.mxu0 0.0
    %1060 = vmatprep.subr.mxu0 0.0
    %1061 = vmatpush2.xpose.msra.mxu0 0.0
    %1062 = vmatprep.subr.mxu0 0.0
    %1063 = vmatpush2.xpose.msra.mxu0 0.0
    %1064 = vmatprep.subr.mxu0 0.0
    %1065 = vmatpush2.xpose.msra.mxu0 0.0
    %1066 = vmatprep.subr.mxu0 0.0
    %1067 = vmatpush2.xpose.msra.mxu0 0.0
    %1068 = vmatprep.subr.mxu0 0.0
    %1069 = vmatpush2.xpose.msra.mxu0 0.0
    %1070 = vmatprep.subr.mxu0 0.0
    %1071 = vmatpush2.xpose.msra.mxu0 0.0
    %1072 = vmatprep.subr.mxu0 0.0
    %1073 = vmatpush2.xpose.msra.mxu0 0.0
    %1074 = vmatprep.subr.mxu0 0.0
    %1075 = vmatpush2.xpose.msra.mxu0 0.0
    %1076 = vmatprep.subr.mxu0 0.0
    %1077 = vmatpush2.xpose.msra.mxu0 0.0
    %1078 = vmatprep.mubr.f32.mxu0 0.0
    %1079 = vmatmul.mubr.f32.gmra.mxu0 %v1012
    %v1080 = vpop.f32.mrf.mxu0
    %v1081 = vadd.f32 %v45, %v1080
    %v1082 = vpop.f32.mrf.mxu0
    %1083 = vdwg.mxu0
    %v1085 = vsel %vm109, %v1010, 0
    %1087 = vmatprep.subr.mxu0 0.0
    %1088 = vmatpush1.xpose.msra.mxu0 0.0
    %1089 = vmatprep.subr.mxu0 0.0
    %1090 = vmatpush1.xpose.msra.mxu0 0.0
    %1091 = vmatprep.subr.mxu0 0.0
    %1092 = vmatpush1.xpose.msra.mxu0 0.0
    %1093 = vmatprep.subr.mxu0 0.0
    %1094 = vmatpush1.xpose.msra.mxu0 0.0
    %1095 = vmatprep.subr.mxu0 0.0
    %1096 = vmatpush1.xpose.msra.mxu0 0.0
    %1097 = vmatprep.subr.mxu0 0.0
    %1098 = vmatpush1.xpose.msra.mxu0 0.0
    %1099 = vmatprep.subr.mxu0 0.0
    %1100 = vmatpush1.xpose.msra.mxu0 0.0
    %1101 = vmatprep.subr.mxu0 0.0
    %1102 = vmatpush1.xpose.msra.mxu0 0.0
    %1103 = vmatprep.subr.mxu0 0.0
    %1104 = vmatpush1.xpose.msra.mxu0 0.0
    %1105 = vmatprep.subr.mxu0 0.0
    %1106 = vmatpush1.xpose.msra.mxu0 0.0
    %1107 = vmatprep.subr.mxu0 0.0
    %1108 = vmatpush1.xpose.msra.mxu0 0.0
    %1109 = vmatprep.subr.mxu0 0.0
    %1110 = vmatpush1.xpose.msra.mxu0 0.0
    %1111 = vmatprep.subr.mxu0 0.0
    %1112 = vmatpush1.xpose.msra.mxu0 0.0
    %1113 = vmatprep.subr.mxu0 0.0
    %1114 = vmatpush1.xpose.msra.mxu0 0.0
    %1115 = vmatprep.subr.mxu0 0.0
    %1116 = vmatpush1.xpose.msra.mxu0 0.0
    %1117 = vmatprep.subr.mxu0 0.0
    %1118 = vmatpush1.xpose.msra.mxu0 %v438
    %1119 = vmatprep.subr.mxu0 0.0
    %1120 = vmatpush2.xpose.msra.mxu0 0.0
    %1121 = vmatprep.subr.mxu0 0.0
    %1122 = vmatpush2.xpose.msra.mxu0 0.0
    %1123 = vmatprep.subr.mxu0 0.0
    %1124 = vmatpush2.xpose.msra.mxu0 0.0
    %1125 = vmatprep.subr.mxu0 0.0
    %1126 = vmatpush2.xpose.msra.mxu0 0.0
    %1127 = vmatprep.subr.mxu0 0.0
    %1128 = vmatpush2.xpose.msra.mxu0 0.0
    %1129 = vmatprep.subr.mxu0 0.0
    %1130 = vmatpush2.xpose.msra.mxu0 0.0
    %1131 = vmatprep.subr.mxu0 0.0
    %1132 = vmatpush2.xpose.msra.mxu0 0.0
    %1133 = vmatprep.subr.mxu0 0.0
    %1134 = vmatpush2.xpose.msra.mxu0 0.0
    %1135 = vmatprep.subr.mxu0 0.0
    %1136 = vmatpush2.xpose.msra.mxu0 0.0
    %1137 = vmatprep.subr.mxu0 0.0
    %1138 = vmatpush2.xpose.msra.mxu0 0.0
    %1139 = vmatprep.subr.mxu0 0.0
    %1140 = vmatpush2.xpose.msra.mxu0 0.0
    %1141 = vmatprep.subr.mxu0 0.0
    %1142 = vmatpush2.xpose.msra.mxu0 0.0
    %1143 = vmatprep.subr.mxu0 0.0
    %1144 = vmatpush2.xpose.msra.mxu0 0.0
    %1145 = vmatprep.subr.mxu0 0.0
    %1146 = vmatpush2.xpose.msra.mxu0 0.0
    %1147 = vmatprep.subr.mxu0 0.0
    %1148 = vmatpush2.xpose.msra.mxu0 0.0
    %1149 = vmatprep.subr.mxu0 0.0
    %1150 = vmatpush2.xpose.msra.mxu0 0.0
    %1151 = vmatprep.mubr.f32.mxu0 0.0
    %1152 = vmatmul.mubr.f32.gmra.mxu0 %v1085
    %v1153 = vpop.f32.mrf.mxu0
    %v1154 = vadd.f32 %v46, %v1153
    %v1155 = vpop.f32.mrf.mxu0
    %1156 = vdwg.mxu0
    %v1157 = vsel %vm510, %v1081, -inf
    %1158 = vmax.xlane.f32.xlu0 %v1157
    %v1159 = vpop.xlane.xlu0 %1158
    %v1160 = vsel %vm510, %v1154, -inf
    %1161 = vmax.xlane.f32.xlu0 %v1160
    %v1162 = vpop.xlane.xlu0 %1161
    %v1163 = vsub.f32 %v1081, %v1159
    %v1164 = vsub.f32 %v1154, %v1162
    %v1165 = vmul.f32 %v1163, 1.442695
    %v1166 = vpow.pop %v1165
    %v1167 = vmul.f32 %v1164, 1.442695
    %v1168 = vpow.pop %v1167
    %v1169 = vsel %vm510, %v1166, 0.0
    %1170 = vadd.xlane.f32.xlu0 %v1169
    %v1171 = vpop.xlane.xlu0 %1170
    %v1172 = vsel %vm510, %v1168, 0.0
    %1173 = vadd.xlane.f32.xlu0 %v1172
    %v1174 = vpop.xlane.xlu0 %1173
    %v1175 = vrcp.pop %v1171
    %v1176 = vrcp.pop %v1174
    %v1177 = vmul.f32 %v1166, %v1175
    %v1178 = vmul.f32 %v1168, %v1176
    %v1179 = vmul.f32 %v343, %v1008
    %v1180 = vmul.f32 %v348, %v1008
    %v1182 = vsel %vm510, %v1177, 0
    %1184 = vmatprep.subr.mxu0 0.0
    %1185 = vmatpush1.msra.mxu0 0.0
    %1186 = vmatprep.subr.mxu0 0.0
    %1187 = vmatpush1.msra.mxu0 0.0
    %1188 = vmatprep.subr.mxu0 0.0
    %1189 = vmatpush1.msra.mxu0 0.0
    %1190 = vmatprep.subr.mxu0 0.0
    %1191 = vmatpush1.msra.mxu0 0.0
    %1192 = vmatprep.subr.mxu0 0.0
    %1193 = vmatpush1.msra.mxu0 0.0
    %1194 = vmatprep.subr.mxu0 0.0
    %1195 = vmatpush1.msra.mxu0 0.0
    %1196 = vmatprep.subr.mxu0 0.0
    %1197 = vmatpush1.msra.mxu0 0.0
    %1198 = vmatprep.subr.mxu0 0.0
    %1199 = vmatpush1.msra.mxu0 0.0
    %1200 = vmatprep.subr.mxu0 0.0
    %1201 = vmatpush1.msra.mxu0 0.0
    %1202 = vmatprep.subr.mxu0 0.0
    %1203 = vmatpush1.msra.mxu0 0.0
    %1204 = vmatprep.subr.mxu0 0.0
    %1205 = vmatpush1.msra.mxu0 0.0
    %1206 = vmatprep.subr.mxu0 0.0
    %1207 = vmatpush1.msra.mxu0 0.0
    %1208 = vmatprep.subr.mxu0 0.0
    %1209 = vmatpush1.msra.mxu0 0.0
    %1210 = vmatprep.subr.mxu0 0.0
    %1211 = vmatpush1.msra.mxu0 0.0
    %1212 = vmatprep.subr.mxu0 0.0
    %1213 = vmatpush1.msra.mxu0 0.0
    %1214 = vmatprep.subr.mxu0 0.0
    %1215 = vmatpush1.msra.mxu0 %v1179
    %1216 = vmatprep.subr.mxu0 0.0
    %1217 = vmatpush2.msra.mxu0 0.0
    %1218 = vmatprep.subr.mxu0 0.0
    %1219 = vmatpush2.msra.mxu0 0.0
    %1220 = vmatprep.subr.mxu0 0.0
    %1221 = vmatpush2.msra.mxu0 0.0
    %1222 = vmatprep.subr.mxu0 0.0
    %1223 = vmatpush2.msra.mxu0 0.0
    %1224 = vmatprep.subr.mxu0 0.0
    %1225 = vmatpush2.msra.mxu0 0.0
    %1226 = vmatprep.subr.mxu0 0.0
    %1227 = vmatpush2.msra.mxu0 0.0
    %1228 = vmatprep.subr.mxu0 0.0
    %1229 = vmatpush2.msra.mxu0 0.0
    %1230 = vmatprep.subr.mxu0 0.0
    %1231 = vmatpush2.msra.mxu0 0.0
    %1232 = vmatprep.subr.mxu0 0.0
    %1233 = vmatpush2.msra.mxu0 0.0
    %1234 = vmatprep.subr.mxu0 0.0
    %1235 = vmatpush2.msra.mxu0 0.0
    %1236 = vmatprep.subr.mxu0 0.0
    %1237 = vmatpush2.msra.mxu0 0.0
    %1238 = vmatprep.subr.mxu0 0.0
    %1239 = vmatpush2.msra.mxu0 0.0
    %1240 = vmatprep.subr.mxu0 0.0
    %1241 = vmatpush2.msra.mxu0 0.0
    %1242 = vmatprep.subr.mxu0 0.0
    %1243 = vmatpush2.msra.mxu0 0.0
    %1244 = vmatprep.subr.mxu0 0.0
    %1245 = vmatpush2.msra.mxu0 0.0
    %1246 = vmatprep.subr.mxu0 0.0
    %1247 = vmatpush2.msra.mxu0 0.0
    %1248 = vmatprep.mubr.f32.mxu0 0.0
    %1249 = vmatmul.mubr.f32.gmra.mxu0 %v1182
    %v1250 = vpop.f32.mrf.mxu0
    %v1251 = vadd.f32 0.0, %v1250
    %v1252 = vpop.f32.mrf.mxu0
    %1253 = vdwg.mxu0
    %v1255 = vsel %vm510, %v1178, 0
    %1257 = vmatprep.subr.mxu0 0.0
    %1258 = vmatpush1.msra.mxu0 0.0
    %1259 = vmatprep.subr.mxu0 0.0
    %1260 = vmatpush1.msra.mxu0 0.0
    %1261 = vmatprep.subr.mxu0 0.0
    %1262 = vmatpush1.msra.mxu0 0.0
    %1263 = vmatprep.subr.mxu0 0.0
    %1264 = vmatpush1.msra.mxu0 0.0
    %1265 = vmatprep.subr.mxu0 0.0
    %1266 = vmatpush1.msra.mxu0 0.0
    %1267 = vmatprep.subr.mxu0 0.0
    %1268 = vmatpush1.msra.mxu0 0.0
    %1269 = vmatprep.subr.mxu0 0.0
    %1270 = vmatpush1.msra.mxu0 0.0
    %1271 = vmatprep.subr.mxu0 0.0
    %1272 = vmatpush1.msra.mxu0 0.0
    %1273 = vmatprep.subr.mxu0 0.0
    %1274 = vmatpush1.msra.mxu0 0.0
    %1275 = vmatprep.subr.mxu0 0.0
    %1276 = vmatpush1.msra.mxu0 0.0
    %1277 = vmatprep.subr.mxu0 0.0
    %1278 = vmatpush1.msra.mxu0 0.0
    %1279 = vmatprep.subr.mxu0 0.0
    %1280 = vmatpush1.msra.mxu0 0.0
    %1281 = vmatprep.subr.mxu0 0.0
    %1282 = vmatpush1.msra.mxu0 0.0
    %1283 = vmatprep.subr.mxu0 0.0
    %1284 = vmatpush1.msra.mxu0 0.0
    %1285 = vmatprep.subr.mxu0 0.0
    %1286 = vmatpush1.msra.mxu0 0.0
    %1287 = vmatprep.subr.mxu0 0.0
    %1288 = vmatpush1.msra.mxu0 %v1180
    %1289 = vmatprep.subr.mxu0 0.0
    %1290 = vmatpush2.msra.mxu0 0.0
    %1291 = vmatprep.subr.mxu0 0.0
    %1292 = vmatpush2.msra.mxu0 0.0
    %1293 = vmatprep.subr.mxu0 0.0
    %1294 = vmatpush2.msra.mxu0 0.0
    %1295 = vmatprep.subr.mxu0 0.0
    %1296 = vmatpush2.msra.mxu0 0.0
    %1297 = vmatprep.subr.mxu0 0.0
    %1298 = vmatpush2.msra.mxu0 0.0
    %1299 = vmatprep.subr.mxu0 0.0
    %1300 = vmatpush2.msra.mxu0 0.0
    %1301 = vmatprep.subr.mxu0 0.0
    %1302 = vmatpush2.msra.mxu0 0.0
    %1303 = vmatprep.subr.mxu0 0.0
    %1304 = vmatpush2.msra.mxu0 0.0
    %1305 = vmatprep.subr.mxu0 0.0
    %1306 = vmatpush2.msra.mxu0 0.0
    %1307 = vmatprep.subr.mxu0 0.0
    %1308 = vmatpush2.msra.mxu0 0.0
    %1309 = vmatprep.subr.mxu0 0.0
    %1310 = vmatpush2.msra.mxu0 0.0
    %1311 = vmatprep.subr.mxu0 0.0
    %1312 = vmatpush2.msra.mxu0 0.0
    %1313 = vmatprep.subr.mxu0 0.0
    %1314 = vmatpush2.msra.mxu0 0.0
    %1315 = vmatprep.subr.mxu0 0.0
    %1316 = vmatpush2.msra.mxu0 0.0
    %1317 = vmatprep.subr.mxu0 0.0
    %1318 = vmatpush2.msra.mxu0 0.0
    %1319 = vmatprep.subr.mxu0 0.0
    %1320 = vmatpush2.msra.mxu0 0.0
    %1321 = vmatprep.mubr.f32.mxu0 0.0
    %1322 = vmatmul.mubr.f32.gmra.mxu0 %v1255
    %v1323 = vpop.f32.mrf.mxu0
    %v1324 = vadd.f32 0.0, %v1323
    %v1325 = vpop.f32.mrf.mxu0
    %1326 = vdwg.mxu0
    %v1327 = vadd.f32 %v928, %v1251
    %v1328 = vadd.f32 %v1001, %v1324
    %vm1329 = vcmp.ge.s32.totalorder %v104, 24
    %vm1330 = vcmp.lt.s32.totalorder %v104, 32
    %vm1331 = vmand %vm1329, %vm1330
    %v1332 = vsel %vm1331, 1, 0
    %v1333 = vcvt.s32.f32 %v1332
    %v1334 = vmul.f32 %v191, %v1333
    %v1335 = vmul.f32 %v192, %v1333
    %v1337 = vsel %vm109, %v1334, 0
    %1339 = vmatprep.subr.mxu0 0.0
    %1340 = vmatpush1.xpose.msra.mxu0 0.0
    %1341 = vmatprep.subr.mxu0 0.0
    %1342 = vmatpush1.xpose.msra.mxu0 0.0
    %1343 = vmatprep.subr.mxu0 0.0
    %1344 = vmatpush1.xpose.msra.mxu0 0.0
    %1345 = vmatprep.subr.mxu0 0.0
    %1346 = vmatpush1.xpose.msra.mxu0 0.0
    %1347 = vmatprep.subr.mxu0 0.0
    %1348 = vmatpush1.xpose.msra.mxu0 0.0
    %1349 = vmatprep.subr.mxu0 0.0
    %1350 = vmatpush1.xpose.msra.mxu0 0.0
    %1351 = vmatprep.subr.mxu0 0.0
    %1352 = vmatpush1.xpose.msra.mxu0 0.0
    %1353 = vmatprep.subr.mxu0 0.0
    %1354 = vmatpush1.xpose.msra.mxu0 0.0
    %1355 = vmatprep.subr.mxu0 0.0
    %1356 = vmatpush1.xpose.msra.mxu0 0.0
    %1357 = vmatprep.subr.mxu0 0.0
    %1358 = vmatpush1.xpose.msra.mxu0 0.0
    %1359 = vmatprep.subr.mxu0 0.0
    %1360 = vmatpush1.xpose.msra.mxu0 0.0
    %1361 = vmatprep.subr.mxu0 0.0
    %1362 = vmatpush1.xpose.msra.mxu0 0.0
    %1363 = vmatprep.subr.mxu0 0.0
    %1364 = vmatpush1.xpose.msra.mxu0 0.0
    %1365 = vmatprep.subr.mxu0 0.0
    %1366 = vmatpush1.xpose.msra.mxu0 0.0
    %1367 = vmatprep.subr.mxu0 0.0
    %1368 = vmatpush1.xpose.msra.mxu0 0.0
    %1369 = vmatprep.subr.mxu0 0.0
    %1370 = vmatpush1.xpose.msra.mxu0 %v362
    %1371 = vmatprep.subr.mxu0 0.0
    %1372 = vmatpush2.xpose.msra.mxu0 0.0
    %1373 = vmatprep.subr.mxu0 0.0
    %1374 = vmatpush2.xpose.msra.mxu0 0.0
    %1375 = vmatprep.subr.mxu0 0.0
    %1376 = vmatpush2.xpose.msra.mxu0 0.0
    %1377 = vmatprep.subr.mxu0 0.0
    %1378 = vmatpush2.xpose.msra.mxu0 0.0
    %1379 = vmatprep.subr.mxu0 0.0
    %1380 = vmatpush2.xpose.msra.mxu0 0.0
    %1381 = vmatprep.subr.mxu0 0.0
    %1382 = vmatpush2.xpose.msra.mxu0 0.0
    %1383 = vmatprep.subr.mxu0 0.0
    %1384 = vmatpush2.xpose.msra.mxu0 0.0
    %1385 = vmatprep.subr.mxu0 0.0
    %1386 = vmatpush2.xpose.msra.mxu0 0.0
    %1387 = vmatprep.subr.mxu0 0.0
    %1388 = vmatpush2.xpose.msra.mxu0 0.0
    %1389 = vmatprep.subr.mxu0 0.0
    %1390 = vmatpush2.xpose.msra.mxu0 0.0
    %1391 = vmatprep.subr.mxu0 0.0
    %1392 = vmatpush2.xpose.msra.mxu0 0.0
    %1393 = vmatprep.subr.mxu0 0.0
    %1394 = vmatpush2.xpose.msra.mxu0 0.0
    %1395 = vmatprep.subr.mxu0 0.0
    %1396 = vmatpush2.xpose.msra.mxu0 0.0
    %1397 = vmatprep.subr.mxu0 0.0
    %1398 = vmatpush2.xpose.msra.mxu0 0.0
    %1399 = vmatprep.subr.mxu0 0.0
    %1400 = vmatpush2.xpose.msra.mxu0 0.0
    %1401 = vmatprep.subr.mxu0 0.0
    %1402 = vmatpush2.xpose.msra.mxu0 0.0
    %1403 = vmatprep.mubr.f32.mxu0 0.0
    %1404 = vmatmul.mubr.f32.gmra.mxu0 %v1337
    %v1405 = vpop.f32.mrf.mxu0
    %v1406 = vadd.f32 %v45, %v1405
    %v1407 = vpop.f32.mrf.mxu0
    %1408 = vdwg.mxu0
    %v1410 = vsel %vm109, %v1335, 0
    %1412 = vmatprep.subr.mxu0 0.0
    %1413 = vmatpush1.xpose.msra.mxu0 0.0
    %1414 = vmatprep.subr.mxu0 0.0
    %1415 = vmatpush1.xpose.msra.mxu0 0.0
    %1416 = vmatprep.subr.mxu0 0.0
    %1417 = vmatpush1.xpose.msra.mxu0 0.0
    %1418 = vmatprep.subr.mxu0 0.0
    %1419 = vmatpush1.xpose.msra.mxu0 0.0
    %1420 = vmatprep.subr.mxu0 0.0
    %1421 = vmatpush1.xpose.msra.mxu0 0.0
    %1422 = vmatprep.subr.mxu0 0.0
    %1423 = vmatpush1.xpose.msra.mxu0 0.0
    %1424 = vmatprep.subr.mxu0 0.0
    %1425 = vmatpush1.xpose.msra.mxu0 0.0
    %1426 = vmatprep.subr.mxu0 0.0
    %1427 = vmatpush1.xpose.msra.mxu0 0.0
    %1428 = vmatprep.subr.mxu0 0.0
    %1429 = vmatpush1.xpose.msra.mxu0 0.0
    %1430 = vmatprep.subr.mxu0 0.0
    %1431 = vmatpush1.xpose.msra.mxu0 0.0
    %1432 = vmatprep.subr.mxu0 0.0
    %1433 = vmatpush1.xpose.msra.mxu0 0.0
    %1434 = vmatprep.subr.mxu0 0.0
    %1435 = vmatpush1.xpose.msra.mxu0 0.0
    %1436 = vmatprep.subr.mxu0 0.0
    %1437 = vmatpush1.xpose.msra.mxu0 0.0
    %1438 = vmatprep.subr.mxu0 0.0
    %1439 = vmatpush1.xpose.msra.mxu0 0.0
    %1440 = vmatprep.subr.mxu0 0.0
    %1441 = vmatpush1.xpose.msra.mxu0 0.0
    %1442 = vmatprep.subr.mxu0 0.0
    %1443 = vmatpush1.xpose.msra.mxu0 %v438
    %1444 = vmatprep.subr.mxu0 0.0
    %1445 = vmatpush2.xpose.msra.mxu0 0.0
    %1446 = vmatprep.subr.mxu0 0.0
    %1447 = vmatpush2.xpose.msra.mxu0 0.0
    %1448 = vmatprep.subr.mxu0 0.0
    %1449 = vmatpush2.xpose.msra.mxu0 0.0
    %1450 = vmatprep.subr.mxu0 0.0
    %1451 = vmatpush2.xpose.msra.mxu0 0.0
    %1452 = vmatprep.subr.mxu0 0.0
    %1453 = vmatpush2.xpose.msra.mxu0 0.0
    %1454 = vmatprep.subr.mxu0 0.0
    %1455 = vmatpush2.xpose.msra.mxu0 0.0
    %1456 = vmatprep.subr.mxu0 0.0
    %1457 = vmatpush2.xpose.msra.mxu0 0.0
    %1458 = vmatprep.subr.mxu0 0.0
    %1459 = vmatpush2.xpose.msra.mxu0 0.0
    %1460 = vmatprep.subr.mxu0 0.0
    %1461 = vmatpush2.xpose.msra.mxu0 0.0
    %1462 = vmatprep.subr.mxu0 0.0
    %1463 = vmatpush2.xpose.msra.mxu0 0.0
    %1464 = vmatprep.subr.mxu0 0.0
    %1465 = vmatpush2.xpose.msra.mxu0 0.0
    %1466 = vmatprep.subr.mxu0 0.0
    %1467 = vmatpush2.xpose.msra.mxu0 0.0
    %1468 = vmatprep.subr.mxu0 0.0
    %1469 = vmatpush2.xpose.msra.mxu0 0.0
    %1470 = vmatprep.subr.mxu0 0.0
    %1471 = vmatpush2.xpose.msra.mxu0 0.0
    %1472 = vmatprep.subr.mxu0 0.0
    %1473 = vmatpush2.xpose.msra.mxu0 0.0
    %1474 = vmatprep.subr.mxu0 0.0
    %1475 = vmatpush2.xpose.msra.mxu0 0.0
    %1476 = vmatprep.mubr.f32.mxu0 0.0
    %1477 = vmatmul.mubr.f32.gmra.mxu0 %v1410
    %v1478 = vpop.f32.mrf.mxu0
    %v1479 = vadd.f32 %v46, %v1478
    %v1480 = vpop.f32.mrf.mxu0
    %1481 = vdwg.mxu0
    %v1482 = vsel %vm510, %v1406, -inf
    %1483 = vmax.xlane.f32.xlu0 %v1482
    %v1484 = vpop.xlane.xlu0 %1483
    %v1485 = vsel %vm510, %v1479, -inf
    %1486 = vmax.xlane.f32.xlu0 %v1485
    %v1487 = vpop.xlane.xlu0 %1486
    %v1488 = vsub.f32 %v1406, %v1484
    %v1489 = vsub.f32 %v1479, %v1487
    %v1490 = vmul.f32 %v1488, 1.442695
    %v1491 = vpow.pop %v1490
    %v1492 = vmul.f32 %v1489, 1.442695
    %v1493 = vpow.pop %v1492
    %v1494 = vsel %vm510, %v1491, 0.0
    %1495 = vadd.xlane.f32.xlu0 %v1494
    %v1496 = vpop.xlane.xlu0 %1495
    %v1497 = vsel %vm510, %v1493, 0.0
    %1498 = vadd.xlane.f32.xlu0 %v1497
    %v1499 = vpop.xlane.xlu0 %1498
    %v1500 = vrcp.pop %v1496
    %v1501 = vrcp.pop %v1499
    %v1502 = vmul.f32 %v1491, %v1500
    %v1503 = vmul.f32 %v1493, %v1501
    %v1504 = vmul.f32 %v343, %v1333
    %v1505 = vmul.f32 %v348, %v1333
    %v1507 = vsel %vm510, %v1502, 0
    %1509 = vmatprep.subr.mxu0 0.0
    %1510 = vmatpush1.msra.mxu0 0.0
    %1511 = vmatprep.subr.mxu0 0.0
    %1512 = vmatpush1.msra.mxu0 0.0
    %1513 = vmatprep.subr.mxu0 0.0
    %1514 = vmatpush1.msra.mxu0 0.0
    %1515 = vmatprep.subr.mxu0 0.0
    %1516 = vmatpush1.msra.mxu0 0.0
    %1517 = vmatprep.subr.mxu0 0.0
    %1518 = vmatpush1.msra.mxu0 0.0
    %1519 = vmatprep.subr.mxu0 0.0
    %1520 = vmatpush1.msra.mxu0 0.0
    %1521 = vmatprep.subr.mxu0 0.0
    %1522 = vmatpush1.msra.mxu0 0.0
    %1523 = vmatprep.subr.mxu0 0.0
    %1524 = vmatpush1.msra.mxu0 0.0
    %1525 = vmatprep.subr.mxu0 0.0
    %1526 = vmatpush1.msra.mxu0 0.0
    %1527 = vmatprep.subr.mxu0 0.0
    %1528 = vmatpush1.msra.mxu0 0.0
    %1529 = vmatprep.subr.mxu0 0.0
    %1530 = vmatpush1.msra.mxu0 0.0
    %1531 = vmatprep.subr.mxu0 0.0
    %1532 = vmatpush1.msra.mxu0 0.0
    %1533 = vmatprep.subr.mxu0 0.0
    %1534 = vmatpush1.msra.mxu0 0.0
    %1535 = vmatprep.subr.mxu0 0.0
    %1536 = vmatpush1.msra.mxu0 0.0
    %1537 = vmatprep.subr.mxu0 0.0
    %1538 = vmatpush1.msra.mxu0 0.0
    %1539 = vmatprep.subr.mxu0 0.0
    %1540 = vmatpush1.msra.mxu0 %v1504
    %1541 = vmatprep.subr.mxu0 0.0
    %1542 = vmatpush2.msra.mxu0 0.0
    %1543 = vmatprep.subr.mxu0 0.0
    %1544 = vmatpush2.msra.mxu0 0.0
    %1545 = vmatprep.subr.mxu0 0.0
    %1546 = vmatpush2.msra.mxu0 0.0
    %1547 = vmatprep.subr.mxu0 0.0
    %1548 = vmatpush2.msra.mxu0 0.0
    %1549 = vmatprep.subr.mxu0 0.0
    %1550 = vmatpush2.msra.mxu0 0.0
    %1551 = vmatprep.subr.mxu0 0.0
    %1552 = vmatpush2.msra.mxu0 0.0
    %1553 = vmatprep.subr.mxu0 0.0
    %1554 = vmatpush2.msra.mxu0 0.0
    %1555 = vmatprep.subr.mxu0 0.0
    %1556 = vmatpush2.msra.mxu0 0.0
    %1557 = vmatprep.subr.mxu0 0.0
    %1558 = vmatpush2.msra.mxu0 0.0
    %1559 = vmatprep.subr.mxu0 0.0
    %1560 = vmatpush2.msra.mxu0 0.0
    %1561 = vmatprep.subr.mxu0 0.0
    %1562 = vmatpush2.msra.mxu0 0.0
    %1563 = vmatprep.subr.mxu0 0.0
    %1564 = vmatpush2.msra.mxu0 0.0
    %1565 = vmatprep.subr.mxu0 0.0
    %1566 = vmatpush2.msra.mxu0 0.0
    %1567 = vmatprep.subr.mxu0 0.0
    %1568 = vmatpush2.msra.mxu0 0.0
    %1569 = vmatprep.subr.mxu0 0.0
    %1570 = vmatpush2.msra.mxu0 0.0
    %1571 = vmatprep.subr.mxu0 0.0
    %1572 = vmatpush2.msra.mxu0 0.0
    %1573 = vmatprep.mubr.f32.mxu0 0.0
    %1574 = vmatmul.mubr.f32.gmra.mxu0 %v1507
    %v1575 = vpop.f32.mrf.mxu0
    %v1576 = vadd.f32 0.0, %v1575
    %v1577 = vpop.f32.mrf.mxu0
    %1578 = vdwg.mxu0
    %v1580 = vsel %vm510, %v1503, 0
    %1582 = vmatprep.subr.mxu0 0.0
    %1583 = vmatpush1.msra.mxu0 0.0
    %1584 = vmatprep.subr.mxu0 0.0
    %1585 = vmatpush1.msra.mxu0 0.0
    %1586 = vmatprep.subr.mxu0 0.0
    %1587 = vmatpush1.msra.mxu0 0.0
    %1588 = vmatprep.subr.mxu0 0.0
    %1589 = vmatpush1.msra.mxu0 0.0
    %1590 = vmatprep.subr.mxu0 0.0
    %1591 = vmatpush1.msra.mxu0 0.0
    %1592 = vmatprep.subr.mxu0 0.0
    %1593 = vmatpush1.msra.mxu0 0.0
    %1594 = vmatprep.subr.mxu0 0.0
    %1595 = vmatpush1.msra.mxu0 0.0
    %1596 = vmatprep.subr.mxu0 0.0
    %1597 = vmatpush1.msra.mxu0 0.0
    %1598 = vmatprep.subr.mxu0 0.0
    %1599 = vmatpush1.msra.mxu0 0.0
    %1600 = vmatprep.subr.mxu0 0.0
    %1601 = vmatpush1.msra.mxu0 0.0
    %1602 = vmatprep.subr.mxu0 0.0
    %1603 = vmatpush1.msra.mxu0 0.0
    %1604 = vmatprep.subr.mxu0 0.0
    %1605 = vmatpush1.msra.mxu0 0.0
    %1606 = vmatprep.subr.mxu0 0.0
    %1607 = vmatpush1.msra.mxu0 0.0
    %1608 = vmatprep.subr.mxu0 0.0
    %1609 = vmatpush1.msra.mxu0 0.0
    %1610 = vmatprep.subr.mxu0 0.0
    %1611 = vmatpush1.msra.mxu0 0.0
    %1612 = vmatprep.subr.mxu0 0.0
    %1613 = vmatpush1.msra.mxu0 %v1505
    %1614 = vmatprep.subr.mxu0 0.0
    %1615 = vmatpush2.msra.mxu0 0.0
    %1616 = vmatprep.subr.mxu0 0.0
    %1617 = vmatpush2.msra.mxu0 0.0
    %1618 = vmatprep.subr.mxu0 0.0
    %1619 = vmatpush2.msra.mxu0 0.0
    %1620 = vmatprep.subr.mxu0 0.0
    %1621 = vmatpush2.msra.mxu0 0.0
    %1622 = vmatprep.subr.mxu0 0.0
    %1623 = vmatpush2.msra.mxu0 0.0
    %1624 = vmatprep.subr.mxu0 0.0
    %1625 = vmatpush2.msra.mxu0 0.0
    %1626 = vmatprep.subr.mxu0 0.0
    %1627 = vmatpush2.msra.mxu0 0.0
    %1628 = vmatprep.subr.mxu0 0.0
    %1629 = vmatpush2.msra.mxu0 0.0
    %1630 = vmatprep.subr.mxu0 0.0
    %1631 = vmatpush2.msra.mxu0 0.0
    %1632 = vmatprep.subr.mxu0 0.0
    %1633 = vmatpush2.msra.mxu0 0.0
    %1634 = vmatprep.subr.mxu0 0.0
    %1635 = vmatpush2.msra.mxu0 0.0
    %1636 = vmatprep.subr.mxu0 0.0
    %1637 = vmatpush2.msra.mxu0 0.0
    %1638 = vmatprep.subr.mxu0 0.0
    %1639 = vmatpush2.msra.mxu0 0.0
    %1640 = vmatprep.subr.mxu0 0.0
    %1641 = vmatpush2.msra.mxu0 0.0
    %1642 = vmatprep.subr.mxu0 0.0
    %1643 = vmatpush2.msra.mxu0 0.0
    %1644 = vmatprep.subr.mxu0 0.0
    %1645 = vmatpush2.msra.mxu0 0.0
    %1646 = vmatprep.mubr.f32.mxu0 0.0
    %1647 = vmatmul.mubr.f32.gmra.mxu0 %v1580
    %v1648 = vpop.f32.mrf.mxu0
    %v1649 = vadd.f32 0.0, %v1648
    %v1650 = vpop.f32.mrf.mxu0
    %1651 = vdwg.mxu0
    %v1652 = vadd.f32 %v1327, %v1576
    %v1653 = vadd.f32 %v1328, %v1649
    %v1654 = vlaneseq
    %v1655 = vshrl.u32 %v1654, 7
    %v1656 = vsub.s32 3, %v1655
    %v1657 = vrot.slane %v101, %v1656
    %v1659 = vsel %vm109, %v1652, 0
    %v1662 = vsel %vm109, %v1653, 0
    %1664 = vmatprep.subr.mxu0 0.0
    %1665 = vmatpush1.msra.mxu0 0.0
    %1666 = vmatprep.subr.mxu0 0.0
    %1667 = vmatpush1.msra.mxu0 0.0
    %1668 = vmatprep.subr.mxu0 0.0
    %1669 = vmatpush1.msra.mxu0 0.0
    %1670 = vmatprep.subr.mxu0 0.0
    %1671 = vmatpush1.msra.mxu0 0.0
    %1672 = vmatprep.subr.mxu0 0.0
    %1673 = vmatpush1.msra.mxu0 0.0
    %1674 = vmatprep.subr.mxu0 0.0
    %1675 = vmatpush1.msra.mxu0 0.0
    %1676 = vmatprep.subr.mxu0 0.0
    %1677 = vmatpush1.msra.mxu0 0.0
    %1678 = vmatprep.subr.mxu0 0.0
    %1679 = vmatpush1.msra.mxu0 0.0
    %1680 = vmatprep.subr.mxu0 0.0
    %1681 = vmatpush1.msra.mxu0 0.0
    %1682 = vmatprep.subr.mxu0 0.0
    %1683 = vmatpush1.msra.mxu0 0.0
    %1684 = vmatprep.subr.mxu0 0.0
    %1685 = vmatpush1.msra.mxu0 0.0
    %1686 = vmatprep.subr.mxu0 0.0
    %1687 = vmatpush1.msra.mxu0 0.0
    %1688 = vmatprep.subr.mxu0 0.0
    %1689 = vmatpush1.msra.mxu0 %v79
    %1690 = vmatprep.subr.mxu0 0.0
    %1691 = vmatpush1.msra.mxu0 %v70
    %1692 = vmatprep.subr.mxu0 0.0
    %1693 = vmatpush1.msra.mxu0 %v61
    %1694 = vmatprep.subr.mxu0 0.0
    %1695 = vmatpush1.msra.mxu0 %v52
    %1696 = vmatprep.subr.mxu0 0.0
    %1697 = vmatpush2.msra.mxu0 0.0
    %1698 = vmatprep.subr.mxu0 0.0
    %1699 = vmatpush2.msra.mxu0 0.0
    %1700 = vmatprep.subr.mxu0 0.0
    %1701 = vmatpush2.msra.mxu0 0.0
    %1702 = vmatprep.subr.mxu0 0.0
    %1703 = vmatpush2.msra.mxu0 0.0
    %1704 = vmatprep.subr.mxu0 0.0
    %1705 = vmatpush2.msra.mxu0 0.0
    %1706 = vmatprep.subr.mxu0 0.0
    %1707 = vmatpush2.msra.mxu0 0.0
    %1708 = vmatprep.subr.mxu0 0.0
    %1709 = vmatpush2.msra.mxu0 0.0
    %1710 = vmatprep.subr.mxu0 0.0
    %1711 = vmatpush2.msra.mxu0 0.0
    %1712 = vmatprep.subr.mxu0 0.0
    %1713 = vmatpush2.msra.mxu0 0.0
    %1714 = vmatprep.subr.mxu0 0.0
    %1715 = vmatpush2.msra.mxu0 0.0
    %1716 = vmatprep.subr.mxu0 0.0
    %1717 = vmatpush2.msra.mxu0 0.0
    %1718 = vmatprep.subr.mxu0 0.0
    %1719 = vmatpush2.msra.mxu0 0.0
    %1720 = vmatprep.subr.mxu0 0.0
    %1721 = vmatpush2.msra.mxu0 0.0
    %1722 = vmatprep.subr.mxu0 0.0
    %1723 = vmatpush2.msra.mxu0 0.0
    %1724 = vmatprep.subr.mxu0 0.0
    %1725 = vmatpush2.msra.mxu0 0.0
    %1726 = vmatprep.subr.mxu0 0.0
    %1727 = vmatpush2.msra.mxu0 0.0
    %1728 = vmatprep.mubr.f32.mxu0 0.0
    %1729 = vmatmul.mubr.f32.gmra.mxu0 %v1659
    %v1730 = vpop.f32.mrf.mxu0
    %v1731 = vadd.f32 %v1657, %v1730
    %v1732 = vpop.f32.mrf.mxu0
    %1733 = vmatprep.mubr.f32.mxu0 0.0
    %1734 = vmatmul.mubr.f32.gmra.mxu0 %v1662
    %v1735 = vpop.f32.mrf.mxu0
    %v1736 = vadd.f32 %v1657, %v1735
    %v1737 = vpop.f32.mrf.mxu0
    %1738 = vdwg.mxu0
    %v1739 = vadd.f32 %v41, %v1731
    %v1740 = vadd.f32 %v42, %v1736
    %v1741 = vsel %vm109, %v1739, 0.0
    %1742 = vadd.xlane.f32.xlu0 %v1741
    %v1743 = vpop.xlane.xlu0 %1742
    %v1744 = vsel %vm109, %v1740, 0.0
    %1745 = vadd.xlane.f32.xlu0 %v1744
    %v1746 = vpop.xlane.xlu0 %1745
    %v1747 = vrcp.pop 32.0
    %v1748 = vmul.f32 %v1743, %v1747
    %v1749 = vmul.f32 %v1746, %v1747
    %v1750 = vsub.f32 %v1739, %v1748
    %v1751 = vsub.f32 %v1740, %v1749
    %v1752 = vmul.f32 %v1750, %v1750
    %v1753 = vmul.f32 %v1751, %v1751
    %v1754 = vsel %vm109, %v1752, 0.0
    %1755 = vadd.xlane.f32.xlu0 %v1754
    %v1756 = vpop.xlane.xlu0 %1755
    %v1757 = vsel %vm109, %v1753, 0.0
    %1758 = vadd.xlane.f32.xlu0 %v1757
    %v1759 = vpop.xlane.xlu0 %1758
    %v1760 = vmul.f32 %v1756, %v1747
    %v1761 = vmul.f32 %v1759, %v1747
    %v1762 = vadd.f32 %v1760, 1e-05
    %v1763 = vadd.f32 %v1761, 1e-05
    %v1764 = vrsqrt.pop %v1762
    %v1765 = vrsqrt.pop %v1763
    %v1766 = vmul.f32 %v1750, %v1764
    %v1767 = vmul.f32 %v1751, %v1765
    %v1768 = vlaneseq
    %v1769 = vshrl.u32 %v1768, 7
    %v1770 = vsub.s32 4, %v1769
    %v1771 = vrot.slane %v101, %v1770
    %v1772 = vmul.f32 %v1766, %v1771
    %v1773 = vmul.f32 %v1767, %v1771
    %v1774 = vlaneseq
    %v1775 = vshrl.u32 %v1774, 7
    %v1776 = vsub.s32 5, %v1775
    %v1777 = vrot.slane %v101, %v1776
    %v1778 = vadd.f32 %v1772, %v1777
    %v1779 = vadd.f32 %v1773, %v1777
    %v1780 = vlaneseq
    %v1781 = vshrl.u32 %v1780, 7
    %v1782 = vsub.s32 6, %v1781
    %v1783 = vrot.slane %v101, %v1782
    %v1785 = vsel %vm109, %v1778, 0
    %v1788 = vsel %vm109, %v1779, 0
    %1790 = vmatprep.subr.mxu0 0.0
    %1791 = vmatpush1.msra.mxu0 0.0
    %1792 = vmatprep.subr.mxu0 0.0
    %1793 = vmatpush1.msra.mxu0 0.0
    %1794 = vmatprep.subr.mxu0 0.0
    %1795 = vmatpush1.msra.mxu0 0.0
    %1796 = vmatprep.subr.mxu0 0.0
    %1797 = vmatpush1.msra.mxu0 0.0
    %1798 = vmatprep.subr.mxu0 0.0
    %1799 = vmatpush1.msra.mxu0 0.0
    %1800 = vmatprep.subr.mxu0 0.0
    %1801 = vmatpush1.msra.mxu0 0.0
    %1802 = vmatprep.subr.mxu0 0.0
    %1803 = vmatpush1.msra.mxu0 0.0
    %1804 = vmatprep.subr.mxu0 0.0
    %1805 = vmatpush1.msra.mxu0 0.0
    %1806 = vmatprep.subr.mxu0 0.0
    %1807 = vmatpush1.msra.mxu0 0.0
    %1808 = vmatprep.subr.mxu0 0.0
    %1809 = vmatpush1.msra.mxu0 0.0
    %1810 = vmatprep.subr.mxu0 0.0
    %1811 = vmatpush1.msra.mxu0 0.0
    %1812 = vmatprep.subr.mxu0 0.0
    %1813 = vmatpush1.msra.mxu0 0.0
    %1814 = vmatprep.subr.mxu0 0.0
    %1815 = vmatpush1.msra.mxu0 %v80
    %1816 = vmatprep.subr.mxu0 0.0
    %1817 = vmatpush1.msra.mxu0 %v71
    %1818 = vmatprep.subr.mxu0 0.0
    %1819 = vmatpush1.msra.mxu0 %v62
    %1820 = vmatprep.subr.mxu0 0.0
    %1821 = vmatpush1.msra.mxu0 %v53
    %1822 = vmatprep.subr.mxu0 0.0
    %1823 = vmatpush2.msra.mxu0 0.0
    %1824 = vmatprep.subr.mxu0 0.0
    %1825 = vmatpush2.msra.mxu0 0.0
    %1826 = vmatprep.subr.mxu0 0.0
    %1827 = vmatpush2.msra.mxu0 0.0
    %1828 = vmatprep.subr.mxu0 0.0
    %1829 = vmatpush2.msra.mxu0 0.0
    %1830 = vmatprep.subr.mxu0 0.0
    %1831 = vmatpush2.msra.mxu0 0.0
    %1832 = vmatprep.subr.mxu0 0.0
    %1833 = vmatpush2.msra.mxu0 0.0
    %1834 = vmatprep.subr.mxu0 0.0
    %1835 = vmatpush2.msra.mxu0 0.0
    %1836 = vmatprep.subr.mxu0 0.0
    %1837 = vmatpush2.msra.mxu0 0.0
    %1838 = vmatprep.subr.mxu0 0.0
    %1839 = vmatpush2.msra.mxu0 0.0
    %1840 = vmatprep.subr.mxu0 0.0
    %1841 = vmatpush2.msra.mxu0 0.0
    %1842 = vmatprep.subr.mxu0 0.0
    %1843 = vmatpush2.msra.mxu0 0.0
    %1844 = vmatprep.subr.mxu0 0.0
    %1845 = vmatpush2.msra.mxu0 0.0
    %1846 = vmatprep.subr.mxu0 0.0
    %1847 = vmatpush2.msra.mxu0 0.0
    %1848 = vmatprep.subr.mxu0 0.0
    %1849 = vmatpush2.msra.mxu0 0.0
    %1850 = vmatprep.subr.mxu0 0.0
    %1851 = vmatpush2.msra.mxu0 0.0
    %1852 = vmatprep.subr.mxu0 0.0
    %1853 = vmatpush2.msra.mxu0 0.0
    %1854 = vmatprep.mubr.f32.mxu0 0.0
    %1855 = vmatmul.mubr.f32.gmra.mxu0 %v1785
    %v1856 = vpop.f32.mrf.mxu0
    %v1857 = vadd.f32 %v1783, %v1856
    %v1858 = vpop.f32.mrf.mxu0
    %1859 = vmatprep.mubr.f32.mxu0 0.0
    %1860 = vmatmul.mubr.f32.gmra.mxu0 %v1788
    %v1861 = vpop.f32.mrf.mxu0
    %v1862 = vadd.f32 %v1783, %v1861
    %v1863 = vpop.f32.mrf.mxu0
    %1864 = vdwg.mxu0
    %v1865 = vmul.f32 %v1857, 0.35355338
    %v1866 = vmul.f32 %v1862, 0.35355338
    %v1867 = vlaneseq
    %v1868 = vshrl.u32 %v1867, 7
    %v1869 = vsub.s32 7, %v1868
    %v1870 = vrot.slane %v101, %v1869
    %v1872 = vsel %vm109, %v43, 0
    %v1875 = vsel %vm109, %v44, 0
    %1877 = vmatprep.subr.mxu0 0.0
    %1878 = vmatpush1.msra.mxu0 0.0
    %1879 = vmatprep.subr.mxu0 0.0
    %1880 = vmatpush1.msra.mxu0 0.0
    %1881 = vmatprep.subr.mxu0 0.0
    %1882 = vmatpush1.msra.mxu0 0.0
    %1883 = vmatprep.subr.mxu0 0.0
    %1884 = vmatpush1.msra.mxu0 0.0
    %1885 = vmatprep.subr.mxu0 0.0
    %1886 = vmatpush1.msra.mxu0 0.0
    %1887 = vmatprep.subr.mxu0 0.0
    %1888 = vmatpush1.msra.mxu0 0.0
    %1889 = vmatprep.subr.mxu0 0.0
    %1890 = vmatpush1.msra.mxu0 0.0
    %1891 = vmatprep.subr.mxu0 0.0
    %1892 = vmatpush1.msra.mxu0 0.0
    %1893 = vmatprep.subr.mxu0 0.0
    %1894 = vmatpush1.msra.mxu0 0.0
    %1895 = vmatprep.subr.mxu0 0.0
    %1896 = vmatpush1.msra.mxu0 0.0
    %1897 = vmatprep.subr.mxu0 0.0
    %1898 = vmatpush1.msra.mxu0 0.0
    %1899 = vmatprep.subr.mxu0 0.0
    %1900 = vmatpush1.msra.mxu0 0.0
    %1901 = vmatprep.subr.mxu0 0.0
    %1902 = vmatpush1.msra.mxu0 %v81
    %1903 = vmatprep.subr.mxu0 0.0
    %1904 = vmatpush1.msra.mxu0 %v72
    %1905 = vmatprep.subr.mxu0 0.0
    %1906 = vmatpush1.msra.mxu0 %v63
    %1907 = vmatprep.subr.mxu0 0.0
    %1908 = vmatpush1.msra.mxu0 %v54
    %1909 = vmatprep.subr.mxu0 0.0
    %1910 = vmatpush2.msra.mxu0 0.0
    %1911 = vmatprep.subr.mxu0 0.0
    %1912 = vmatpush2.msra.mxu0 0.0
    %1913 = vmatprep.subr.mxu0 0.0
    %1914 = vmatpush2.msra.mxu0 0.0
    %1915 = vmatprep.subr.mxu0 0.0
    %1916 = vmatpush2.msra.mxu0 0.0
    %1917 = vmatprep.subr.mxu0 0.0
    %1918 = vmatpush2.msra.mxu0 0.0
    %1919 = vmatprep.subr.mxu0 0.0
    %1920 = vmatpush2.msra.mxu0 0.0
    %1921 = vmatprep.subr.mxu0 0.0
    %1922 = vmatpush2.msra.mxu0 0.0
    %1923 = vmatprep.subr.mxu0 0.0
    %1924 = vmatpush2.msra.mxu0 0.0
    %1925 = vmatprep.subr.mxu0 0.0
    %1926 = vmatpush2.msra.mxu0 0.0
    %1927 = vmatprep.subr.mxu0 0.0
    %1928 = vmatpush2.msra.mxu0 0.0
    %1929 = vmatprep.subr.mxu0 0.0
    %1930 = vmatpush2.msra.mxu0 0.0
    %1931 = vmatprep.subr.mxu0 0.0
    %1932 = vmatpush2.msra.mxu0 0.0
    %1933 = vmatprep.subr.mxu0 0.0
    %1934 = vmatpush2.msra.mxu0 0.0
    %1935 = vmatprep.subr.mxu0 0.0
    %1936 = vmatpush2.msra.mxu0 0.0
    %1937 = vmatprep.subr.mxu0 0.0
    %1938 = vmatpush2.msra.mxu0 0.0
    %1939 = vmatprep.subr.mxu0 0.0
    %1940 = vmatpush2.msra.mxu0 0.0
    %1941 = vmatprep.mubr.f32.mxu0 0.0
    %1942 = vmatmul.mubr.f32.gmra.mxu0 %v1872
    %v1943 = vpop.f32.mrf.mxu0
    %v1944 = vadd.f32 %v1870, %v1943
    %v1945 = vpop.f32.mrf.mxu0
    %1946 = vmatprep.mubr.f32.mxu0 0.0
    %1947 = vmatmul.mubr.f32.gmra.mxu0 %v1875
    %v1948 = vpop.f32.mrf.mxu0
    %v1949 = vadd.f32 %v1870, %v1948
    %v1950 = vpop.f32.mrf.mxu0
    %1951 = vdwg.mxu0
    %v1952 = vlaneseq
    %v1953 = vshrl.u32 %v1952, 7
    %v1954 = vsub.s32 0, %v1953
    %v1955 = vrot.slane %v102, %v1954
    %1956 = vmatprep.subr.mxu0 0.0
    %1957 = vmatpush1.msra.mxu0 0.0
    %1958 = vmatprep.subr.mxu0 0.0
    %1959 = vmatpush1.msra.mxu0 0.0
    %1960 = vmatprep.subr.mxu0 0.0
    %1961 = vmatpush1.msra.mxu0 0.0
    %1962 = vmatprep.subr.mxu0 0.0
    %1963 = vmatpush1.msra.mxu0 0.0
    %1964 = vmatprep.subr.mxu0 0.0
    %1965 = vmatpush1.msra.mxu0 0.0
    %1966 = vmatprep.subr.mxu0 0.0
    %1967 = vmatpush1.msra.mxu0 0.0
    %1968 = vmatprep.subr.mxu0 0.0
    %1969 = vmatpush1.msra.mxu0 0.0
    %1970 = vmatprep.subr.mxu0 0.0
    %1971 = vmatpush1.msra.mxu0 0.0
    %1972 = vmatprep.subr.mxu0 0.0
    %1973 = vmatpush1.msra.mxu0 0.0
    %1974 = vmatprep.subr.mxu0 0.0
    %1975 = vmatpush1.msra.mxu0 0.0
    %1976 = vmatprep.subr.mxu0 0.0
    %1977 = vmatpush1.msra.mxu0 0.0
    %1978 = vmatprep.subr.mxu0 0.0
    %1979 = vmatpush1.msra.mxu0 0.0
    %1980 = vmatprep.subr.mxu0 0.0
    %1981 = vmatpush1.msra.mxu0 %v82
    %1982 = vmatprep.subr.mxu0 0.0
    %1983 = vmatpush1.msra.mxu0 %v73
    %1984 = vmatprep.subr.mxu0 0.0
    %1985 = vmatpush1.msra.mxu0 %v64
    %1986 = vmatprep.subr.mxu0 0.0
    %1987 = vmatpush1.msra.mxu0 %v55
    %1988 = vmatprep.subr.mxu0 0.0
    %1989 = vmatpush2.msra.mxu0 0.0
    %1990 = vmatprep.subr.mxu0 0.0
    %1991 = vmatpush2.msra.mxu0 0.0
    %1992 = vmatprep.subr.mxu0 0.0
    %1993 = vmatpush2.msra.mxu0 0.0
    %1994 = vmatprep.subr.mxu0 0.0
    %1995 = vmatpush2.msra.mxu0 0.0
    %1996 = vmatprep.subr.mxu0 0.0
    %1997 = vmatpush2.msra.mxu0 0.0
    %1998 = vmatprep.subr.mxu0 0.0
    %1999 = vmatpush2.msra.mxu0 0.0
    %2000 = vmatprep.subr.mxu0 0.0
    %2001 = vmatpush2.msra.mxu0 0.0
    %2002 = vmatprep.subr.mxu0 0.0
    %2003 = vmatpush2.msra.mxu0 0.0
    %2004 = vmatprep.subr.mxu0 0.0
    %2005 = vmatpush2.msra.mxu0 0.0
    %2006 = vmatprep.subr.mxu0 0.0
    %2007 = vmatpush2.msra.mxu0 0.0
    %2008 = vmatprep.subr.mxu0 0.0
    %2009 = vmatpush2.msra.mxu0 0.0
    %2010 = vmatprep.subr.mxu0 0.0
    %2011 = vmatpush2.msra.mxu0 0.0
    %2012 = vmatprep.subr.mxu0 0.0
    %2013 = vmatpush2.msra.mxu0 0.0
    %2014 = vmatprep.subr.mxu0 0.0
    %2015 = vmatpush2.msra.mxu0 0.0
    %2016 = vmatprep.subr.mxu0 0.0
    %2017 = vmatpush2.msra.mxu0 0.0
    %2018 = vmatprep.subr.mxu0 0.0
    %2019 = vmatpush2.msra.mxu0 0.0
    %2020 = vmatprep.mubr.f32.mxu0 0.0
    %2021 = vmatmul.mubr.f32.gmra.mxu0 %v1872
    %v2022 = vpop.f32.mrf.mxu0
    %v2023 = vadd.f32 %v1955, %v2022
    %v2024 = vpop.f32.mrf.mxu0
    %2025 = vmatprep.mubr.f32.mxu0 0.0
    %2026 = vmatmul.mubr.f32.gmra.mxu0 %v1875
    %v2027 = vpop.f32.mrf.mxu0
    %v2028 = vadd.f32 %v1955, %v2027
    %v2029 = vpop.f32.mrf.mxu0
    %2030 = vdwg.mxu0
    %v2031 = vmul.f32 %v1865, %v355
    %v2032 = vmul.f32 %v1866, %v355
    %v2034 = vsel %vm109, %v2031, 0
    %v2037 = vsel %vm109, %v1944, 0
    %2039 = vmatprep.subr.mxu0 0.0
    %2040 = vmatpush1.xpose.msra.mxu0 0.0
    %2041 = vmatprep.subr.mxu0 0.0
    %2042 = vmatpush1.xpose.msra.mxu0 0.0
    %2043 = vmatprep.subr.mxu0 0.0
    %2044 = vmatpush1.xpose.msra.mxu0 0.0
    %2045 = vmatprep.subr.mxu0 0.0
    %2046 = vmatpush1.xpose.msra.mxu0 0.0
    %2047 = vmatprep.subr.mxu0 0.0
    %2048 = vmatpush1.xpose.msra.mxu0 0.0
    %2049 = vmatprep.subr.mxu0 0.0
    %2050 = vmatpush1.xpose.msra.mxu0 0.0
    %2051 = vmatprep.subr.mxu0 0.0
    %2052 = vmatpush1.xpose.msra.mxu0 0.0
    %2053 = vmatprep.subr.mxu0 0.0
    %2054 = vmatpush1.xpose.msra.mxu0 0.0
    %2055 = vmatprep.subr.mxu0 0.0
    %2056 = vmatpush1.xpose.msra.mxu0 0.0
    %2057 = vmatprep.subr.mxu0 0.0
    %2058 = vmatpush1.xpose.msra.mxu0 0.0
    %2059 = vmatprep.subr.mxu0 0.0
    %2060 = vmatpush1.xpose.msra.mxu0 0.0
    %2061 = vmatprep.subr.mxu0 0.0
    %2062 = vmatpush1.xpose.msra.mxu0 0.0
    %2063 = vmatprep.subr.mxu0 0.0
    %2064 = vmatpush1.xpose.msra.mxu0 0.0
    %2065 = vmatprep.subr.mxu0 0.0
    %2066 = vmatpush1.xpose.msra.mxu0 0.0
    %2067 = vmatprep.subr.mxu0 0.0
    %2068 = vmatpush1.xpose.msra.mxu0 0.0
    %2069 = vmatprep.subr.mxu0 0.0
    %2070 = vmatpush1.xpose.msra.mxu0 %v2037
    %2071 = vmatprep.subr.mxu0 0.0
    %2072 = vmatpush2.xpose.msra.mxu0 0.0
    %2073 = vmatprep.subr.mxu0 0.0
    %2074 = vmatpush2.xpose.msra.mxu0 0.0
    %2075 = vmatprep.subr.mxu0 0.0
    %2076 = vmatpush2.xpose.msra.mxu0 0.0
    %2077 = vmatprep.subr.mxu0 0.0
    %2078 = vmatpush2.xpose.msra.mxu0 0.0
    %2079 = vmatprep.subr.mxu0 0.0
    %2080 = vmatpush2.xpose.msra.mxu0 0.0
    %2081 = vmatprep.subr.mxu0 0.0
    %2082 = vmatpush2.xpose.msra.mxu0 0.0
    %2083 = vmatprep.subr.mxu0 0.0
    %2084 = vmatpush2.xpose.msra.mxu0 0.0
    %2085 = vmatprep.subr.mxu0 0.0
    %2086 = vmatpush2.xpose.msra.mxu0 0.0
    %2087 = vmatprep.subr.mxu0 0.0
    %2088 = vmatpush2.xpose.msra.mxu0 0.0
    %2089 = vmatprep.subr.mxu0 0.0
    %2090 = vmatpush2.xpose.msra.mxu0 0.0
    %2091 = vmatprep.subr.mxu0 0.0
    %2092 = vmatpush2.xpose.msra.mxu0 0.0
    %2093 = vmatprep.subr.mxu0 0.0
    %2094 = vmatpush2.xpose.msra.mxu0 0.0
    %2095 = vmatprep.subr.mxu0 0.0
    %2096 = vmatpush2.xpose.msra.mxu0 0.0
    %2097 = vmatprep.subr.mxu0 0.0
    %2098 = vmatpush2.xpose.msra.mxu0 0.0
    %2099 = vmatprep.subr.mxu0 0.0
    %2100 = vmatpush2.xpose.msra.mxu0 0.0
    %2101 = vmatprep.subr.mxu0 0.0
    %2102 = vmatpush2.xpose.msra.mxu0 0.0
    %2103 = vmatprep.mubr.f32.mxu0 0.0
    %2104 = vmatmul.mubr.f32.gmra.mxu0 %v2034
    %v2105 = vpop.f32.mrf.mxu0
    %v2106 = vadd.f32 %v47, %v2105
    %v2107 = vpop.f32.mrf.mxu0
    %2108 = vdwg.mxu0
    %v2110 = vsel %vm109, %v2032, 0
    %v2113 = vsel %vm109, %v1949, 0
    %2115 = vmatprep.subr.mxu0 0.0
    %2116 = vmatpush1.xpose.msra.mxu0 0.0
    %2117 = vmatprep.subr.mxu0 0.0
    %2118 = vmatpush1.xpose.msra.mxu0 0.0
    %2119 = vmatprep.subr.mxu0 0.0
    %2120 = vmatpush1.xpose.msra.mxu0 0.0
    %2121 = vmatprep.subr.mxu0 0.0
    %2122 = vmatpush1.xpose.msra.mxu0 0.0
    %2123 = vmatprep.subr.mxu0 0.0
    %2124 = vmatpush1.xpose.msra.mxu0 0.0
    %2125 = vmatprep.subr.mxu0 0.0
    %2126 = vmatpush1.xpose.msra.mxu0 0.0
    %2127 = vmatprep.subr.mxu0 0.0
    %2128 = vmatpush1.xpose.msra.mxu0 0.0
    %2129 = vmatprep.subr.mxu0 0.0
    %2130 = vmatpush1.xpose.msra.mxu0 0.0
    %2131 = vmatprep.subr.mxu0 0.0
    %2132 = vmatpush1.xpose.msra.mxu0 0.0
    %2133 = vmatprep.subr.mxu0 0.0
    %2134 = vmatpush1.xpose.msra.mxu0 0.0
    %2135 = vmatprep.subr.mxu0 0.0
    %2136 = vmatpush1.xpose.msra.mxu0 0.0
    %2137 = vmatprep.subr.mxu0 0.0
    %2138 = vmatpush1.xpose.msra.mxu0 0.0
    %2139 = vmatprep.subr.mxu0 0.0
    %2140 = vmatpush1.xpose.msra.mxu0 0.0
    %2141 = vmatprep.subr.mxu0 0.0
    %2142 = vmatpush1.xpose.msra.mxu0 0.0
    %2143 = vmatprep.subr.mxu0 0.0
    %2144 = vmatpush1.xpose.msra.mxu0 0.0
    %2145 = vmatprep.subr.mxu0 0.0
    %2146 = vmatpush1.xpose.msra.mxu0 %v2113
    %2147 = vmatprep.subr.mxu0 0.0
    %2148 = vmatpush2.xpose.msra.mxu0 0.0
    %2149 = vmatprep.subr.mxu0 0.0
    %2150 = vmatpush2.xpose.msra.mxu0 0.0
    %2151 = vmatprep.subr.mxu0 0.0
    %2152 = vmatpush2.xpose.msra.mxu0 0.0
    %2153 = vmatprep.subr.mxu0 0.0
    %2154 = vmatpush2.xpose.msra.mxu0 0.0
    %2155 = vmatprep.subr.mxu0 0.0
    %2156 = vmatpush2.xpose.msra.mxu0 0.0
    %2157 = vmatprep.subr.mxu0 0.0
    %2158 = vmatpush2.xpose.msra.mxu0 0.0
    %2159 = vmatprep.subr.mxu0 0.0
    %2160 = vmatpush2.xpose.msra.mxu0 0.0
    %2161 = vmatprep.subr.mxu0 0.0
    %2162 = vmatpush2.xpose.msra.mxu0 0.0
    %2163 = vmatprep.subr.mxu0 0.0
    %2164 = vmatpush2.xpose.msra.mxu0 0.0
    %2165 = vmatprep.subr.mxu0 0.0
    %2166 = vmatpush2.xpose.msra.mxu0 0.0
    %2167 = vmatprep.subr.mxu0 0.0
    %2168 = vmatpush2.xpose.msra.mxu0 0.0
    %2169 = vmatprep.subr.mxu0 0.0
    %2170 = vmatpush2.xpose.msra.mxu0 0.0
    %2171 = vmatprep.subr.mxu0 0.0
    %2172 = vmatpush2.xpose.msra.mxu0 0.0
    %2173 = vmatprep.subr.mxu0 0.0
    %2174 = vmatpush2.xpose.msra.mxu0 0.0
    %2175 = vmatprep.subr.mxu0 0.0
    %2176 = vmatpush2.xpose.msra.mxu0 0.0
    %2177 = vmatprep.subr.mxu0 0.0
    %2178 = vmatpush2.xpose.msra.mxu0 0.0
    %2179 = vmatprep.mubr.f32.mxu0 0.0
    %2180 = vmatmul.mubr.f32.gmra.mxu0 %v2110
    %v2181 = vpop.f32.mrf.mxu0
    %v2182 = vadd.f32 %v48, %v2181
    %v2183 = vpop.f32.mrf.mxu0
    %2184 = vdwg.mxu0
    %v2185 = vsel %vm510, %v2106, -inf
    %2186 = vmax.xlane.f32.xlu0 %v2185
    %v2187 = vpop.xlane.xlu0 %2186
    %v2188 = vsel %vm510, %v2182, -inf
    %2189 = vmax.xlane.f32.xlu0 %v2188
    %v2190 = vpop.xlane.xlu0 %2189
    %v2191 = vsub.f32 %v2106, %v2187
    %v2192 = vsub.f32 %v2182, %v2190
    %v2193 = vmul.f32 %v2191, 1.442695
    %v2194 = vpow.pop %v2193
    %v2195 = vmul.f32 %v2192, 1.442695
    %v2196 = vpow.pop %v2195
    %v2197 = vsel %vm510, %v2194, 0.0
    %2198 = vadd.xlane.f32.xlu0 %v2197
    %v2199 = vpop.xlane.xlu0 %2198
    %v2200 = vsel %vm510, %v2196, 0.0
    %2201 = vadd.xlane.f32.xlu0 %v2200
    %v2202 = vpop.xlane.xlu0 %2201
    %v2203 = vrcp.pop %v2199
    %v2204 = vrcp.pop %v2202
    %v2205 = vmul.f32 %v2194, %v2203
    %v2206 = vmul.f32 %v2196, %v2204
    %v2207 = vmul.f32 %v2023, %v355
    %v2208 = vmul.f32 %v2028, %v355
    %v2209 = vmul.f32 %v1865, %v539
    %v2210 = vmul.f32 %v1866, %v539
    %v2212 = vsel %vm109, %v2209, 0
    %2214 = vmatprep.subr.mxu0 0.0
    %2215 = vmatpush1.xpose.msra.mxu0 0.0
    %2216 = vmatprep.subr.mxu0 0.0
    %2217 = vmatpush1.xpose.msra.mxu0 0.0
    %2218 = vmatprep.subr.mxu0 0.0
    %2219 = vmatpush1.xpose.msra.mxu0 0.0
    %2220 = vmatprep.subr.mxu0 0.0
    %2221 = vmatpush1.xpose.msra.mxu0 0.0
    %2222 = vmatprep.subr.mxu0 0.0
    %2223 = vmatpush1.xpose.msra.mxu0 0.0
    %2224 = vmatprep.subr.mxu0 0.0
    %2225 = vmatpush1.xpose.msra.mxu0 0.0
    %2226 = vmatprep.subr.mxu0 0.0
    %2227 = vmatpush1.xpose.msra.mxu0 0.0
    %2228 = vmatprep.subr.mxu0 0.0
    %2229 = vmatpush1.xpose.msra.mxu0 0.0
    %2230 = vmatprep.subr.mxu0 0.0
    %2231 = vmatpush1.xpose.msra.mxu0 0.0
    %2232 = vmatprep.subr.mxu0 0.0
    %2233 = vmatpush1.xpose.msra.mxu0 0.0
    %2234 = vmatprep.subr.mxu0 0.0
    %2235 = vmatpush1.xpose.msra.mxu0 0.0
    %2236 = vmatprep.subr.mxu0 0.0
    %2237 = vmatpush1.xpose.msra.mxu0 0.0
    %2238 = vmatprep.subr.mxu0 0.0
    %2239 = vmatpush1.xpose.msra.mxu0 0.0
    %2240 = vmatprep.subr.mxu0 0.0
    %2241 = vmatpush1.xpose.msra.mxu0 0.0
    %2242 = vmatprep.subr.mxu0 0.0
    %2243 = vmatpush1.xpose.msra.mxu0 0.0
    %2244 = vmatprep.subr.mxu0 0.0
    %2245 = vmatpush1.xpose.msra.mxu0 %v2037
    %2246 = vmatprep.subr.mxu0 0.0
    %2247 = vmatpush2.xpose.msra.mxu0 0.0
    %2248 = vmatprep.subr.mxu0 0.0
    %2249 = vmatpush2.xpose.msra.mxu0 0.0
    %2250 = vmatprep.subr.mxu0 0.0
    %2251 = vmatpush2.xpose.msra.mxu0 0.0
    %2252 = vmatprep.subr.mxu0 0.0
    %2253 = vmatpush2.xpose.msra.mxu0 0.0
    %2254 = vmatprep.subr.mxu0 0.0
    %2255 = vmatpush2.xpose.msra.mxu0 0.0
    %2256 = vmatprep.subr.mxu0 0.0
    %2257 = vmatpush2.xpose.msra.mxu0 0.0
    %2258 = vmatprep.subr.mxu0 0.0
    %2259 = vmatpush2.xpose.msra.mxu0 0.0
    %2260 = vmatprep.subr.mxu0 0.0
    %2261 = vmatpush2.xpose.msra.mxu0 0.0
    %2262 = vmatprep.subr.mxu0 0.0
    %2263 = vmatpush2.xpose.msra.mxu0 0.0
    %2264 = vmatprep.subr.mxu0 0.0
    %2265 = vmatpush2.xpose.msra.mxu0 0.0
    %2266 = vmatprep.subr.mxu0 0.0
    %2267 = vmatpush2.xpose.msra.mxu0 0.0
    %2268 = vmatprep.subr.mxu0 0.0
    %2269 = vmatpush2.xpose.msra.mxu0 0.0
    %2270 = vmatprep.subr.mxu0 0.0
    %2271 = vmatpush2.xpose.msra.mxu0 0.0
    %2272 = vmatprep.subr.mxu0 0.0
    %2273 = vmatpush2.xpose.msra.mxu0 0.0
    %2274 = vmatprep.subr.mxu0 0.0
    %2275 = vmatpush2.xpose.msra.mxu0 0.0
    %2276 = vmatprep.subr.mxu0 0.0
    %2277 = vmatpush2.xpose.msra.mxu0 0.0
    %2278 = vmatprep.mubr.f32.mxu0 0.0
    %2279 = vmatmul.mubr.f32.gmra.mxu0 %v2212
    %v2280 = vpop.f32.mrf.mxu0
    %v2281 = vadd.f32 %v47, %v2280
    %v2282 = vpop.f32.mrf.mxu0
    %2283 = vdwg.mxu0
    %v2285 = vsel %vm109, %v2210, 0
    %2287 = vmatprep.subr.mxu0 0.0
    %2288 = vmatpush1.xpose.msra.mxu0 0.0
    %2289 = vmatprep.subr.mxu0 0.0
    %2290 = vmatpush1.xpose.msra.mxu0 0.0
    %2291 = vmatprep.subr.mxu0 0.0
    %2292 = vmatpush1.xpose.msra.mxu0 0.0
    %2293 = vmatprep.subr.mxu0 0.0
    %2294 = vmatpush1.xpose.msra.mxu0 0.0
    %2295 = vmatprep.subr.mxu0 0.0
    %2296 = vmatpush1.xpose.msra.mxu0 0.0
    %2297 = vmatprep.subr.mxu0 0.0
    %2298 = vmatpush1.xpose.msra.mxu0 0.0
    %2299 = vmatprep.subr.mxu0 0.0
    %2300 = vmatpush1.xpose.msra.mxu0 0.0
    %2301 = vmatprep.subr.mxu0 0.0
    %2302 = vmatpush1.xpose.msra.mxu0 0.0
    %2303 = vmatprep.subr.mxu0 0.0
    %2304 = vmatpush1.xpose.msra.mxu0 0.0
    %2305 = vmatprep.subr.mxu0 0.0
    %2306 = vmatpush1.xpose.msra.mxu0 0.0
    %2307 = vmatprep.subr.mxu0 0.0
    %2308 = vmatpush1.xpose.msra.mxu0 0.0
    %2309 = vmatprep.subr.mxu0 0.0
    %2310 = vmatpush1.xpose.msra.mxu0 0.0
    %2311 = vmatprep.subr.mxu0 0.0
    %2312 = vmatpush1.xpose.msra.mxu0 0.0
    %2313 = vmatprep.subr.mxu0 0.0
    %2314 = vmatpush1.xpose.msra.mxu0 0.0
    %2315 = vmatprep.subr.mxu0 0.0
    %2316 = vmatpush1.xpose.msra.mxu0 0.0
    %2317 = vmatprep.subr.mxu0 0.0
    %2318 = vmatpush1.xpose.msra.mxu0 %v2113
    %2319 = vmatprep.subr.mxu0 0.0
    %2320 = vmatpush2.xpose.msra.mxu0 0.0
    %2321 = vmatprep.subr.mxu0 0.0
    %2322 = vmatpush2.xpose.msra.mxu0 0.0
    %2323 = vmatprep.subr.mxu0 0.0
    %2324 = vmatpush2.xpose.msra.mxu0 0.0
    %2325 = vmatprep.subr.mxu0 0.0
    %2326 = vmatpush2.xpose.msra.mxu0 0.0
    %2327 = vmatprep.subr.mxu0 0.0
    %2328 = vmatpush2.xpose.msra.mxu0 0.0
    %2329 = vmatprep.subr.mxu0 0.0
    %2330 = vmatpush2.xpose.msra.mxu0 0.0
    %2331 = vmatprep.subr.mxu0 0.0
    %2332 = vmatpush2.xpose.msra.mxu0 0.0
    %2333 = vmatprep.subr.mxu0 0.0
    %2334 = vmatpush2.xpose.msra.mxu0 0.0
    %2335 = vmatprep.subr.mxu0 0.0
    %2336 = vmatpush2.xpose.msra.mxu0 0.0
    %2337 = vmatprep.subr.mxu0 0.0
    %2338 = vmatpush2.xpose.msra.mxu0 0.0
    %2339 = vmatprep.subr.mxu0 0.0
    %2340 = vmatpush2.xpose.msra.mxu0 0.0
    %2341 = vmatprep.subr.mxu0 0.0
    %2342 = vmatpush2.xpose.msra.mxu0 0.0
    %2343 = vmatprep.subr.mxu0 0.0
    %2344 = vmatpush2.xpose.msra.mxu0 0.0
    %2345 = vmatprep.subr.mxu0 0.0
    %2346 = vmatpush2.xpose.msra.mxu0 0.0
    %2347 = vmatprep.subr.mxu0 0.0
    %2348 = vmatpush2.xpose.msra.mxu0 0.0
    %2349 = vmatprep.subr.mxu0 0.0
    %2350 = vmatpush2.xpose.msra.mxu0 0.0
    %2351 = vmatprep.mubr.f32.mxu0 0.0
    %2352 = vmatmul.mubr.f32.gmra.mxu0 %v2285
    %v2353 = vpop.f32.mrf.mxu0
    %v2354 = vadd.f32 %v48, %v2353
    %v2355 = vpop.f32.mrf.mxu0
    %2356 = vdwg.mxu0
    %v2357 = vsel %vm510, %v2281, -inf
    %2358 = vmax.xlane.f32.xlu0 %v2357
    %v2359 = vpop.xlane.xlu0 %2358
    %v2360 = vsel %vm510, %v2354, -inf
    %2361 = vmax.xlane.f32.xlu0 %v2360
    %v2362 = vpop.xlane.xlu0 %2361
    %v2363 = vsub.f32 %v2281, %v2359
    %v2364 = vsub.f32 %v2354, %v2362
    %v2365 = vmul.f32 %v2363, 1.442695
    %v2366 = vpow.pop %v2365
    %v2367 = vmul.f32 %v2364, 1.442695
    %v2368 = vpow.pop %v2367
    %v2369 = vsel %vm510, %v2366, 0.0
    %2370 = vadd.xlane.f32.xlu0 %v2369
    %v2371 = vpop.xlane.xlu0 %2370
    %v2372 = vsel %vm510, %v2368, 0.0
    %2373 = vadd.xlane.f32.xlu0 %v2372
    %v2374 = vpop.xlane.xlu0 %2373
    %v2375 = vrcp.pop %v2371
    %v2376 = vrcp.pop %v2374
    %v2377 = vmul.f32 %v2366, %v2375
    %v2378 = vmul.f32 %v2368, %v2376
    %v2379 = vmul.f32 %v2023, %v539
    %v2380 = vmul.f32 %v2028, %v539
    %v2382 = vsel %vm510, %v2377, 0
    %2384 = vmatprep.subr.mxu0 0.0
    %2385 = vmatpush1.msra.mxu0 0.0
    %2386 = vmatprep.subr.mxu0 0.0
    %2387 = vmatpush1.msra.mxu0 0.0
    %2388 = vmatprep.subr.mxu0 0.0
    %2389 = vmatpush1.msra.mxu0 0.0
    %2390 = vmatprep.subr.mxu0 0.0
    %2391 = vmatpush1.msra.mxu0 0.0
    %2392 = vmatprep.subr.mxu0 0.0
    %2393 = vmatpush1.msra.mxu0 0.0
    %2394 = vmatprep.subr.mxu0 0.0
    %2395 = vmatpush1.msra.mxu0 0.0
    %2396 = vmatprep.subr.mxu0 0.0
    %2397 = vmatpush1.msra.mxu0 0.0
    %2398 = vmatprep.subr.mxu0 0.0
    %2399 = vmatpush1.msra.mxu0 0.0
    %2400 = vmatprep.subr.mxu0 0.0
    %2401 = vmatpush1.msra.mxu0 0.0
    %2402 = vmatprep.subr.mxu0 0.0
    %2403 = vmatpush1.msra.mxu0 0.0
    %2404 = vmatprep.subr.mxu0 0.0
    %2405 = vmatpush1.msra.mxu0 0.0
    %2406 = vmatprep.subr.mxu0 0.0
    %2407 = vmatpush1.msra.mxu0 0.0
    %2408 = vmatprep.subr.mxu0 0.0
    %2409 = vmatpush1.msra.mxu0 0.0
    %2410 = vmatprep.subr.mxu0 0.0
    %2411 = vmatpush1.msra.mxu0 0.0
    %2412 = vmatprep.subr.mxu0 0.0
    %2413 = vmatpush1.msra.mxu0 0.0
    %2414 = vmatprep.subr.mxu0 0.0
    %2415 = vmatpush1.msra.mxu0 %v2379
    %2416 = vmatprep.subr.mxu0 0.0
    %2417 = vmatpush2.msra.mxu0 0.0
    %2418 = vmatprep.subr.mxu0 0.0
    %2419 = vmatpush2.msra.mxu0 0.0
    %2420 = vmatprep.subr.mxu0 0.0
    %2421 = vmatpush2.msra.mxu0 0.0
    %2422 = vmatprep.subr.mxu0 0.0
    %2423 = vmatpush2.msra.mxu0 0.0
    %2424 = vmatprep.subr.mxu0 0.0
    %2425 = vmatpush2.msra.mxu0 0.0
    %2426 = vmatprep.subr.mxu0 0.0
    %2427 = vmatpush2.msra.mxu0 0.0
    %2428 = vmatprep.subr.mxu0 0.0
    %2429 = vmatpush2.msra.mxu0 0.0
    %2430 = vmatprep.subr.mxu0 0.0
    %2431 = vmatpush2.msra.mxu0 0.0
    %2432 = vmatprep.subr.mxu0 0.0
    %2433 = vmatpush2.msra.mxu0 0.0
    %2434 = vmatprep.subr.mxu0 0.0
    %2435 = vmatpush2.msra.mxu0 0.0
    %2436 = vmatprep.subr.mxu0 0.0
    %2437 = vmatpush2.msra.mxu0 0.0
    %2438 = vmatprep.subr.mxu0 0.0
    %2439 = vmatpush2.msra.mxu0 0.0
    %2440 = vmatprep.subr.mxu0 0.0
    %2441 = vmatpush2.msra.mxu0 0.0
    %2442 = vmatprep.subr.mxu0 0.0
    %2443 = vmatpush2.msra.mxu0 0.0
    %2444 = vmatprep.subr.mxu0 0.0
    %2445 = vmatpush2.msra.mxu0 0.0
    %2446 = vmatprep.subr.mxu0 0.0
    %2447 = vmatpush2.msra.mxu0 0.0
    %2448 = vmatprep.mubr.f32.mxu0 0.0
    %2449 = vmatmul.mubr.f32.gmra.mxu0 %v2382
    %v2450 = vpop.f32.mrf.mxu0
    %v2451 = vadd.f32 0.0, %v2450
    %v2452 = vpop.f32.mrf.mxu0
    %2453 = vdwg.mxu0
    %v2455 = vsel %vm510, %v2378, 0
    %2457 = vmatprep.subr.mxu0 0.0
    %2458 = vmatpush1.msra.mxu0 0.0
    %2459 = vmatprep.subr.mxu0 0.0
    %2460 = vmatpush1.msra.mxu0 0.0
    %2461 = vmatprep.subr.mxu0 0.0
    %2462 = vmatpush1.msra.mxu0 0.0
    %2463 = vmatprep.subr.mxu0 0.0
    %2464 = vmatpush1.msra.mxu0 0.0
    %2465 = vmatprep.subr.mxu0 0.0
    %2466 = vmatpush1.msra.mxu0 0.0
    %2467 = vmatprep.subr.mxu0 0.0
    %2468 = vmatpush1.msra.mxu0 0.0
    %2469 = vmatprep.subr.mxu0 0.0
    %2470 = vmatpush1.msra.mxu0 0.0
    %2471 = vmatprep.subr.mxu0 0.0
    %2472 = vmatpush1.msra.mxu0 0.0
    %2473 = vmatprep.subr.mxu0 0.0
    %2474 = vmatpush1.msra.mxu0 0.0
    %2475 = vmatprep.subr.mxu0 0.0
    %2476 = vmatpush1.msra.mxu0 0.0
    %2477 = vmatprep.subr.mxu0 0.0
    %2478 = vmatpush1.msra.mxu0 0.0
    %2479 = vmatprep.subr.mxu0 0.0
    %2480 = vmatpush1.msra.mxu0 0.0
    %2481 = vmatprep.subr.mxu0 0.0
    %2482 = vmatpush1.msra.mxu0 0.0
    %2483 = vmatprep.subr.mxu0 0.0
    %2484 = vmatpush1.msra.mxu0 0.0
    %2485 = vmatprep.subr.mxu0 0.0
    %2486 = vmatpush1.msra.mxu0 0.0
    %2487 = vmatprep.subr.mxu0 0.0
    %2488 = vmatpush1.msra.mxu0 %v2380
    %2489 = vmatprep.subr.mxu0 0.0
    %2490 = vmatpush2.msra.mxu0 0.0
    %2491 = vmatprep.subr.mxu0 0.0
    %2492 = vmatpush2.msra.mxu0 0.0
    %2493 = vmatprep.subr.mxu0 0.0
    %2494 = vmatpush2.msra.mxu0 0.0
    %2495 = vmatprep.subr.mxu0 0.0
    %2496 = vmatpush2.msra.mxu0 0.0
    %2497 = vmatprep.subr.mxu0 0.0
    %2498 = vmatpush2.msra.mxu0 0.0
    %2499 = vmatprep.subr.mxu0 0.0
    %2500 = vmatpush2.msra.mxu0 0.0
    %2501 = vmatprep.subr.mxu0 0.0
    %2502 = vmatpush2.msra.mxu0 0.0
    %2503 = vmatprep.subr.mxu0 0.0
    %2504 = vmatpush2.msra.mxu0 0.0
    %2505 = vmatprep.subr.mxu0 0.0
    %2506 = vmatpush2.msra.mxu0 0.0
    %2507 = vmatprep.subr.mxu0 0.0
    %2508 = vmatpush2.msra.mxu0 0.0
    %2509 = vmatprep.subr.mxu0 0.0
    %2510 = vmatpush2.msra.mxu0 0.0
    %2511 = vmatprep.subr.mxu0 0.0
    %2512 = vmatpush2.msra.mxu0 0.0
    %2513 = vmatprep.subr.mxu0 0.0
    %2514 = vmatpush2.msra.mxu0 0.0
    %2515 = vmatprep.subr.mxu0 0.0
    %2516 = vmatpush2.msra.mxu0 0.0
    %2517 = vmatprep.subr.mxu0 0.0
    %2518 = vmatpush2.msra.mxu0 0.0
    %2519 = vmatprep.subr.mxu0 0.0
    %2520 = vmatpush2.msra.mxu0 0.0
    %2521 = vmatprep.mubr.f32.mxu0 0.0
    %2522 = vmatmul.mubr.f32.gmra.mxu0 %v2455
    %v2523 = vpop.f32.mrf.mxu0
    %v2524 = vadd.f32 0.0, %v2523
    %v2525 = vpop.f32.mrf.mxu0
    %2526 = vdwg.mxu0
    %v2528 = vsel %vm510, %v2205, 0
    %2530 = vmatprep.subr.mxu0 0.0
    %2531 = vmatpush1.msra.mxu0 0.0
    %2532 = vmatprep.subr.mxu0 0.0
    %2533 = vmatpush1.msra.mxu0 0.0
    %2534 = vmatprep.subr.mxu0 0.0
    %2535 = vmatpush1.msra.mxu0 0.0
    %2536 = vmatprep.subr.mxu0 0.0
    %2537 = vmatpush1.msra.mxu0 0.0
    %2538 = vmatprep.subr.mxu0 0.0
    %2539 = vmatpush1.msra.mxu0 0.0
    %2540 = vmatprep.subr.mxu0 0.0
    %2541 = vmatpush1.msra.mxu0 0.0
    %2542 = vmatprep.subr.mxu0 0.0
    %2543 = vmatpush1.msra.mxu0 0.0
    %2544 = vmatprep.subr.mxu0 0.0
    %2545 = vmatpush1.msra.mxu0 0.0
    %2546 = vmatprep.subr.mxu0 0.0
    %2547 = vmatpush1.msra.mxu0 0.0
    %2548 = vmatprep.subr.mxu0 0.0
    %2549 = vmatpush1.msra.mxu0 0.0
    %2550 = vmatprep.subr.mxu0 0.0
    %2551 = vmatpush1.msra.mxu0 0.0
    %2552 = vmatprep.subr.mxu0 0.0
    %2553 = vmatpush1.msra.mxu0 0.0
    %2554 = vmatprep.subr.mxu0 0.0
    %2555 = vmatpush1.msra.mxu0 0.0
    %2556 = vmatprep.subr.mxu0 0.0
    %2557 = vmatpush1.msra.mxu0 0.0
    %2558 = vmatprep.subr.mxu0 0.0
    %2559 = vmatpush1.msra.mxu0 0.0
    %2560 = vmatprep.subr.mxu0 0.0
    %2561 = vmatpush1.msra.mxu0 %v2207
    %2562 = vmatprep.subr.mxu0 0.0
    %2563 = vmatpush2.msra.mxu0 0.0
    %2564 = vmatprep.subr.mxu0 0.0
    %2565 = vmatpush2.msra.mxu0 0.0
    %2566 = vmatprep.subr.mxu0 0.0
    %2567 = vmatpush2.msra.mxu0 0.0
    %2568 = vmatprep.subr.mxu0 0.0
    %2569 = vmatpush2.msra.mxu0 0.0
    %2570 = vmatprep.subr.mxu0 0.0
    %2571 = vmatpush2.msra.mxu0 0.0
    %2572 = vmatprep.subr.mxu0 0.0
    %2573 = vmatpush2.msra.mxu0 0.0
    %2574 = vmatprep.subr.mxu0 0.0
    %2575 = vmatpush2.msra.mxu0 0.0
    %2576 = vmatprep.subr.mxu0 0.0
    %2577 = vmatpush2.msra.mxu0 0.0
    %2578 = vmatprep.subr.mxu0 0.0
    %2579 = vmatpush2.msra.mxu0 0.0
    %2580 = vmatprep.subr.mxu0 0.0
    %2581 = vmatpush2.msra.mxu0 0.0
    %2582 = vmatprep.subr.mxu0 0.0
    %2583 = vmatpush2.msra.mxu0 0.0
    %2584 = vmatprep.subr.mxu0 0.0
    %2585 = vmatpush2.msra.mxu0 0.0
    %2586 = vmatprep.subr.mxu0 0.0
    %2587 = vmatpush2.msra.mxu0 0.0
    %2588 = vmatprep.subr.mxu0 0.0
    %2589 = vmatpush2.msra.mxu0 0.0
    %2590 = vmatprep.subr.mxu0 0.0
    %2591 = vmatpush2.msra.mxu0 0.0
    %2592 = vmatprep.subr.mxu0 0.0
    %2593 = vmatpush2.msra.mxu0 0.0
    %2594 = vmatprep.mubr.f32.mxu0 0.0
    %2595 = vmatmul.mubr.f32.gmra.mxu0 %v2528
    %v2596 = vpop.f32.mrf.mxu0
    %v2597 = vadd.f32 %v2451, %v2596
    %v2598 = vpop.f32.mrf.mxu0
    %2599 = vdwg.mxu0
    %v2601 = vsel %vm510, %v2206, 0
    %2603 = vmatprep.subr.mxu0 0.0
    %2604 = vmatpush1.msra.mxu0 0.0
    %2605 = vmatprep.subr.mxu0 0.0
    %2606 = vmatpush1.msra.mxu0 0.0
    %2607 = vmatprep.subr.mxu0 0.0
    %2608 = vmatpush1.msra.mxu0 0.0
    %2609 = vmatprep.subr.mxu0 0.0
    %2610 = vmatpush1.msra.mxu0 0.0
    %2611 = vmatprep.subr.mxu0 0.0
    %2612 = vmatpush1.msra.mxu0 0.0
    %2613 = vmatprep.subr.mxu0 0.0
    %2614 = vmatpush1.msra.mxu0 0.0
    %2615 = vmatprep.subr.mxu0 0.0
    %2616 = vmatpush1.msra.mxu0 0.0
    %2617 = vmatprep.subr.mxu0 0.0
    %2618 = vmatpush1.msra.mxu0 0.0
    %2619 = vmatprep.subr.mxu0 0.0
    %2620 = vmatpush1.msra.mxu0 0.0
    %2621 = vmatprep.subr.mxu0 0.0
    %2622 = vmatpush1.msra.mxu0 0.0
    %2623 = vmatprep.subr.mxu0 0.0
    %2624 = vmatpush1.msra.mxu0 0.0
    %2625 = vmatprep.subr.mxu0 0.0
    %2626 = vmatpush1.msra.mxu0 0.0
    %2627 = vmatprep.subr.mxu0 0.0
    %2628 = vmatpush1.msra.mxu0 0.0
    %2629 = vmatprep.subr.mxu0 0.0
    %2630 = vmatpush1.msra.mxu0 0.0
    %2631 = vmatprep.subr.mxu0 0.0
    %2632 = vmatpush1.msra.mxu0 0.0
    %2633 = vmatprep.subr.mxu0 0.0
    %2634 = vmatpush1.msra.mxu0 %v2208
    %2635 = vmatprep.subr.mxu0 0.0
    %2636 = vmatpush2.msra.mxu0 0.0
    %2637 = vmatprep.subr.mxu0 0.0
    %2638 = vmatpush2.msra.mxu0 0.0
    %2639 = vmatprep.subr.mxu0 0.0
    %2640 = vmatpush2.msra.mxu0 0.0
    %2641 = vmatprep.subr.mxu0 0.0
    %2642 = vmatpush2.msra.mxu0 0.0
    %2643 = vmatprep.subr.mxu0 0.0
    %2644 = vmatpush2.msra.mxu0 0.0
    %2645 = vmatprep.subr.mxu0 0.0
    %2646 = vmatpush2.msra.mxu0 0.0
    %2647 = vmatprep.subr.mxu0 0.0
    %2648 = vmatpush2.msra.mxu0 0.0
    %2649 = vmatprep.subr.mxu0 0.0
    %2650 = vmatpush2.msra.mxu0 0.0
    %2651 = vmatprep.subr.mxu0 0.0
    %2652 = vmatpush2.msra.mxu0 0.0
    %2653 = vmatprep.subr.mxu0 0.0
    %2654 = vmatpush2.msra.mxu0 0.0
    %2655 = vmatprep.subr.mxu0 0.0
    %2656 = vmatpush2.msra.mxu0 0.0
    %2657 = vmatprep.subr.mxu0 0.0
    %2658 = vmatpush2.msra.mxu0 0.0
    %2659 = vmatprep.subr.mxu0 0.0
    %2660 = vmatpush2.msra.mxu0 0.0
    %2661 = vmatprep.subr.mxu0 0.0
    %2662 = vmatpush2.msra.mxu0 0.0
    %2663 = vmatprep.subr.mxu0 0.0
    %2664 = vmatpush2.msra.mxu0 0.0
    %2665 = vmatprep.subr.mxu0 0.0
    %2666 = vmatpush2.msra.mxu0 0.0
    %2667 = vmatprep.mubr.f32.mxu0 0.0
    %2668 = vmatmul.mubr.f32.gmra.mxu0 %v2601
    %v2669 = vpop.f32.mrf.mxu0
    %v2670 = vadd.f32 %v2524, %v2669
    %v2671 = vpop.f32.mrf.mxu0
    %2672 = vdwg.mxu0
    %v2673 = vmul.f32 %v1865, %v1008
    %v2674 = vmul.f32 %v1866, %v1008
    %v2676 = vsel %vm109, %v2673, 0
    %2678 = vmatprep.subr.mxu0 0.0
    %2679 = vmatpush1.xpose.msra.mxu0 0.0
    %2680 = vmatprep.subr.mxu0 0.0
    %2681 = vmatpush1.xpose.msra.mxu0 0.0
    %2682 = vmatprep.subr.mxu0 0.0
    %2683 = vmatpush1.xpose.msra.mxu0 0.0
    %2684 = vmatprep.subr.mxu0 0.0
    %2685 = vmatpush1.xpose.msra.mxu0 0.0
    %2686 = vmatprep.subr.mxu0 0.0
    %2687 = vmatpush1.xpose.msra.mxu0 0.0
    %2688 = vmatprep.subr.mxu0 0.0
    %2689 = vmatpush1.xpose.msra.mxu0 0.0
    %2690 = vmatprep.subr.mxu0 0.0
    %2691 = vmatpush1.xpose.msra.mxu0 0.0
    %2692 = vmatprep.subr.mxu0 0.0
    %2693 = vmatpush1.xpose.msra.mxu0 0.0
    %2694 = vmatprep.subr.mxu0 0.0
    %2695 = vmatpush1.xpose.msra.mxu0 0.0
    %2696 = vmatprep.subr.mxu0 0.0
    %2697 = vmatpush1.xpose.msra.mxu0 0.0
    %2698 = vmatprep.subr.mxu0 0.0
    %2699 = vmatpush1.xpose.msra.mxu0 0.0
    %2700 = vmatprep.subr.mxu0 0.0
    %2701 = vmatpush1.xpose.msra.mxu0 0.0
    %2702 = vmatprep.subr.mxu0 0.0
    %2703 = vmatpush1.xpose.msra.mxu0 0.0
    %2704 = vmatprep.subr.mxu0 0.0
    %2705 = vmatpush1.xpose.msra.mxu0 0.0
    %2706 = vmatprep.subr.mxu0 0.0
    %2707 = vmatpush1.xpose.msra.mxu0 0.0
    %2708 = vmatprep.subr.mxu0 0.0
    %2709 = vmatpush1.xpose.msra.mxu0 %v2037
    %2710 = vmatprep.subr.mxu0 0.0
    %2711 = vmatpush2.xpose.msra.mxu0 0.0
    %2712 = vmatprep.subr.mxu0 0.0
    %2713 = vmatpush2.xpose.msra.mxu0 0.0
    %2714 = vmatprep.subr.mxu0 0.0
    %2715 = vmatpush2.xpose.msra.mxu0 0.0
    %2716 = vmatprep.subr.mxu0 0.0
    %2717 = vmatpush2.xpose.msra.mxu0 0.0
    %2718 = vmatprep.subr.mxu0 0.0
    %2719 = vmatpush2.xpose.msra.mxu0 0.0
    %2720 = vmatprep.subr.mxu0 0.0
    %2721 = vmatpush2.xpose.msra.mxu0 0.0
    %2722 = vmatprep.subr.mxu0 0.0
    %2723 = vmatpush2.xpose.msra.mxu0 0.0
    %2724 = vmatprep.subr.mxu0 0.0
    %2725 = vmatpush2.xpose.msra.mxu0 0.0
    %2726 = vmatprep.subr.mxu0 0.0
    %2727 = vmatpush2.xpose.msra.mxu0 0.0
    %2728 = vmatprep.subr.mxu0 0.0
    %2729 = vmatpush2.xpose.msra.mxu0 0.0
    %2730 = vmatprep.subr.mxu0 0.0
    %2731 = vmatpush2.xpose.msra.mxu0 0.0
    %2732 = vmatprep.subr.mxu0 0.0
    %2733 = vmatpush2.xpose.msra.mxu0 0.0
    %2734 = vmatprep.subr.mxu0 0.0
    %2735 = vmatpush2.xpose.msra.mxu0 0.0
    %2736 = vmatprep.subr.mxu0 0.0
    %2737 = vmatpush2.xpose.msra.mxu0 0.0
    %2738 = vmatprep.subr.mxu0 0.0
    %2739 = vmatpush2.xpose.msra.mxu0 0.0
    %2740 = vmatprep.subr.mxu0 0.0
    %2741 = vmatpush2.xpose.msra.mxu0 0.0
    %2742 = vmatprep.mubr.f32.mxu0 0.0
    %2743 = vmatmul.mubr.f32.gmra.mxu0 %v2676
    %v2744 = vpop.f32.mrf.mxu0
    %v2745 = vadd.f32 %v47, %v2744
    %v2746 = vpop.f32.mrf.mxu0
    %2747 = vdwg.mxu0
    %v2749 = vsel %vm109, %v2674, 0
    %2751 = vmatprep.subr.mxu0 0.0
    %2752 = vmatpush1.xpose.msra.mxu0 0.0
    %2753 = vmatprep.subr.mxu0 0.0
    %2754 = vmatpush1.xpose.msra.mxu0 0.0
    %2755 = vmatprep.subr.mxu0 0.0
    %2756 = vmatpush1.xpose.msra.mxu0 0.0
    %2757 = vmatprep.subr.mxu0 0.0
    %2758 = vmatpush1.xpose.msra.mxu0 0.0
    %2759 = vmatprep.subr.mxu0 0.0
    %2760 = vmatpush1.xpose.msra.mxu0 0.0
    %2761 = vmatprep.subr.mxu0 0.0
    %2762 = vmatpush1.xpose.msra.mxu0 0.0
    %2763 = vmatprep.subr.mxu0 0.0
    %2764 = vmatpush1.xpose.msra.mxu0 0.0
    %2765 = vmatprep.subr.mxu0 0.0
    %2766 = vmatpush1.xpose.msra.mxu0 0.0
    %2767 = vmatprep.subr.mxu0 0.0
    %2768 = vmatpush1.xpose.msra.mxu0 0.0
    %2769 = vmatprep.subr.mxu0 0.0
    %2770 = vmatpush1.xpose.msra.mxu0 0.0
    %2771 = vmatprep.subr.mxu0 0.0
    %2772 = vmatpush1.xpose.msra.mxu0 0.0
    %2773 = vmatprep.subr.mxu0 0.0
    %2774 = vmatpush1.xpose.msra.mxu0 0.0
    %2775 = vmatprep.subr.mxu0 0.0
    %2776 = vmatpush1.xpose.msra.mxu0 0.0
    %2777 = vmatprep.subr.mxu0 0.0
    %2778 = vmatpush1.xpose.msra.mxu0 0.0
    %2779 = vmatprep.subr.mxu0 0.0
    %2780 = vmatpush1.xpose.msra.mxu0 0.0
    %2781 = vmatprep.subr.mxu0 0.0
    %2782 = vmatpush1.xpose.msra.mxu0 %v2113
    %2783 = vmatprep.subr.mxu0 0.0
    %2784 = vmatpush2.xpose.msra.mxu0 0.0
    %2785 = vmatprep.subr.mxu0 0.0
    %2786 = vmatpush2.xpose.msra.mxu0 0.0
    %2787 = vmatprep.subr.mxu0 0.0
    %2788 = vmatpush2.xpose.msra.mxu0 0.0
    %2789 = vmatprep.subr.mxu0 0.0
    %2790 = vmatpush2.xpose.msra.mxu0 0.0
    %2791 = vmatprep.subr.mxu0 0.0
    %2792 = vmatpush2.xpose.msra.mxu0 0.0
    %2793 = vmatprep.subr.mxu0 0.0
    %2794 = vmatpush2.xpose.msra.mxu0 0.0
    %2795 = vmatprep.subr.mxu0 0.0
    %2796 = vmatpush2.xpose.msra.mxu0 0.0
    %2797 = vmatprep.subr.mxu0 0.0
    %2798 = vmatpush2.xpose.msra.mxu0 0.0
    %2799 = vmatprep.subr.mxu0 0.0
    %2800 = vmatpush2.xpose.msra.mxu0 0.0
    %2801 = vmatprep.subr.mxu0 0.0
    %2802 = vmatpush2.xpose.msra.mxu0 0.0
    %2803 = vmatprep.subr.mxu0 0.0
    %2804 = vmatpush2.xpose.msra.mxu0 0.0
    %2805 = vmatprep.subr.mxu0 0.0
    %2806 = vmatpush2.xpose.msra.mxu0 0.0
    %2807 = vmatprep.subr.mxu0 0.0
    %2808 = vmatpush2.xpose.msra.mxu0 0.0
    %2809 = vmatprep.subr.mxu0 0.0
    %2810 = vmatpush2.xpose.msra.mxu0 0.0
    %2811 = vmatprep.subr.mxu0 0.0
    %2812 = vmatpush2.xpose.msra.mxu0 0.0
    %2813 = vmatprep.subr.mxu0 0.0
    %2814 = vmatpush2.xpose.msra.mxu0 0.0
    %2815 = vmatprep.mubr.f32.mxu0 0.0
    %2816 = vmatmul.mubr.f32.gmra.mxu0 %v2749
    %v2817 = vpop.f32.mrf.mxu0
    %v2818 = vadd.f32 %v48, %v2817
    %v2819 = vpop.f32.mrf.mxu0
    %2820 = vdwg.mxu0
    %v2821 = vsel %vm510, %v2745, -inf
    %2822 = vmax.xlane.f32.xlu0 %v2821
    %v2823 = vpop.xlane.xlu0 %2822
    %v2824 = vsel %vm510, %v2818, -inf
    %2825 = vmax.xlane.f32.xlu0 %v2824
    %v2826 = vpop.xlane.xlu0 %2825
    %v2827 = vsub.f32 %v2745, %v2823
    %v2828 = vsub.f32 %v2818, %v2826
    %v2829 = vmul.f32 %v2827, 1.442695
    %v2830 = vpow.pop %v2829
    %v2831 = vmul.f32 %v2828, 1.442695
    %v2832 = vpow.pop %v2831
    %v2833 = vsel %vm510, %v2830, 0.0
    %2834 = vadd.xlane.f32.xlu0 %v2833
    %v2835 = vpop.xlane.xlu0 %2834
    %v2836 = vsel %vm510, %v2832, 0.0
    %2837 = vadd.xlane.f32.xlu0 %v2836
    %v2838 = vpop.xlane.xlu0 %2837
    %v2839 = vrcp.pop %v2835
    %v2840 = vrcp.pop %v2838
    %v2841 = vmul.f32 %v2830, %v2839
    %v2842 = vmul.f32 %v2832, %v2840
    %v2843 = vmul.f32 %v2023, %v1008
    %v2844 = vmul.f32 %v2028, %v1008
    %v2846 = vsel %vm510, %v2841, 0
    %2848 = vmatprep.subr.mxu0 0.0
    %2849 = vmatpush1.msra.mxu0 0.0
    %2850 = vmatprep.subr.mxu0 0.0
    %2851 = vmatpush1.msra.mxu0 0.0
    %2852 = vmatprep.subr.mxu0 0.0
    %2853 = vmatpush1.msra.mxu0 0.0
    %2854 = vmatprep.subr.mxu0 0.0
    %2855 = vmatpush1.msra.mxu0 0.0
    %2856 = vmatprep.subr.mxu0 0.0
    %2857 = vmatpush1.msra.mxu0 0.0
    %2858 = vmatprep.subr.mxu0 0.0
    %2859 = vmatpush1.msra.mxu0 0.0
    %2860 = vmatprep.subr.mxu0 0.0
    %2861 = vmatpush1.msra.mxu0 0.0
    %2862 = vmatprep.subr.mxu0 0.0
    %2863 = vmatpush1.msra.mxu0 0.0
    %2864 = vmatprep.subr.mxu0 0.0
    %2865 = vmatpush1.msra.mxu0 0.0
    %2866 = vmatprep.subr.mxu0 0.0
    %2867 = vmatpush1.msra.mxu0 0.0
    %2868 = vmatprep.subr.mxu0 0.0
    %2869 = vmatpush1.msra.mxu0 0.0
    %2870 = vmatprep.subr.mxu0 0.0
    %2871 = vmatpush1.msra.mxu0 0.0
    %2872 = vmatprep.subr.mxu0 0.0
    %2873 = vmatpush1.msra.mxu0 0.0
    %2874 = vmatprep.subr.mxu0 0.0
    %2875 = vmatpush1.msra.mxu0 0.0
    %2876 = vmatprep.subr.mxu0 0.0
    %2877 = vmatpush1.msra.mxu0 0.0
    %2878 = vmatprep.subr.mxu0 0.0
    %2879 = vmatpush1.msra.mxu0 %v2843
    %2880 = vmatprep.subr.mxu0 0.0
    %2881 = vmatpush2.msra.mxu0 0.0
    %2882 = vmatprep.subr.mxu0 0.0
    %2883 = vmatpush2.msra.mxu0 0.0
    %2884 = vmatprep.subr.mxu0 0.0
    %2885 = vmatpush2.msra.mxu0 0.0
    %2886 = vmatprep.subr.mxu0 0.0
    %2887 = vmatpush2.msra.mxu0 0.0
    %2888 = vmatprep.subr.mxu0 0.0
    %2889 = vmatpush2.msra.mxu0 0.0
    %2890 = vmatprep.subr.mxu0 0.0
    %2891 = vmatpush2.msra.mxu0 0.0
    %2892 = vmatprep.subr.mxu0 0.0
    %2893 = vmatpush2.msra.mxu0 0.0
    %2894 = vmatprep.subr.mxu0 0.0
    %2895 = vmatpush2.msra.mxu0 0.0
    %2896 = vmatprep.subr.mxu0 0.0
    %2897 = vmatpush2.msra.mxu0 0.0
    %2898 = vmatprep.subr.mxu0 0.0
    %2899 = vmatpush2.msra.mxu0 0.0
    %2900 = vmatprep.subr.mxu0 0.0
    %2901 = vmatpush2.msra.mxu0 0.0
    %2902 = vmatprep.subr.mxu0 0.0
    %2903 = vmatpush2.msra.mxu0 0.0
    %2904 = vmatprep.subr.mxu0 0.0
    %2905 = vmatpush2.msra.mxu0 0.0
    %2906 = vmatprep.subr.mxu0 0.0
    %2907 = vmatpush2.msra.mxu0 0.0
    %2908 = vmatprep.subr.mxu0 0.0
    %2909 = vmatpush2.msra.mxu0 0.0
    %2910 = vmatprep.subr.mxu0 0.0
    %2911 = vmatpush2.msra.mxu0 0.0
    %2912 = vmatprep.mubr.f32.mxu0 0.0
    %2913 = vmatmul.mubr.f32.gmra.mxu0 %v2846
    %v2914 = vpop.f32.mrf.mxu0
    %v2915 = vadd.f32 0.0, %v2914
    %v2916 = vpop.f32.mrf.mxu0
    %2917 = vdwg.mxu0
    %v2919 = vsel %vm510, %v2842, 0
    %2921 = vmatprep.subr.mxu0 0.0
    %2922 = vmatpush1.msra.mxu0 0.0
    %2923 = vmatprep.subr.mxu0 0.0
    %2924 = vmatpush1.msra.mxu0 0.0
    %2925 = vmatprep.subr.mxu0 0.0
    %2926 = vmatpush1.msra.mxu0 0.0
    %2927 = vmatprep.subr.mxu0 0.0
    %2928 = vmatpush1.msra.mxu0 0.0
    %2929 = vmatprep.subr.mxu0 0.0
    %2930 = vmatpush1.msra.mxu0 0.0
    %2931 = vmatprep.subr.mxu0 0.0
    %2932 = vmatpush1.msra.mxu0 0.0
    %2933 = vmatprep.subr.mxu0 0.0
    %2934 = vmatpush1.msra.mxu0 0.0
    %2935 = vmatprep.subr.mxu0 0.0
    %2936 = vmatpush1.msra.mxu0 0.0
    %2937 = vmatprep.subr.mxu0 0.0
    %2938 = vmatpush1.msra.mxu0 0.0
    %2939 = vmatprep.subr.mxu0 0.0
    %2940 = vmatpush1.msra.mxu0 0.0
    %2941 = vmatprep.subr.mxu0 0.0
    %2942 = vmatpush1.msra.mxu0 0.0
    %2943 = vmatprep.subr.mxu0 0.0
    %2944 = vmatpush1.msra.mxu0 0.0
    %2945 = vmatprep.subr.mxu0 0.0
    %2946 = vmatpush1.msra.mxu0 0.0
    %2947 = vmatprep.subr.mxu0 0.0
    %2948 = vmatpush1.msra.mxu0 0.0
    %2949 = vmatprep.subr.mxu0 0.0
    %2950 = vmatpush1.msra.mxu0 0.0
    %2951 = vmatprep.subr.mxu0 0.0
    %2952 = vmatpush1.msra.mxu0 %v2844
    %2953 = vmatprep.subr.mxu0 0.0
    %2954 = vmatpush2.msra.mxu0 0.0
    %2955 = vmatprep.subr.mxu0 0.0
    %2956 = vmatpush2.msra.mxu0 0.0
    %2957 = vmatprep.subr.mxu0 0.0
    %2958 = vmatpush2.msra.mxu0 0.0
    %2959 = vmatprep.subr.mxu0 0.0
    %2960 = vmatpush2.msra.mxu0 0.0
    %2961 = vmatprep.subr.mxu0 0.0
    %2962 = vmatpush2.msra.mxu0 0.0
    %2963 = vmatprep.subr.mxu0 0.0
    %2964 = vmatpush2.msra.mxu0 0.0
    %2965 = vmatprep.subr.mxu0 0.0
    %2966 = vmatpush2.msra.mxu0 0.0
    %2967 = vmatprep.subr.mxu0 0.0
    %2968 = vmatpush2.msra.mxu0 0.0
    %2969 = vmatprep.subr.mxu0 0.0
    %2970 = vmatpush2.msra.mxu0 0.0
    %2971 = vmatprep.subr.mxu0 0.0
    %2972 = vmatpush2.msra.mxu0 0.0
    %2973 = vmatprep.subr.mxu0 0.0
    %2974 = vmatpush2.msra.mxu0 0.0
    %2975 = vmatprep.subr.mxu0 0.0
    %2976 = vmatpush2.msra.mxu0 0.0
    %2977 = vmatprep.subr.mxu0 0.0
    %2978 = vmatpush2.msra.mxu0 0.0
    %2979 = vmatprep.subr.mxu0 0.0
    %2980 = vmatpush2.msra.mxu0 0.0
    %2981 = vmatprep.subr.mxu0 0.0
    %2982 = vmatpush2.msra.mxu0 0.0
    %2983 = vmatprep.subr.mxu0 0.0
    %2984 = vmatpush2.msra.mxu0 0.0
    %2985 = vmatprep.mubr.f32.mxu0 0.0
    %2986 = vmatmul.mubr.f32.gmra.mxu0 %v2919
    %v2987 = vpop.f32.mrf.mxu0
    %v2988 = vadd.f32 0.0, %v2987
    %v2989 = vpop.f32.mrf.mxu0
    %2990 = vdwg.mxu0
    %v2991 = vadd.f32 %v2597, %v2915
    %v2992 = vadd.f32 %v2670, %v2988
    %v2993 = vmul.f32 %v1865, %v1333
    %v2994 = vmul.f32 %v1866, %v1333
    %v2996 = vsel %vm109, %v2993, 0
    %2998 = vmatprep.subr.mxu0 0.0
    %2999 = vmatpush1.xpose.msra.mxu0 0.0
    %3000 = vmatprep.subr.mxu0 0.0
    %3001 = vmatpush1.xpose.msra.mxu0 0.0
    %3002 = vmatprep.subr.mxu0 0.0
    %3003 = vmatpush1.xpose.msra.mxu0 0.0
    %3004 = vmatprep.subr.mxu0 0.0
    %3005 = vmatpush1.xpose.msra.mxu0 0.0
    %3006 = vmatprep.subr.mxu0 0.0
    %3007 = vmatpush1.xpose.msra.mxu0 0.0
    %3008 = vmatprep.subr.mxu0 0.0
    %3009 = vmatpush1.xpose.msra.mxu0 0.0
    %3010 = vmatprep.subr.mxu0 0.0
    %3011 = vmatpush1.xpose.msra.mxu0 0.0
    %3012 = vmatprep.subr.mxu0 0.0
    %3013 = vmatpush1.xpose.msra.mxu0 0.0
    %3014 = vmatprep.subr.mxu0 0.0
    %3015 = vmatpush1.xpose.msra.mxu0 0.0
    %3016 = vmatprep.subr.mxu0 0.0
    %3017 = vmatpush1.xpose.msra.mxu0 0.0
    %3018 = vmatprep.subr.mxu0 0.0
    %3019 = vmatpush1.xpose.msra.mxu0 0.0
    %3020 = vmatprep.subr.mxu0 0.0
    %3021 = vmatpush1.xpose.msra.mxu0 0.0
    %3022 = vmatprep.subr.mxu0 0.0
    %3023 = vmatpush1.xpose.msra.mxu0 0.0
    %3024 = vmatprep.subr.mxu0 0.0
    %3025 = vmatpush1.xpose.msra.mxu0 0.0
    %3026 = vmatprep.subr.mxu0 0.0
    %3027 = vmatpush1.xpose.msra.mxu0 0.0
    %3028 = vmatprep.subr.mxu0 0.0
    %3029 = vmatpush1.xpose.msra.mxu0 %v2037
    %3030 = vmatprep.subr.mxu0 0.0
    %3031 = vmatpush2.xpose.msra.mxu0 0.0
    %3032 = vmatprep.subr.mxu0 0.0
    %3033 = vmatpush2.xpose.msra.mxu0 0.0
    %3034 = vmatprep.subr.mxu0 0.0
    %3035 = vmatpush2.xpose.msra.mxu0 0.0
    %3036 = vmatprep.subr.mxu0 0.0
    %3037 = vmatpush2.xpose.msra.mxu0 0.0
    %3038 = vmatprep.subr.mxu0 0.0
    %3039 = vmatpush2.xpose.msra.mxu0 0.0
    %3040 = vmatprep.subr.mxu0 0.0
    %3041 = vmatpush2.xpose.msra.mxu0 0.0
    %3042 = vmatprep.subr.mxu0 0.0
    %3043 = vmatpush2.xpose.msra.mxu0 0.0
    %3044 = vmatprep.subr.mxu0 0.0
    %3045 = vmatpush2.xpose.msra.mxu0 0.0
    %3046 = vmatprep.subr.mxu0 0.0
    %3047 = vmatpush2.xpose.msra.mxu0 0.0
    %3048 = vmatprep.subr.mxu0 0.0
    %3049 = vmatpush2.xpose.msra.mxu0 0.0
    %3050 = vmatprep.subr.mxu0 0.0
    %3051 = vmatpush2.xpose.msra.mxu0 0.0
    %3052 = vmatprep.subr.mxu0 0.0
    %3053 = vmatpush2.xpose.msra.mxu0 0.0
    %3054 = vmatprep.subr.mxu0 0.0
    %3055 = vmatpush2.xpose.msra.mxu0 0.0
    %3056 = vmatprep.subr.mxu0 0.0
    %3057 = vmatpush2.xpose.msra.mxu0 0.0
    %3058 = vmatprep.subr.mxu0 0.0
    %3059 = vmatpush2.xpose.msra.mxu0 0.0
    %3060 = vmatprep.subr.mxu0 0.0
    %3061 = vmatpush2.xpose.msra.mxu0 0.0
    %3062 = vmatprep.mubr.f32.mxu0 0.0
    %3063 = vmatmul.mubr.f32.gmra.mxu0 %v2996
    %v3064 = vpop.f32.mrf.mxu0
    %v3065 = vadd.f32 %v47, %v3064
    %v3066 = vpop.f32.mrf.mxu0
    %3067 = vdwg.mxu0
    %v3069 = vsel %vm109, %v2994, 0
    %3071 = vmatprep.subr.mxu0 0.0
    %3072 = vmatpush1.xpose.msra.mxu0 0.0
    %3073 = vmatprep.subr.mxu0 0.0
    %3074 = vmatpush1.xpose.msra.mxu0 0.0
    %3075 = vmatprep.subr.mxu0 0.0
    %3076 = vmatpush1.xpose.msra.mxu0 0.0
    %3077 = vmatprep.subr.mxu0 0.0
    %3078 = vmatpush1.xpose.msra.mxu0 0.0
    %3079 = vmatprep.subr.mxu0 0.0
    %3080 = vmatpush1.xpose.msra.mxu0 0.0
    %3081 = vmatprep.subr.mxu0 0.0
    %3082 = vmatpush1.xpose.msra.mxu0 0.0
    %3083 = vmatprep.subr.mxu0 0.0
    %3084 = vmatpush1.xpose.msra.mxu0 0.0
    %3085 = vmatprep.subr.mxu0 0.0
    %3086 = vmatpush1.xpose.msra.mxu0 0.0
    %3087 = vmatprep.subr.mxu0 0.0
    %3088 = vmatpush1.xpose.msra.mxu0 0.0
    %3089 = vmatprep.subr.mxu0 0.0
    %3090 = vmatpush1.xpose.msra.mxu0 0.0
    %3091 = vmatprep.subr.mxu0 0.0
    %3092 = vmatpush1.xpose.msra.mxu0 0.0
    %3093 = vmatprep.subr.mxu0 0.0
    %3094 = vmatpush1.xpose.msra.mxu0 0.0
    %3095 = vmatprep.subr.mxu0 0.0
    %3096 = vmatpush1.xpose.msra.mxu0 0.0
    %3097 = vmatprep.subr.mxu0 0.0
    %3098 = vmatpush1.xpose.msra.mxu0 0.0
    %3099 = vmatprep.subr.mxu0 0.0
    %3100 = vmatpush1.xpose.msra.mxu0 0.0
    %3101 = vmatprep.subr.mxu0 0.0
    %3102 = vmatpush1.xpose.msra.mxu0 %v2113
    %3103 = vmatprep.subr.mxu0 0.0
    %3104 = vmatpush2.xpose.msra.mxu0 0.0
    %3105 = vmatprep.subr.mxu0 0.0
    %3106 = vmatpush2.xpose.msra.mxu0 0.0
    %3107 = vmatprep.subr.mxu0 0.0
    %3108 = vmatpush2.xpose.msra.mxu0 0.0
    %3109 = vmatprep.subr.mxu0 0.0
    %3110 = vmatpush2.xpose.msra.mxu0 0.0
    %3111 = vmatprep.subr.mxu0 0.0
    %3112 = vmatpush2.xpose.msra.mxu0 0.0
    %3113 = vmatprep.subr.mxu0 0.0
    %3114 = vmatpush2.xpose.msra.mxu0 0.0
    %3115 = vmatprep.subr.mxu0 0.0
    %3116 = vmatpush2.xpose.msra.mxu0 0.0
    %3117 = vmatprep.subr.mxu0 0.0
    %3118 = vmatpush2.xpose.msra.mxu0 0.0
    %3119 = vmatprep.subr.mxu0 0.0
    %3120 = vmatpush2.xpose.msra.mxu0 0.0
    %3121 = vmatprep.subr.mxu0 0.0
    %3122 = vmatpush2.xpose.msra.mxu0 0.0
    %3123 = vmatprep.subr.mxu0 0.0
    %3124 = vmatpush2.xpose.msra.mxu0 0.0
    %3125 = vmatprep.subr.mxu0 0.0
    %3126 = vmatpush2.xpose.msra.mxu0 0.0
    %3127 = vmatprep.subr.mxu0 0.0
    %3128 = vmatpush2.xpose.msra.mxu0 0.0
    %3129 = vmatprep.subr.mxu0 0.0
    %3130 = vmatpush2.xpose.msra.mxu0 0.0
    %3131 = vmatprep.subr.mxu0 0.0
    %3132 = vmatpush2.xpose.msra.mxu0 0.0
    %3133 = vmatprep.subr.mxu0 0.0
    %3134 = vmatpush2.xpose.msra.mxu0 0.0
    %3135 = vmatprep.mubr.f32.mxu0 0.0
    %3136 = vmatmul.mubr.f32.gmra.mxu0 %v3069
    %v3137 = vpop.f32.mrf.mxu0
    %v3138 = vadd.f32 %v48, %v3137
    %v3139 = vpop.f32.mrf.mxu0
    %3140 = vdwg.mxu0
    %v3141 = vsel %vm510, %v3065, -inf
    %3142 = vmax.xlane.f32.xlu0 %v3141
    %v3143 = vpop.xlane.xlu0 %3142
    %v3144 = vsel %vm510, %v3138, -inf
    %3145 = vmax.xlane.f32.xlu0 %v3144
    %v3146 = vpop.xlane.xlu0 %3145
    %v3147 = vsub.f32 %v3065, %v3143
    %v3148 = vsub.f32 %v3138, %v3146
    %v3149 = vmul.f32 %v3147, 1.442695
    %v3150 = vpow.pop %v3149
    %v3151 = vmul.f32 %v3148, 1.442695
    %v3152 = vpow.pop %v3151
    %v3153 = vsel %vm510, %v3150, 0.0
    %3154 = vadd.xlane.f32.xlu0 %v3153
    %v3155 = vpop.xlane.xlu0 %3154
    %v3156 = vsel %vm510, %v3152, 0.0
    %3157 = vadd.xlane.f32.xlu0 %v3156
    %v3158 = vpop.xlane.xlu0 %3157
    %v3159 = vrcp.pop %v3155
    %v3160 = vrcp.pop %v3158
    %v3161 = vmul.f32 %v3150, %v3159
    %v3162 = vmul.f32 %v3152, %v3160
    %v3163 = vmul.f32 %v2023, %v1333
    %v3164 = vmul.f32 %v2028, %v1333
    %v3166 = vsel %vm510, %v3161, 0
    %3168 = vmatprep.subr.mxu0 0.0
    %3169 = vmatpush1.msra.mxu0 0.0
    %3170 = vmatprep.subr.mxu0 0.0
    %3171 = vmatpush1.msra.mxu0 0.0
    %3172 = vmatprep.subr.mxu0 0.0
    %3173 = vmatpush1.msra.mxu0 0.0
    %3174 = vmatprep.subr.mxu0 0.0
    %3175 = vmatpush1.msra.mxu0 0.0
    %3176 = vmatprep.subr.mxu0 0.0
    %3177 = vmatpush1.msra.mxu0 0.0
    %3178 = vmatprep.subr.mxu0 0.0
    %3179 = vmatpush1.msra.mxu0 0.0
    %3180 = vmatprep.subr.mxu0 0.0
    %3181 = vmatpush1.msra.mxu0 0.0
    %3182 = vmatprep.subr.mxu0 0.0
    %3183 = vmatpush1.msra.mxu0 0.0
    %3184 = vmatprep.subr.mxu0 0.0
    %3185 = vmatpush1.msra.mxu0 0.0
    %3186 = vmatprep.subr.mxu0 0.0
    %3187 = vmatpush1.msra.mxu0 0.0
    %3188 = vmatprep.subr.mxu0 0.0
    %3189 = vmatpush1.msra.mxu0 0.0
    %3190 = vmatprep.subr.mxu0 0.0
    %3191 = vmatpush1.msra.mxu0 0.0
    %3192 = vmatprep.subr.mxu0 0.0
    %3193 = vmatpush1.msra.mxu0 0.0
    %3194 = vmatprep.subr.mxu0 0.0
    %3195 = vmatpush1.msra.mxu0 0.0
    %3196 = vmatprep.subr.mxu0 0.0
    %3197 = vmatpush1.msra.mxu0 0.0
    %3198 = vmatprep.subr.mxu0 0.0
    %3199 = vmatpush1.msra.mxu0 %v3163
    %3200 = vmatprep.subr.mxu0 0.0
    %3201 = vmatpush2.msra.mxu0 0.0
    %3202 = vmatprep.subr.mxu0 0.0
    %3203 = vmatpush2.msra.mxu0 0.0
    %3204 = vmatprep.subr.mxu0 0.0
    %3205 = vmatpush2.msra.mxu0 0.0
    %3206 = vmatprep.subr.mxu0 0.0
    %3207 = vmatpush2.msra.mxu0 0.0
    %3208 = vmatprep.subr.mxu0 0.0
    %3209 = vmatpush2.msra.mxu0 0.0
    %3210 = vmatprep.subr.mxu0 0.0
    %3211 = vmatpush2.msra.mxu0 0.0
    %3212 = vmatprep.subr.mxu0 0.0
    %3213 = vmatpush2.msra.mxu0 0.0
    %3214 = vmatprep.subr.mxu0 0.0
    %3215 = vmatpush2.msra.mxu0 0.0
    %3216 = vmatprep.subr.mxu0 0.0
    %3217 = vmatpush2.msra.mxu0 0.0
    %3218 = vmatprep.subr.mxu0 0.0
    %3219 = vmatpush2.msra.mxu0 0.0
    %3220 = vmatprep.subr.mxu0 0.0
    %3221 = vmatpush2.msra.mxu0 0.0
    %3222 = vmatprep.subr.mxu0 0.0
    %3223 = vmatpush2.msra.mxu0 0.0
    %3224 = vmatprep.subr.mxu0 0.0
    %3225 = vmatpush2.msra.mxu0 0.0
    %3226 = vmatprep.subr.mxu0 0.0
    %3227 = vmatpush2.msra.mxu0 0.0
    %3228 = vmatprep.subr.mxu0 0.0
    %3229 = vmatpush2.msra.mxu0 0.0
    %3230 = vmatprep.subr.mxu0 0.0
    %3231 = vmatpush2.msra.mxu0 0.0
    %3232 = vmatprep.mubr.f32.mxu0 0.0
    %3233 = vmatmul.mubr.f32.gmra.mxu0 %v3166
    %v3234 = vpop.f32.mrf.mxu0
    %v3235 = vadd.f32 0.0, %v3234
    %v3236 = vpop.f32.mrf.mxu0
    %3237 = vdwg.mxu0
    %v3239 = vsel %vm510, %v3162, 0
    %3241 = vmatprep.subr.mxu0 0.0
    %3242 = vmatpush1.msra.mxu0 0.0
    %3243 = vmatprep.subr.mxu0 0.0
    %3244 = vmatpush1.msra.mxu0 0.0
    %3245 = vmatprep.subr.mxu0 0.0
    %3246 = vmatpush1.msra.mxu0 0.0
    %3247 = vmatprep.subr.mxu0 0.0
    %3248 = vmatpush1.msra.mxu0 0.0
    %3249 = vmatprep.subr.mxu0 0.0
    %3250 = vmatpush1.msra.mxu0 0.0
    %3251 = vmatprep.subr.mxu0 0.0
    %3252 = vmatpush1.msra.mxu0 0.0
    %3253 = vmatprep.subr.mxu0 0.0
    %3254 = vmatpush1.msra.mxu0 0.0
    %3255 = vmatprep.subr.mxu0 0.0
    %3256 = vmatpush1.msra.mxu0 0.0
    %3257 = vmatprep.subr.mxu0 0.0
    %3258 = vmatpush1.msra.mxu0 0.0
    %3259 = vmatprep.subr.mxu0 0.0
    %3260 = vmatpush1.msra.mxu0 0.0
    %3261 = vmatprep.subr.mxu0 0.0
    %3262 = vmatpush1.msra.mxu0 0.0
    %3263 = vmatprep.subr.mxu0 0.0
    %3264 = vmatpush1.msra.mxu0 0.0
    %3265 = vmatprep.subr.mxu0 0.0
    %3266 = vmatpush1.msra.mxu0 0.0
    %3267 = vmatprep.subr.mxu0 0.0
    %3268 = vmatpush1.msra.mxu0 0.0
    %3269 = vmatprep.subr.mxu0 0.0
    %3270 = vmatpush1.msra.mxu0 0.0
    %3271 = vmatprep.subr.mxu0 0.0
    %3272 = vmatpush1.msra.mxu0 %v3164
    %3273 = vmatprep.subr.mxu0 0.0
    %3274 = vmatpush2.msra.mxu0 0.0
    %3275 = vmatprep.subr.mxu0 0.0
    %3276 = vmatpush2.msra.mxu0 0.0
    %3277 = vmatprep.subr.mxu0 0.0
    %3278 = vmatpush2.msra.mxu0 0.0
    %3279 = vmatprep.subr.mxu0 0.0
    %3280 = vmatpush2.msra.mxu0 0.0
    %3281 = vmatprep.subr.mxu0 0.0
    %3282 = vmatpush2.msra.mxu0 0.0
    %3283 = vmatprep.subr.mxu0 0.0
    %3284 = vmatpush2.msra.mxu0 0.0
    %3285 = vmatprep.subr.mxu0 0.0
    %3286 = vmatpush2.msra.mxu0 0.0
    %3287 = vmatprep.subr.mxu0 0.0
    %3288 = vmatpush2.msra.mxu0 0.0
    %3289 = vmatprep.subr.mxu0 0.0
    %3290 = vmatpush2.msra.mxu0 0.0
    %3291 = vmatprep.subr.mxu0 0.0
    %3292 = vmatpush2.msra.mxu0 0.0
    %3293 = vmatprep.subr.mxu0 0.0
    %3294 = vmatpush2.msra.mxu0 0.0
    %3295 = vmatprep.subr.mxu0 0.0
    %3296 = vmatpush2.msra.mxu0 0.0
    %3297 = vmatprep.subr.mxu0 0.0
    %3298 = vmatpush2.msra.mxu0 0.0
    %3299 = vmatprep.subr.mxu0 0.0
    %3300 = vmatpush2.msra.mxu0 0.0
    %3301 = vmatprep.subr.mxu0 0.0
    %3302 = vmatpush2.msra.mxu0 0.0
    %3303 = vmatprep.subr.mxu0 0.0
    %3304 = vmatpush2.msra.mxu0 0.0
    %3305 = vmatprep.mubr.f32.mxu0 0.0
    %3306 = vmatmul.mubr.f32.gmra.mxu0 %v3239
    %v3307 = vpop.f32.mrf.mxu0
    %v3308 = vadd.f32 0.0, %v3307
    %v3309 = vpop.f32.mrf.mxu0
    %3310 = vdwg.mxu0
    %v3311 = vadd.f32 %v2991, %v3235
    %v3312 = vadd.f32 %v2992, %v3308
    %v3313 = vlaneseq
    %v3314 = vshrl.u32 %v3313, 7
    %v3315 = vsub.s32 1, %v3314
    %v3316 = vrot.slane %v102, %v3315
    %v3318 = vsel %vm109, %v3311, 0
    %v3321 = vsel %vm109, %v3312, 0
    %3323 = vmatprep.subr.mxu0 0.0
    %3324 = vmatpush1.msra.mxu0 0.0
    %3325 = vmatprep.subr.mxu0 0.0
    %3326 = vmatpush1.msra.mxu0 0.0
    %3327 = vmatprep.subr.mxu0 0.0
    %3328 = vmatpush1.msra.mxu0 0.0
    %3329 = vmatprep.subr.mxu0 0.0
    %3330 = vmatpush1.msra.mxu0 0.0
    %3331 = vmatprep.subr.mxu0 0.0
    %3332 = vmatpush1.msra.mxu0 0.0
    %3333 = vmatprep.subr.mxu0 0.0
    %3334 = vmatpush1.msra.mxu0 0.0
    %3335 = vmatprep.subr.mxu0 0.0
    %3336 = vmatpush1.msra.mxu0 0.0
    %3337 = vmatprep.subr.mxu0 0.0
    %3338 = vmatpush1.msra.mxu0 0.0
    %3339 = vmatprep.subr.mxu0 0.0
    %3340 = vmatpush1.msra.mxu0 0.0
    %3341 = vmatprep.subr.mxu0 0.0
    %3342 = vmatpush1.msra.mxu0 0.0
    %3343 = vmatprep.subr.mxu0 0.0
    %3344 = vmatpush1.msra.mxu0 0.0
    %3345 = vmatprep.subr.mxu0 0.0
    %3346 = vmatpush1.msra.mxu0 0.0
    %3347 = vmatprep.subr.mxu0 0.0
    %3348 = vmatpush1.msra.mxu0 %v83
    %3349 = vmatprep.subr.mxu0 0.0
    %3350 = vmatpush1.msra.mxu0 %v74
    %3351 = vmatprep.subr.mxu0 0.0
    %3352 = vmatpush1.msra.mxu0 %v65
    %3353 = vmatprep.subr.mxu0 0.0
    %3354 = vmatpush1.msra.mxu0 %v56
    %3355 = vmatprep.subr.mxu0 0.0
    %3356 = vmatpush2.msra.mxu0 0.0
    %3357 = vmatprep.subr.mxu0 0.0
    %3358 = vmatpush2.msra.mxu0 0.0
    %3359 = vmatprep.subr.mxu0 0.0
    %3360 = vmatpush2.msra.mxu0 0.0
    %3361 = vmatprep.subr.mxu0 0.0
    %3362 = vmatpush2.msra.mxu0 0.0
    %3363 = vmatprep.subr.mxu0 0.0
    %3364 = vmatpush2.msra.mxu0 0.0
    %3365 = vmatprep.subr.mxu0 0.0
    %3366 = vmatpush2.msra.mxu0 0.0
    %3367 = vmatprep.subr.mxu0 0.0
    %3368 = vmatpush2.msra.mxu0 0.0
    %3369 = vmatprep.subr.mxu0 0.0
    %3370 = vmatpush2.msra.mxu0 0.0
    %3371 = vmatprep.subr.mxu0 0.0
    %3372 = vmatpush2.msra.mxu0 0.0
    %3373 = vmatprep.subr.mxu0 0.0
    %3374 = vmatpush2.msra.mxu0 0.0
    %3375 = vmatprep.subr.mxu0 0.0
    %3376 = vmatpush2.msra.mxu0 0.0
    %3377 = vmatprep.subr.mxu0 0.0
    %3378 = vmatpush2.msra.mxu0 0.0
    %3379 = vmatprep.subr.mxu0 0.0
    %3380 = vmatpush2.msra.mxu0 0.0
    %3381 = vmatprep.subr.mxu0 0.0
    %3382 = vmatpush2.msra.mxu0 0.0
    %3383 = vmatprep.subr.mxu0 0.0
    %3384 = vmatpush2.msra.mxu0 0.0
    %3385 = vmatprep.subr.mxu0 0.0
    %3386 = vmatpush2.msra.mxu0 0.0
    %3387 = vmatprep.mubr.f32.mxu0 0.0
    %3388 = vmatmul.mubr.f32.gmra.mxu0 %v3318
    %v3389 = vpop.f32.mrf.mxu0
    %v3390 = vadd.f32 %v3316, %v3389
    %v3391 = vpop.f32.mrf.mxu0
    %3392 = vmatprep.mubr.f32.mxu0 0.0
    %3393 = vmatmul.mubr.f32.gmra.mxu0 %v3321
    %v3394 = vpop.f32.mrf.mxu0
    %v3395 = vadd.f32 %v3316, %v3394
    %v3396 = vpop.f32.mrf.mxu0
    %3397 = vdwg.mxu0
    %v3398 = vadd.f32 %v1778, %v3390
    %v3399 = vadd.f32 %v1779, %v3395
    %v3400 = vsel %vm109, %v3398, 0.0
    %3401 = vadd.xlane.f32.xlu0 %v3400
    %v3402 = vpop.xlane.xlu0 %3401
    %v3403 = vsel %vm109, %v3399, 0.0
    %3404 = vadd.xlane.f32.xlu0 %v3403
    %v3405 = vpop.xlane.xlu0 %3404
    %v3406 = vmul.f32 %v3402, %v1747
    %v3407 = vmul.f32 %v3405, %v1747
    %v3408 = vsub.f32 %v3398, %v3406
    %v3409 = vsub.f32 %v3399, %v3407
    %v3410 = vmul.f32 %v3408, %v3408
    %v3411 = vmul.f32 %v3409, %v3409
    %v3412 = vsel %vm109, %v3410, 0.0
    %3413 = vadd.xlane.f32.xlu0 %v3412
    %v3414 = vpop.xlane.xlu0 %3413
    %v3415 = vsel %vm109, %v3411, 0.0
    %3416 = vadd.xlane.f32.xlu0 %v3415
    %v3417 = vpop.xlane.xlu0 %3416
    %v3418 = vmul.f32 %v3414, %v1747
    %v3419 = vmul.f32 %v3417, %v1747
    %v3420 = vadd.f32 %v3418, 1e-05
    %v3421 = vadd.f32 %v3419, 1e-05
    %v3422 = vrsqrt.pop %v3420
    %v3423 = vrsqrt.pop %v3421
    %v3424 = vmul.f32 %v3408, %v3422
    %v3425 = vmul.f32 %v3409, %v3423
    %v3426 = vlaneseq
    %v3427 = vshrl.u32 %v3426, 7
    %v3428 = vsub.s32 2, %v3427
    %v3429 = vrot.slane %v102, %v3428
    %v3430 = vmul.f32 %v3424, %v3429
    %v3431 = vmul.f32 %v3425, %v3429
    %v3432 = vlaneseq
    %v3433 = vshrl.u32 %v3432, 7
    %v3434 = vsub.s32 3, %v3433
    %v3435 = vrot.slane %v102, %v3434
    %v3436 = vadd.f32 %v3430, %v3435
    %v3437 = vadd.f32 %v3431, %v3435
    %v3438 = vlaneseq
    %v3439 = vshrl.u32 %v3438, 7
    %v3440 = vsub.s32 4, %v3439
    %v3441 = vrot.slane %v102, %v3440
    %v3443 = vsel %vm109, %v3436, 0
    %v3446 = vsel %vm109, %v3437, 0
    %3448 = vmatprep.subr.mxu0 0.0
    %3449 = vmatpush1.msra.mxu0 0.0
    %3450 = vmatprep.subr.mxu0 0.0
    %3451 = vmatpush1.msra.mxu0 0.0
    %3452 = vmatprep.subr.mxu0 0.0
    %3453 = vmatpush1.msra.mxu0 0.0
    %3454 = vmatprep.subr.mxu0 0.0
    %3455 = vmatpush1.msra.mxu0 0.0
    %3456 = vmatprep.subr.mxu0 0.0
    %3457 = vmatpush1.msra.mxu0 0.0
    %3458 = vmatprep.subr.mxu0 0.0
    %3459 = vmatpush1.msra.mxu0 0.0
    %3460 = vmatprep.subr.mxu0 0.0
    %3461 = vmatpush1.msra.mxu0 0.0
    %3462 = vmatprep.subr.mxu0 0.0
    %3463 = vmatpush1.msra.mxu0 0.0
    %3464 = vmatprep.subr.mxu0 0.0
    %3465 = vmatpush1.msra.mxu0 0.0
    %3466 = vmatprep.subr.mxu0 0.0
    %3467 = vmatpush1.msra.mxu0 0.0
    %3468 = vmatprep.subr.mxu0 0.0
    %3469 = vmatpush1.msra.mxu0 0.0
    %3470 = vmatprep.subr.mxu0 0.0
    %3471 = vmatpush1.msra.mxu0 0.0
    %3472 = vmatprep.subr.mxu0 0.0
    %3473 = vmatpush1.msra.mxu0 %v84
    %3474 = vmatprep.subr.mxu0 0.0
    %3475 = vmatpush1.msra.mxu0 %v75
    %3476 = vmatprep.subr.mxu0 0.0
    %3477 = vmatpush1.msra.mxu0 %v66
    %3478 = vmatprep.subr.mxu0 0.0
    %3479 = vmatpush1.msra.mxu0 %v57
    %3480 = vmatprep.subr.mxu0 0.0
    %3481 = vmatpush2.msra.mxu0 0.0
    %3482 = vmatprep.subr.mxu0 0.0
    %3483 = vmatpush2.msra.mxu0 0.0
    %3484 = vmatprep.subr.mxu0 0.0
    %3485 = vmatpush2.msra.mxu0 0.0
    %3486 = vmatprep.subr.mxu0 0.0
    %3487 = vmatpush2.msra.mxu0 0.0
    %3488 = vmatprep.subr.mxu0 0.0
    %3489 = vmatpush2.msra.mxu0 0.0
    %3490 = vmatprep.subr.mxu0 0.0
    %3491 = vmatpush2.msra.mxu0 0.0
    %3492 = vmatprep.subr.mxu0 0.0
    %3493 = vmatpush2.msra.mxu0 0.0
    %3494 = vmatprep.subr.mxu0 0.0
    %3495 = vmatpush2.msra.mxu0 0.0
    %3496 = vmatprep.subr.mxu0 0.0
    %3497 = vmatpush2.msra.mxu0 0.0
    %3498 = vmatprep.subr.mxu0 0.0
    %3499 = vmatpush2.msra.mxu0 0.0
    %3500 = vmatprep.subr.mxu0 0.0
    %3501 = vmatpush2.msra.mxu0 0.0
    %3502 = vmatprep.subr.mxu0 0.0
    %3503 = vmatpush2.msra.mxu0 0.0
    %3504 = vmatprep.subr.mxu0 0.0
    %3505 = vmatpush2.msra.mxu0 0.0
    %3506 = vmatprep.subr.mxu0 0.0
    %3507 = vmatpush2.msra.mxu0 0.0
    %3508 = vmatprep.subr.mxu0 0.0
    %3509 = vmatpush2.msra.mxu0 0.0
    %3510 = vmatprep.subr.mxu0 0.0
    %3511 = vmatpush2.msra.mxu0 0.0
    %3512 = vmatprep.mubr.f32.mxu0 0.0
    %3513 = vmatmul.mubr.f32.gmra.mxu0 %v3443
    %v3514 = vpop.f32.mrf.mxu0
    %v3515 = vadd.f32 %v3441, %v3514
    %v3516 = vpop.f32.mrf.mxu0
    %3517 = vmatprep.mubr.f32.mxu0 0.0
    %3518 = vmatmul.mubr.f32.gmra.mxu0 %v3446
    %v3519 = vpop.f32.mrf.mxu0
    %v3520 = vadd.f32 %v3441, %v3519
    %v3521 = vpop.f32.mrf.mxu0
    %3522 = vdwg.mxu0
    %v3523 = vmax.f32 %v3515, 0.0
    %v3524 = vmax.f32 %v3520, 0.0
    %v3525 = vlaneseq
    %v3526 = vshrl.u32 %v3525, 7
    %v3527 = vsub.s32 5, %v3526
    %v3528 = vrot.slane %v102, %v3527
    %3529 = vmatprep.subr.mxu0 0.0
    %3530 = vmatpush1.msra.mxu0 %v100
    %3531 = vmatprep.subr.mxu0 0.0
    %3532 = vmatpush1.msra.mxu0 %v99
    %3533 = vmatprep.subr.mxu0 0.0
    %3534 = vmatpush1.msra.mxu0 %v98
    %3535 = vmatprep.subr.mxu0 0.0
    %3536 = vmatpush1.msra.mxu0 %v97
    %3537 = vmatprep.subr.mxu0 0.0
    %3538 = vmatpush1.msra.mxu0 %v96
    %3539 = vmatprep.subr.mxu0 0.0
    %3540 = vmatpush1.msra.mxu0 %v95
    %3541 = vmatprep.subr.mxu0 0.0
    %3542 = vmatpush1.msra.mxu0 %v94
    %3543 = vmatprep.subr.mxu0 0.0
    %3544 = vmatpush1.msra.mxu0 %v93
    %3545 = vmatprep.subr.mxu0 0.0
    %3546 = vmatpush1.msra.mxu0 %v92
    %3547 = vmatprep.subr.mxu0 0.0
    %3548 = vmatpush1.msra.mxu0 %v91
    %3549 = vmatprep.subr.mxu0 0.0
    %3550 = vmatpush1.msra.mxu0 %v90
    %3551 = vmatprep.subr.mxu0 0.0
    %3552 = vmatpush1.msra.mxu0 %v89
    %3553 = vmatprep.subr.mxu0 0.0
    %3554 = vmatpush1.msra.mxu0 %v88
    %3555 = vmatprep.subr.mxu0 0.0
    %3556 = vmatpush1.msra.mxu0 %v87
    %3557 = vmatprep.subr.mxu0 0.0
    %3558 = vmatpush1.msra.mxu0 %v86
    %3559 = vmatprep.subr.mxu0 0.0
    %3560 = vmatpush1.msra.mxu0 %v85
    %3561 = vmatprep.subr.mxu0 0.0
    %3562 = vmatpush2.msra.mxu0 0.0
    %3563 = vmatprep.subr.mxu0 0.0
    %3564 = vmatpush2.msra.mxu0 0.0
    %3565 = vmatprep.subr.mxu0 0.0
    %3566 = vmatpush2.msra.mxu0 0.0
    %3567 = vmatprep.subr.mxu0 0.0
    %3568 = vmatpush2.msra.mxu0 0.0
    %3569 = vmatprep.subr.mxu0 0.0
    %3570 = vmatpush2.msra.mxu0 0.0
    %3571 = vmatprep.subr.mxu0 0.0
    %3572 = vmatpush2.msra.mxu0 0.0
    %3573 = vmatprep.subr.mxu0 0.0
    %3574 = vmatpush2.msra.mxu0 0.0
    %3575 = vmatprep.subr.mxu0 0.0
    %3576 = vmatpush2.msra.mxu0 0.0
    %3577 = vmatprep.subr.mxu0 0.0
    %3578 = vmatpush2.msra.mxu0 0.0
    %3579 = vmatprep.subr.mxu0 0.0
    %3580 = vmatpush2.msra.mxu0 0.0
    %3581 = vmatprep.subr.mxu0 0.0
    %3582 = vmatpush2.msra.mxu0 0.0
    %3583 = vmatprep.subr.mxu0 0.0
    %3584 = vmatpush2.msra.mxu0 0.0
    %3585 = vmatprep.subr.mxu0 0.0
    %3586 = vmatpush2.msra.mxu0 0.0
    %3587 = vmatprep.subr.mxu0 0.0
    %3588 = vmatpush2.msra.mxu0 0.0
    %3589 = vmatprep.subr.mxu0 0.0
    %3590 = vmatpush2.msra.mxu0 0.0
    %3591 = vmatprep.subr.mxu0 0.0
    %3592 = vmatpush2.msra.mxu0 0.0
    %3593 = vmatprep.mubr.f32.mxu0 0.0
    %3594 = vmatmul.mubr.f32.gmra.mxu0 %v3523
    %v3595 = vpop.f32.mrf.mxu0
    %v3596 = vadd.f32 %v3528, %v3595
    %v3597 = vpop.f32.mrf.mxu0
    %3598 = vmatprep.mubr.f32.mxu0 0.0
    %3599 = vmatmul.mubr.f32.gmra.mxu0 %v3524
    %v3600 = vpop.f32.mrf.mxu0
    %v3601 = vadd.f32 %v3528, %v3600
    %v3602 = vpop.f32.mrf.mxu0
    %3603 = vdwg.mxu0
    %v3604 = vadd.f32 %v3436, %v3596
    %v3605 = vadd.f32 %v3437, %v3601
    %v3606 = vsel %vm109, %v3604, 0.0
    %3607 = vadd.xlane.f32.xlu0 %v3606
    %v3608 = vpop.xlane.xlu0 %3607
    %v3609 = vsel %vm109, %v3605, 0.0
    %3610 = vadd.xlane.f32.xlu0 %v3609
    %v3611 = vpop.xlane.xlu0 %3610
    %v3612 = vmul.f32 %v3608, %v1747
    %v3613 = vmul.f32 %v3611, %v1747
    %v3614 = vsub.f32 %v3604, %v3612
    %v3615 = vsub.f32 %v3605, %v3613
    %v3616 = vmul.f32 %v3614, %v3614
    %v3617 = vmul.f32 %v3615, %v3615
    %v3618 = vsel %vm109, %v3616, 0.0
    %3619 = vadd.xlane.f32.xlu0 %v3618
    %v3620 = vpop.xlane.xlu0 %3619
    %v3621 = vsel %vm109, %v3617, 0.0
    %3622 = vadd.xlane.f32.xlu0 %v3621
    %v3623 = vpop.xlane.xlu0 %3622
    %v3624 = vmul.f32 %v3620, %v1747
    %v3625 = vmul.f32 %v3623, %v1747
    %v3626 = vadd.f32 %v3624, 1e-05
    %v3627 = vadd.f32 %v3625, 1e-05
    %v3628 = vrsqrt.pop %v3626
    %v3629 = vrsqrt.pop %v3627
    %v3630 = vmul.f32 %v3614, %v3628
    %v3631 = vmul.f32 %v3615, %v3629
    %v3632 = vlaneseq
    %v3633 = vshrl.u32 %v3632, 7
    %v3634 = vsub.s32 6, %v3633
    %v3635 = vrot.slane %v102, %v3634
    %v3636 = vmul.f32 %v3630, %v3635
    %v3637 = vmul.f32 %v3631, %v3635
    %v3638 = vlaneseq
    %v3639 = vshrl.u32 %v3638, 7
    %v3640 = vsub.s32 7, %v3639
    %v3641 = vrot.slane %v102, %v3640
    %v3642 = vadd.f32 %v3636, %v3641
    %v3643 = vadd.f32 %v3637, %v3641
    %3644 = vst.msk [vmem:[#allocation5] sm:$0xff] %vm109, %v3642
    %3645 = vst.msk [vmem:[#allocation5 + $0x8] sm:$0xff] %vm109, %v3643
    // Predicated region
    $region34: #{tpu_custom_call.1} parent=1 // pred_check
      _
    $region35: #{tpu_custom_call.1} parent=1 // pred_check_branch
      %3647 = sbr.rel (0) target = $region37
    $region36: #{tpu_custom_call.1} parent=1 // pred_region
      %s3649 = ssub.s32 256, 256
      %3650 = vsyncadd [#allocation4], %s3649
      %s3651 = sshll.u32 [#allocation5], 4
      %s3652 = int_to_ptr.vmem [resolvable:$true] %s3651
      %3657 = dma.vmem_to_hbm [thread:$0]  %s3652, 256, %s7, [#allocation4], 128, 128, 8
    $region37: #{tpu_custom_call.1} parent=1 // pred_fallthru
      _
    // Predicated region
    $region38: #{tpu_custom_call.1} parent=1 // pred_check
      _
    $region39: #{tpu_custom_call.1} parent=1 // pred_check_branch
      %3659 = sbr.rel (0) target = $region41
    $region40: #{tpu_custom_call.1} parent=1 // pred_region
      %3660 = dma.done [#allocation4], 256
    $region41: #{tpu_custom_call.1} parent=1 // pred_fallthru
      _
    %3661 = vsyncpa [#allocation3], 1
    %3662 = vsyncpa [#allocation4], 1

</llo_original>
